<compile_context>
chip_gen: v7x
topology: tpu7x:2x2x1
jax: 0.10.0
libtpu: 0.0.40
codegen_flags: <defaults>
</compile_context>

<pallas_src>
import functools

import numpy as np
import jax
import jax.numpy as jnp
from jax import lax
from jax.experimental import pallas as pl
from jax.experimental.pallas import tpu as pltpu

B_EPS = 0.001
M_SCALE = 2.0
SIGMOID_SHIFT = float(np.log((1.0 - B_EPS) / (M_SCALE - 1.0)))
LEAKY_SLOPE = 0.01  # PyTorch nn.LeakyReLU default


def _leaky(x):
    return jnp.maximum(x, LEAKY_SLOPE * x)


def _safescale(scale):
    # SigmoidShiftScaler: sigmoid(scale + shift) * (m - b) + b
    # (exp(-x) may hit +inf for very negative scale; result saturates to b,
    #  log(b) stays finite, no NaNs are produced.)
    return (M_SCALE - B_EPS) / (1.0 + jnp.exp(-(scale + SIGMOID_SHIFT))) + B_EPS


def _round_up(x, m):
    return ((x + m - 1) // m) * m


# ------------------------------ fused kernel ------------------------------

def _fused_flow_kernel(z_ref, masks_ref, w1_ref, b1_ref, w2_ref, b2_ref,
                       w3_ref, b3_ref, out_ref, ld_ref, x_ext, y_ext,
                       *, H, W, C1, ext):
    """One batch element per grid step.

    z_ref    : (1, C, HW)        input slab, channel-major, lane dim = H*W
    masks_ref: (9, HW)           per-tap validity masks (1.0 / 0.0)
    w1_ref   : (9, Hdp, C1p)     conv1 taps (tap-major, zero padded)
    b1_ref   : (Hdp, 1)
    w2_ref   : (Hdp, Hdp)        conv2 (1x1)
    b2_ref   : (Hdp, 1)
    w3_ref   : (9, C2p, Hdp)     conv3 taps, output rows permuted [shift|scale]
    b3_ref   : (C2p, 1)
    out_ref  : (1, C, HW)        full output slab (z1 copy + coupled z2')
    ld_ref   : (1, 1, 128)       per-image logdet broadcast over lanes
    x_ext    : VMEM (C1p, HW+2*ext) flat halo scratch for z1
    y_ext    : VMEM (Hdp, HW+2*ext) flat halo scratch for the hidden activ.
    """
    HW = H * W
    Hdp = w2_ref.shape[0]
    C2p = w3_ref.shape[1]

    # Zero the halo scratches every step: margins must be 0 because tap
    # contributions are masked multiplicatively, and scratch is per-core
    # (megacore "parallel" sharding), so do it unconditionally.
    x_ext[...] = jnp.zeros(x_ext.shape, x_ext.dtype)
    y_ext[...] = jnp.zeros(y_ext.shape, y_ext.dtype)

    z1 = z_ref[0, :C1, :].astype(jnp.float32)            # (C1, HW)
    z2 = z_ref[0, C1:2 * C1, :].astype(jnp.float32)      # (C1, HW)

    # place z1 into the interior of the flat (lane-)padded scratch
    x_ext[:C1, ext:ext + HW] = z1

    # ---- conv1 3x3 SAME: 9 accumulating MXU dots over shifted slices ----
    acc = jnp.zeros((Hdp, HW), jnp.float32)
    for t in range(9):
        oy, ox = t // 3 - 1, t % 3 - 1
        off = ext + oy * W + ox                           # static lane offset
        xt = x_ext[:, off:off + HW] * masks_ref[t:t + 1, :]
        acc = acc + jnp.dot(w1_ref[t], xt,
                            preferred_element_type=jnp.float32)
    y = _leaky(acc + b1_ref[...])

    # ---- conv2 1x1 ----
    y = _leaky(jnp.dot(w2_ref[...], y, preferred_element_type=jnp.float32)
               + b2_ref[...])

    # ---- conv3 3x3 SAME, fused with the affine coupling ----
    y_ext[:, ext:ext + HW] = y
    h = jnp.zeros((C2p, HW), jnp.float32)
    for t in range(9):
        oy, ox = t // 3 - 1, t % 3 - 1
        off = ext + oy * W + ox
        contrib = jnp.dot(w3_ref[t], y_ext[:, off:off + HW],
                          preferred_element_type=jnp.float32)
        h = h + contrib * masks_ref[t:t + 1, :]
    h = h + b3_ref[...]

    shift = h[:C1, :]
    scale = h[C1:2 * C1, :]

    safescale = _safescale(scale)
    z2n = (z2 + shift) * safescale

    # write the full output slab: z1 copy + coupled z2' (no host-side concat)
    out_ref[0, :C1, :] = z1.astype(out_ref.dtype)
    out_ref[0, C1:2 * C1, :] = z2n.astype(out_ref.dtype)

    # per-image logdet: one cross-lane/sublane reduce, broadcast over lanes
    total = jnp.sum(jnp.log(safescale))
    ld_ref[...] = jnp.zeros(ld_ref.shape, jnp.float32) + total


# --------------------------- AffineFlowStep forward ---------------------------

def affine_flow_step(z, params):
    """z: (B, C, H, W) -> (z_out (B, C, H, W), logdet (B,))."""
    w1, b1 = params["w1"], params["b1"]
    w2, b2 = params["w2"], params["b2"]
    w3, b3 = params["w3"], params["b3"]

    Bsz, C, H, W = z.shape
    C1 = C // 2
    Hd = w1.shape[0]
    HW = H * W
    f32 = jnp.float32

    # sublane-aligned padded sizes (zero padding keeps semantics exact)
    Hdp = max(8, _round_up(Hd, 8))
    C1p = max(8, _round_up(C1, 8))
    C2p = max(8, _round_up(2 * C1, 8))
    EXT = max(128, _round_up(W + 1, 128))   # halo margin, lane-aligned store

    # ---- fold torch (O, I, kh, kw) conv weights into tap-major matrices ----
    w1k = jnp.transpose(w1.astype(f32), (2, 3, 0, 1)).reshape(9, Hd, C1)
    w1k = jnp.pad(w1k, ((0, 0), (0, Hdp - Hd), (0, C1p - C1)))
    b1k = jnp.pad(b1.astype(f32).reshape(Hd, 1), ((0, Hdp - Hd), (0, 0)))

    w2k = jnp.pad(w2[:, :, 0, 0].astype(f32),
                  ((0, Hdp - Hd), (0, Hdp - Hd)))
    b2k = jnp.pad(b2.astype(f32).reshape(Hd, 1), ((0, Hdp - Hd), (0, 0)))

    # permute conv3 output channels so rows are [shift (0::2) | scale (1::2)]
    perm = np.concatenate([np.arange(0, 2 * C1, 2), np.arange(1, 2 * C1, 2)])
    w3k = jnp.transpose(w3.astype(f32), (2, 3, 0, 1)).reshape(9, 2 * C1, Hd)
    w3k = w3k[:, perm, :]
    w3k = jnp.pad(w3k, ((0, 0), (0, C2p - 2 * C1), (0, Hdp - Hd)))
    b3k = jnp.pad(b3.astype(f32)[perm].reshape(2 * C1, 1),
                  ((0, C2p - 2 * C1), (0, 0)))

    # per-tap validity masks (host-side constants): 1.0 where the shifted
    # source pixel stays inside the HxW image
    r_idx, c_idx = np.divmod(np.arange(HW), W)
    masks_np = np.zeros((9, HW), np.float32)
    for t in range(9):
        oy, ox = t // 3 - 1, t % 3 - 1
        ok = ((r_idx + oy >= 0) & (r_idx + oy < H) &
              (c_idx + ox >= 0) & (c_idx + ox < W))
        masks_np[t] = ok.astype(np.float32)
    masks = jnp.asarray(masks_np)

    zf = z.reshape(Bsz, C, HW)   # channel-major, lane dim = H*W (lane-dense)

    kernel = functools.partial(_fused_flow_kernel, H=H, W=W, C1=C1, ext=EXT)

    # ---- explicit VMEM budget (generous, shape-derived) ----
    ext_w = HW + 2 * EXT
    est_elems = (
        2 * 2 * C * HW                       # z in + z_out blocks, x2 buffers
        + 2 * 9 * HW                         # masks
        + 2 * (9 * Hdp * C1p + Hdp * Hdp + 9 * C2p * Hdp + 2 * Hdp + C2p)
        + (C1p + Hdp) * ext_w                # halo scratches
        + 8 * Hdp * HW                       # live f32 intermediates
        + 2 * 128)                           # logdet blocks
    est_bytes = 4 * est_elems
    try:
        phys = int(pltpu.get_tpu_info().vmem_capacity_bytes)
    except Exception:  # pragma: no cover - conservative fallback
        phys = 64 << 20
    vmem_limit = int(min(int(0.9 * phys), max(32 << 20, 2 * est_bytes)))

    out, ld = pl.pallas_call(
        kernel,
        out_shape=(jax.ShapeDtypeStruct((Bsz, C, HW), z.dtype),
                   jax.ShapeDtypeStruct((Bsz, 1, 128), jnp.float32)),
        grid_spec=pltpu.PrefetchScalarGridSpec(
            num_scalar_prefetch=0,
            grid=(Bsz,),
            in_specs=[
                pl.BlockSpec((1, C, HW), lambda b: (b, 0, 0)),
                pl.BlockSpec((9, HW), lambda b: (0, 0)),
                pl.BlockSpec((9, Hdp, C1p), lambda b: (0, 0, 0)),
                pl.BlockSpec((Hdp, 1), lambda b: (0, 0)),
                pl.BlockSpec((Hdp, Hdp), lambda b: (0, 0)),
                pl.BlockSpec((Hdp, 1), lambda b: (0, 0)),
                pl.BlockSpec((9, C2p, Hdp), lambda b: (0, 0, 0)),
                pl.BlockSpec((C2p, 1), lambda b: (0, 0)),
            ],
            out_specs=(
                pl.BlockSpec((1, C, HW), lambda b: (b, 0, 0)),
                pl.BlockSpec((1, 1, 128), lambda b: (b, 0, 0)),
            ),
            scratch_shapes=[
                pltpu.VMEM((C1p, ext_w), jnp.float32),
                pltpu.VMEM((Hdp, ext_w), jnp.float32),
            ],
        ),
        compiler_params=pltpu.CompilerParams(
            dimension_semantics=("parallel",),
            vmem_limit_bytes=vmem_limit),
    )(zf, masks, w1k, b1k, w2k, b2k, w3k, b3k)

    z_out = out.reshape(Bsz, C, H, W)
    logdet = ld[:, 0, 0]
    return z_out, logdet


# ------------------------------- reference -------------------------------

def _reference(z, params):
    w1, b1 = params["w1"], params["b1"]
    w2, b2 = params["w2"], params["b2"]
    w3, b3 = params["w3"], params["b3"]
    Bsz, C, H, W = z.shape
    C1 = C // 2
    z1, z2 = z[:, :C1], z[:, C1:]
    dn = ("NCHW", "OIHW", "NCHW")
    y = lax.conv_general_dilated(z1, w1, (1, 1), "SAME", dimension_numbers=dn)
    y = _leaky(y + b1[None, :, None, None])
    y = lax.conv_general_dilated(y, w2, (1, 1), "SAME", dimension_numbers=dn)
    y = _leaky(y + b2[None, :, None, None])
    h = lax.conv_general_dilated(y, w3, (1, 1), "SAME", dimension_numbers=dn)
    h = h + b3[None, :, None, None]
    shift = h[:, 0::2]
    scale = h[:, 1::2]
    safescale = _safescale(scale)
    logdet = jnp.log(safescale).reshape(Bsz, -1).sum(axis=1)
    z2n = (z2 + shift) * safescale
    return jnp.concatenate([z1, z2n], axis=1), logdet


if __name__ == "__main__":
    key = jax.random.PRNGKey(0)
    Bsz, C, H, W, hidden = 2, 4, 16, 16, 32
    C1 = C // 2
    ks = jax.random.split(key, 7)

    z = jax.random.normal(ks[0], (Bsz, C, H, W), dtype=jnp.float32)
    # NOTE: the module zero-inits conv3; we use small random weights so the
    # test exercises the full forward path (semantics are parameter-agnostic).
    params = {
        "w1": 0.1 * jax.random.normal(ks[1], (hidden, C1, 3, 3), jnp.float32),
        "b1": 0.1 * jax.random.normal(ks[2], (hidden,), jnp.float32),
        "w2": 0.1 * jax.random.normal(ks[3], (hidden, hidden, 1, 1), jnp.float32),
        "b2": 0.1 * jax.random.normal(ks[4], (hidden,), jnp.float32),
        "w3": 0.1 * jax.random.normal(ks[5], (2 * C1, hidden, 3, 3), jnp.float32),
        "b3": 0.1 * jax.random.normal(ks[6], (2 * C1,), jnp.float32),
    }

    fwd = jax.jit(affine_flow_step)
    z_out, logdet = fwd(z, params)
    jax.block_until_ready((z_out, logdet))

    z_ref, ld_ref = _reference(z, params)
    np.testing.assert_allclose(np.asarray(z_out), np.asarray(z_ref),
                               rtol=2e-3, atol=2e-3)
    np.testing.assert_allclose(np.asarray(logdet), np.asarray(ld_ref),
                               rtol=2e-3, atol=2e-3)
    print("KERNEL_OK")
</pallas_src>

<mosaic_0001>
module attributes {stable_mosaic.version = 11 : i64} {
  func.func @_fused_flow_kernel(%arg0: i32, %arg1: memref<1x4x256xf32, #tpu.memory_space<vmem>>, %arg2: memref<9x256xf32, #tpu.memory_space<vmem>>, %arg3: memref<9x32x8xf32, #tpu.memory_space<vmem>>, %arg4: memref<32x1xf32, #tpu.memory_space<vmem>>, %arg5: memref<32x32xf32, #tpu.memory_space<vmem>>, %arg6: memref<32x1xf32, #tpu.memory_space<vmem>>, %arg7: memref<9x8x32xf32, #tpu.memory_space<vmem>>, %arg8: memref<8x1xf32, #tpu.memory_space<vmem>>, %arg9: memref<1x4x256xf32, #tpu.memory_space<vmem>>, %arg10: memref<1x1x128xf32, #tpu.memory_space<vmem>>, %arg11: memref<8x512xf32, #tpu.memory_space<vmem>>, %arg12: memref<32x512xf32, #tpu.memory_space<vmem>>) attributes {dimension_semantics = [#tpu.dimension_semantics<parallel>], iteration_bounds = array<i64: 2>, scalar_prefetch = 0 : i64, scratch_operands = 2 : i64, tpu.core_type = #tpu.core_type<tc>, window_params = [{transform_indices = @transform_0, window_bounds = array<i64: 1, 4, 256>}, {pipeline_mode = #tpu.pipeline_mode<synchronous>, transform_indices = @transform_1, window_bounds = array<i64: 9, 256>}, {pipeline_mode = #tpu.pipeline_mode<synchronous>, transform_indices = @transform_2, window_bounds = array<i64: 9, 32, 8>}, {pipeline_mode = #tpu.pipeline_mode<synchronous>, transform_indices = @transform_3, window_bounds = array<i64: 32, 1>}, {pipeline_mode = #tpu.pipeline_mode<synchronous>, transform_indices = @transform_4, window_bounds = array<i64: 32, 32>}, {pipeline_mode = #tpu.pipeline_mode<synchronous>, transform_indices = @transform_5, window_bounds = array<i64: 32, 1>}, {pipeline_mode = #tpu.pipeline_mode<synchronous>, transform_indices = @transform_6, window_bounds = array<i64: 9, 8, 32>}, {pipeline_mode = #tpu.pipeline_mode<synchronous>, transform_indices = @transform_7, window_bounds = array<i64: 8, 1>}, {transform_indices = @transform_8, window_bounds = array<i64: 1, 4, 256>}, {transform_indices = @transform_9, window_bounds = array<i64: 1, 1, 128>}]} {
    %cst = arith.constant 0.000000e+00 : f32
    %0 = vector.broadcast %cst : f32 to vector<8x512xf32>
    %c0 = arith.constant 0 : index
    %c0_0 = arith.constant 0 : index
    %1 = vector.load %arg11[%c0, %c0_0] : memref<8x512xf32, #tpu.memory_space<vmem>>, vector<8x512xf32>
    tpu.vector_store %arg11[%c0, %c0_0], %0 {strides = array<i32>} : memref<8x512xf32, #tpu.memory_space<vmem>>, vector<8x512xf32>,
    %cst_1 = arith.constant 0.000000e+00 : f32
    %2 = vector.broadcast %cst_1 : f32 to vector<32x512xf32>
    %c0_2 = arith.constant 0 : index
    %c0_3 = arith.constant 0 : index
    %3 = vector.load %arg12[%c0_2, %c0_3] : memref<32x512xf32, #tpu.memory_space<vmem>>, vector<32x512xf32>
    tpu.vector_store %arg12[%c0_2, %c0_3], %2 {strides = array<i32>} : memref<32x512xf32, #tpu.memory_space<vmem>>, vector<32x512xf32>,
    %c0_4 = arith.constant 0 : index
    %c0_5 = arith.constant 0 : index
    %c0_6 = arith.constant 0 : index
    %4 = vector.load %arg1[%c0_4, %c0_5, %c0_6] : memref<1x4x256xf32, #tpu.memory_space<vmem>>, vector<1x2x256xf32>
    %5 = vector.shape_cast %4 : vector<1x2x256xf32> to vector<2x256xf32>
    %c0_7 = arith.constant 0 : index
    %c2 = arith.constant 2 : index
    %c0_8 = arith.constant 0 : index
    %6 = vector.load %arg1[%c0_7, %c2, %c0_8] : memref<1x4x256xf32, #tpu.memory_space<vmem>>, vector<1x2x256xf32>
    %7 = vector.shape_cast %6 : vector<1x2x256xf32> to vector<2x256xf32>
    %c0_9 = arith.constant 0 : index
    %c128 = arith.constant 128 : index
    %8 = vector.load %arg11[%c0_9, %c128] : memref<8x512xf32, #tpu.memory_space<vmem>>, vector<2x256xf32>
    tpu.vector_store %arg11[%c0_9, %c128], %5 {strides = array<i32>} : memref<8x512xf32, #tpu.memory_space<vmem>>, vector<2x256xf32>,
    %cst_10 = arith.constant 0.000000e+00 : f32
    %9 = vector.broadcast %cst_10 : f32 to vector<32x256xf32>
    %c0_11 = arith.constant 0 : index
    %c111 = arith.constant 111 : index
    %10 = vector.load %arg11[%c0_11, %c111] : memref<8x512xf32, #tpu.memory_space<vmem>>, vector<8x256xf32>
    %c0_12 = arith.constant 0 : index
    %c0_13 = arith.constant 0 : index
    %11 = vector.load %arg2[%c0_12, %c0_13] : memref<9x256xf32, #tpu.memory_space<vmem>>, vector<1x256xf32>
    %12 = vector.broadcast %11 : vector<1x256xf32> to vector<8x256xf32>
    %13 = arith.mulf %10, %12 : vector<8x256xf32>
    %c0_14 = arith.constant 0 : index
    %c0_15 = arith.constant 0 : index
    %c0_16 = arith.constant 0 : index
    %14 = vector.load %arg3[%c0_14, %c0_15, %c0_16] : memref<9x32x8xf32, #tpu.memory_space<vmem>>, vector<1x32x8xf32>
    %15 = vector.shape_cast %14 : vector<1x32x8xf32> to vector<32x8xf32>
    %cst_17 = arith.constant dense<0.000000e+00> : vector<32x256xf32>
    %16 = tpu.matmul %15, %13, %cst_17 {dimension_numbers = #tpu.dot_dimension_numbers<[1], [0], [0], [1], [0, 0, 1, 1], [], []>} : vector<32x8xf32>, vector<8x256xf32>, vector<32x256xf32> -> vector<32x256xf32>
    %17 = arith.addf %9, %16 : vector<32x256xf32>
    %c0_18 = arith.constant 0 : index
    %c112 = arith.constant 112 : index
    %18 = vector.load %arg11[%c0_18, %c112] : memref<8x512xf32, #tpu.memory_space<vmem>>, vector<8x256xf32>
    %c1 = arith.constant 1 : index
    %c0_19 = arith.constant 0 : index
    %19 = vector.load %arg2[%c1, %c0_19] : memref<9x256xf32, #tpu.memory_space<vmem>>, vector<1x256xf32>
    %20 = vector.broadcast %19 : vector<1x256xf32> to vector<8x256xf32>
    %21 = arith.mulf %18, %20 : vector<8x256xf32>
    %c1_20 = arith.constant 1 : index
    %c0_21 = arith.constant 0 : index
    %c0_22 = arith.constant 0 : index
    %22 = vector.load %arg3[%c1_20, %c0_21, %c0_22] : memref<9x32x8xf32, #tpu.memory_space<vmem>>, vector<1x32x8xf32>
    %23 = vector.shape_cast %22 : vector<1x32x8xf32> to vector<32x8xf32>
    %cst_23 = arith.constant dense<0.000000e+00> : vector<32x256xf32>
    %24 = tpu.matmul %23, %21, %cst_23 {dimension_numbers = #tpu.dot_dimension_numbers<[1], [0], [0], [1], [0, 0, 1, 1], [], []>} : vector<32x8xf32>, vector<8x256xf32>, vector<32x256xf32> -> vector<32x256xf32>
    %25 = arith.addf %17, %24 : vector<32x256xf32>
    %c0_24 = arith.constant 0 : index
    %c113 = arith.constant 113 : index
    %26 = vector.load %arg11[%c0_24, %c113] : memref<8x512xf32, #tpu.memory_space<vmem>>, vector<8x256xf32>
    %c2_25 = arith.constant 2 : index
    %c0_26 = arith.constant 0 : index
    %27 = vector.load %arg2[%c2_25, %c0_26] : memref<9x256xf32, #tpu.memory_space<vmem>>, vector<1x256xf32>
    %28 = vector.broadcast %27 : vector<1x256xf32> to vector<8x256xf32>
    %29 = arith.mulf %26, %28 : vector<8x256xf32>
    %c2_27 = arith.constant 2 : index
    %c0_28 = arith.constant 0 : index
    %c0_29 = arith.constant 0 : index
    %30 = vector.load %arg3[%c2_27, %c0_28, %c0_29] : memref<9x32x8xf32, #tpu.memory_space<vmem>>, vector<1x32x8xf32>
    %31 = vector.shape_cast %30 : vector<1x32x8xf32> to vector<32x8xf32>
    %cst_30 = arith.constant dense<0.000000e+00> : vector<32x256xf32>
    %32 = tpu.matmul %31, %29, %cst_30 {dimension_numbers = #tpu.dot_dimension_numbers<[1], [0], [0], [1], [0, 0, 1, 1], [], []>} : vector<32x8xf32>, vector<8x256xf32>, vector<32x256xf32> -> vector<32x256xf32>
    %33 = arith.addf %25, %32 : vector<32x256xf32>
    %c0_31 = arith.constant 0 : index
    %c127 = arith.constant 127 : index
    %34 = vector.load %arg11[%c0_31, %c127] : memref<8x512xf32, #tpu.memory_space<vmem>>, vector<8x256xf32>
    %c3 = arith.constant 3 : index
    %c0_32 = arith.constant 0 : index
    %35 = vector.load %arg2[%c3, %c0_32] : memref<9x256xf32, #tpu.memory_space<vmem>>, vector<1x256xf32>
    %36 = vector.broadcast %35 : vector<1x256xf32> to vector<8x256xf32>
    %37 = arith.mulf %34, %36 : vector<8x256xf32>
    %c3_33 = arith.constant 3 : index
    %c0_34 = arith.constant 0 : index
    %c0_35 = arith.constant 0 : index
    %38 = vector.load %arg3[%c3_33, %c0_34, %c0_35] : memref<9x32x8xf32, #tpu.memory_space<vmem>>, vector<1x32x8xf32>
    %39 = vector.shape_cast %38 : vector<1x32x8xf32> to vector<32x8xf32>
    %cst_36 = arith.constant dense<0.000000e+00> : vector<32x256xf32>
    %40 = tpu.matmul %39, %37, %cst_36 {dimension_numbers = #tpu.dot_dimension_numbers<[1], [0], [0], [1], [0, 0, 1, 1], [], []>} : vector<32x8xf32>, vector<8x256xf32>, vector<32x256xf32> -> vector<32x256xf32>
    %41 = arith.addf %33, %40 : vector<32x256xf32>
    %c0_37 = arith.constant 0 : index
    %c128_38 = arith.constant 128 : index
    %42 = vector.load %arg11[%c0_37, %c128_38] : memref<8x512xf32, #tpu.memory_space<vmem>>, vector<8x256xf32>
    %c4 = arith.constant 4 : index
    %c0_39 = arith.constant 0 : index
    %43 = vector.load %arg2[%c4, %c0_39] : memref<9x256xf32, #tpu.memory_space<vmem>>, vector<1x256xf32>
    %44 = vector.broadcast %43 : vector<1x256xf32> to vector<8x256xf32>
    %45 = arith.mulf %42, %44 : vector<8x256xf32>
    %c4_40 = arith.constant 4 : index
    %c0_41 = arith.constant 0 : index
    %c0_42 = arith.constant 0 : index
    %46 = vector.load %arg3[%c4_40, %c0_41, %c0_42] : memref<9x32x8xf32, #tpu.memory_space<vmem>>, vector<1x32x8xf32>
    %47 = vector.shape_cast %46 : vector<1x32x8xf32> to vector<32x8xf32>
    %cst_43 = arith.constant dense<0.000000e+00> : vector<32x256xf32>
    %48 = tpu.matmul %47, %45, %cst_43 {dimension_numbers = #tpu.dot_dimension_numbers<[1], [0], [0], [1], [0, 0, 1, 1], [], []>} : vector<32x8xf32>, vector<8x256xf32>, vector<32x256xf32> -> vector<32x256xf32>
    %49 = arith.addf %41, %48 : vector<32x256xf32>
    %c0_44 = arith.constant 0 : index
    %c129 = arith.constant 129 : index
    %50 = vector.load %arg11[%c0_44, %c129] : memref<8x512xf32, #tpu.memory_space<vmem>>, vector<8x256xf32>
    %c5 = arith.constant 5 : index
    %c0_45 = arith.constant 0 : index
    %51 = vector.load %arg2[%c5, %c0_45] : memref<9x256xf32, #tpu.memory_space<vmem>>, vector<1x256xf32>
    %52 = vector.broadcast %51 : vector<1x256xf32> to vector<8x256xf32>
    %53 = arith.mulf %50, %52 : vector<8x256xf32>
    %c5_46 = arith.constant 5 : index
    %c0_47 = arith.constant 0 : index
    %c0_48 = arith.constant 0 : index
    %54 = vector.load %arg3[%c5_46, %c0_47, %c0_48] : memref<9x32x8xf32, #tpu.memory_space<vmem>>, vector<1x32x8xf32>
    %55 = vector.shape_cast %54 : vector<1x32x8xf32> to vector<32x8xf32>
    %cst_49 = arith.constant dense<0.000000e+00> : vector<32x256xf32>
    %56 = tpu.matmul %55, %53, %cst_49 {dimension_numbers = #tpu.dot_dimension_numbers<[1], [0], [0], [1], [0, 0, 1, 1], [], []>} : vector<32x8xf32>, vector<8x256xf32>, vector<32x256xf32> -> vector<32x256xf32>
    %57 = arith.addf %49, %56 : vector<32x256xf32>
    %c0_50 = arith.constant 0 : index
    %c143 = arith.constant 143 : index
    %58 = vector.load %arg11[%c0_50, %c143] : memref<8x512xf32, #tpu.memory_space<vmem>>, vector<8x256xf32>
    %c6 = arith.constant 6 : index
    %c0_51 = arith.constant 0 : index
    %59 = vector.load %arg2[%c6, %c0_51] : memref<9x256xf32, #tpu.memory_space<vmem>>, vector<1x256xf32>
    %60 = vector.broadcast %59 : vector<1x256xf32> to vector<8x256xf32>
    %61 = arith.mulf %58, %60 : vector<8x256xf32>
    %c6_52 = arith.constant 6 : index
    %c0_53 = arith.constant 0 : index
    %c0_54 = arith.constant 0 : index
    %62 = vector.load %arg3[%c6_52, %c0_53, %c0_54] : memref<9x32x8xf32, #tpu.memory_space<vmem>>, vector<1x32x8xf32>
    %63 = vector.shape_cast %62 : vector<1x32x8xf32> to vector<32x8xf32>
    %cst_55 = arith.constant dense<0.000000e+00> : vector<32x256xf32>
    %64 = tpu.matmul %63, %61, %cst_55 {dimension_numbers = #tpu.dot_dimension_numbers<[1], [0], [0], [1], [0, 0, 1, 1], [], []>} : vector<32x8xf32>, vector<8x256xf32>, vector<32x256xf32> -> vector<32x256xf32>
    %65 = arith.addf %57, %64 : vector<32x256xf32>
    %c0_56 = arith.constant 0 : index
    %c144 = arith.constant 144 : index
    %66 = vector.load %arg11[%c0_56, %c144] : memref<8x512xf32, #tpu.memory_space<vmem>>, vector<8x256xf32>
    %c7 = arith.constant 7 : index
    %c0_57 = arith.constant 0 : index
    %67 = vector.load %arg2[%c7, %c0_57] : memref<9x256xf32, #tpu.memory_space<vmem>>, vector<1x256xf32>
    %68 = vector.broadcast %67 : vector<1x256xf32> to vector<8x256xf32>
    %69 = arith.mulf %66, %68 : vector<8x256xf32>
    %c7_58 = arith.constant 7 : index
    %c0_59 = arith.constant 0 : index
    %c0_60 = arith.constant 0 : index
    %70 = vector.load %arg3[%c7_58, %c0_59, %c0_60] : memref<9x32x8xf32, #tpu.memory_space<vmem>>, vector<1x32x8xf32>
    %71 = vector.shape_cast %70 : vector<1x32x8xf32> to vector<32x8xf32>
    %cst_61 = arith.constant dense<0.000000e+00> : vector<32x256xf32>
    %72 = tpu.matmul %71, %69, %cst_61 {dimension_numbers = #tpu.dot_dimension_numbers<[1], [0], [0], [1], [0, 0, 1, 1], [], []>} : vector<32x8xf32>, vector<8x256xf32>, vector<32x256xf32> -> vector<32x256xf32>
    %73 = arith.addf %65, %72 : vector<32x256xf32>
    %c0_62 = arith.constant 0 : index
    %c145 = arith.constant 145 : index
    %74 = vector.load %arg11[%c0_62, %c145] : memref<8x512xf32, #tpu.memory_space<vmem>>, vector<8x256xf32>
    %c8 = arith.constant 8 : index
    %c0_63 = arith.constant 0 : index
    %75 = vector.load %arg2[%c8, %c0_63] : memref<9x256xf32, #tpu.memory_space<vmem>>, vector<1x256xf32>
    %76 = vector.broadcast %75 : vector<1x256xf32> to vector<8x256xf32>
    %77 = arith.mulf %74, %76 : vector<8x256xf32>
    %c8_64 = arith.constant 8 : index
    %c0_65 = arith.constant 0 : index
    %c0_66 = arith.constant 0 : index
    %78 = vector.load %arg3[%c8_64, %c0_65, %c0_66] : memref<9x32x8xf32, #tpu.memory_space<vmem>>, vector<1x32x8xf32>
    %79 = vector.shape_cast %78 : vector<1x32x8xf32> to vector<32x8xf32>
    %cst_67 = arith.constant dense<0.000000e+00> : vector<32x256xf32>
    %80 = tpu.matmul %79, %77, %cst_67 {dimension_numbers = #tpu.dot_dimension_numbers<[1], [0], [0], [1], [0, 0, 1, 1], [], []>} : vector<32x8xf32>, vector<8x256xf32>, vector<32x256xf32> -> vector<32x256xf32>
    %81 = arith.addf %73, %80 : vector<32x256xf32>
    %c0_68 = arith.constant 0 : index
    %c0_69 = arith.constant 0 : index
    %82 = vector.load %arg4[%c0_68, %c0_69] : memref<32x1xf32, #tpu.memory_space<vmem>>, vector<32x1xf32>
    %83 = vector.broadcast %82 : vector<32x1xf32> to vector<32x256xf32>
    %84 = arith.addf %81, %83 : vector<32x256xf32>
    %cst_70 = arith.constant 0.00999999977 : f32
    %85 = vector.broadcast %cst_70 : f32 to vector<32x256xf32>
    %86 = arith.mulf %85, %84 : vector<32x256xf32>
    %87 = arith.maximumf %84, %86 : vector<32x256xf32>
    %c0_71 = arith.constant 0 : index
    %c0_72 = arith.constant 0 : index
    %88 = vector.load %arg5[%c0_71, %c0_72] : memref<32x32xf32, #tpu.memory_space<vmem>>, vector<32x32xf32>
    %cst_73 = arith.constant dense<0.000000e+00> : vector<32x256xf32>
    %89 = tpu.matmul %88, %87, %cst_73 {dimension_numbers = #tpu.dot_dimension_numbers<[1], [0], [0], [1], [0, 0, 1, 1], [], []>} : vector<32x32xf32>, vector<32x256xf32>, vector<32x256xf32> -> vector<32x256xf32>
    %c0_74 = arith.constant 0 : index
    %c0_75 = arith.constant 0 : index
    %90 = vector.load %arg6[%c0_74, %c0_75] : memref<32x1xf32, #tpu.memory_space<vmem>>, vector<32x1xf32>
    %91 = vector.broadcast %90 : vector<32x1xf32> to vector<32x256xf32>
    %92 = arith.addf %89, %91 : vector<32x256xf32>
    %cst_76 = arith.constant 0.00999999977 : f32
    %93 = vector.broadcast %cst_76 : f32 to vector<32x256xf32>
    %94 = arith.mulf %93, %92 : vector<32x256xf32>
    %95 = arith.maximumf %92, %94 : vector<32x256xf32>
    %c0_77 = arith.constant 0 : index
    %c128_78 = arith.constant 128 : index
    %96 = vector.load %arg12[%c0_77, %c128_78] : memref<32x512xf32, #tpu.memory_space<vmem>>, vector<32x256xf32>
    tpu.vector_store %arg12[%c0_77, %c128_78], %95 {strides = array<i32>} : memref<32x512xf32, #tpu.memory_space<vmem>>, vector<32x256xf32>,
    %cst_79 = arith.constant 0.000000e+00 : f32
    %97 = vector.broadcast %cst_79 : f32 to vector<8x256xf32>
    %c0_80 = arith.constant 0 : index
    %c0_81 = arith.constant 0 : index
    %c0_82 = arith.constant 0 : index
    %98 = vector.load %arg7[%c0_80, %c0_81, %c0_82] : memref<9x8x32xf32, #tpu.memory_space<vmem>>, vector<1x8x32xf32>
    %99 = vector.shape_cast %98 : vector<1x8x32xf32> to vector<8x32xf32>
    %c0_83 = arith.constant 0 : index
    %c111_84 = arith.constant 111 : index
    %100 = vector.load %arg12[%c0_83, %c111_84] : memref<32x512xf32, #tpu.memory_space<vmem>>, vector<32x256xf32>
    %cst_85 = arith.constant dense<0.000000e+00> : vector<8x256xf32>
    %101 = tpu.matmul %99, %100, %cst_85 {dimension_numbers = #tpu.dot_dimension_numbers<[1], [0], [0], [1], [0, 0, 1, 1], [], []>} : vector<8x32xf32>, vector<32x256xf32>, vector<8x256xf32> -> vector<8x256xf32>
    %c0_86 = arith.constant 0 : index
    %c0_87 = arith.constant 0 : index
    %102 = vector.load %arg2[%c0_86, %c0_87] : memref<9x256xf32, #tpu.memory_space<vmem>>, vector<1x256xf32>
    %103 = vector.broadcast %102 : vector<1x256xf32> to vector<8x256xf32>
    %104 = arith.mulf %101, %103 : vector<8x256xf32>
    %105 = arith.addf %97, %104 : vector<8x256xf32>
    %c1_88 = arith.constant 1 : index
    %c0_89 = arith.constant 0 : index
    %c0_90 = arith.constant 0 : index
    %106 = vector.load %arg7[%c1_88, %c0_89, %c0_90] : memref<9x8x32xf32, #tpu.memory_space<vmem>>, vector<1x8x32xf32>
    %107 = vector.shape_cast %106 : vector<1x8x32xf32> to vector<8x32xf32>
    %c0_91 = arith.constant 0 : index
    %c112_92 = arith.constant 112 : index
    %108 = vector.load %arg12[%c0_91, %c112_92] : memref<32x512xf32, #tpu.memory_space<vmem>>, vector<32x256xf32>
    %cst_93 = arith.constant dense<0.000000e+00> : vector<8x256xf32>
    %109 = tpu.matmul %107, %108, %cst_93 {dimension_numbers = #tpu.dot_dimension_numbers<[1], [0], [0], [1], [0, 0, 1, 1], [], []>} : vector<8x32xf32>, vector<32x256xf32>, vector<8x256xf32> -> vector<8x256xf32>
    %c1_94 = arith.constant 1 : index
    %c0_95 = arith.constant 0 : index
    %110 = vector.load %arg2[%c1_94, %c0_95] : memref<9x256xf32, #tpu.memory_space<vmem>>, vector<1x256xf32>
    %111 = vector.broadcast %110 : vector<1x256xf32> to vector<8x256xf32>
    %112 = arith.mulf %109, %111 : vector<8x256xf32>
    %113 = arith.addf %105, %112 : vector<8x256xf32>
    %c2_96 = arith.constant 2 : index
    %c0_97 = arith.constant 0 : index
    %c0_98 = arith.constant 0 : index
    %114 = vector.load %arg7[%c2_96, %c0_97, %c0_98] : memref<9x8x32xf32, #tpu.memory_space<vmem>>, vector<1x8x32xf32>
    %115 = vector.shape_cast %114 : vector<1x8x32xf32> to vector<8x32xf32>
    %c0_99 = arith.constant 0 : index
    %c113_100 = arith.constant 113 : index
    %116 = vector.load %arg12[%c0_99, %c113_100] : memref<32x512xf32, #tpu.memory_space<vmem>>, vector<32x256xf32>
    %cst_101 = arith.constant dense<0.000000e+00> : vector<8x256xf32>
    %117 = tpu.matmul %115, %116, %cst_101 {dimension_numbers = #tpu.dot_dimension_numbers<[1], [0], [0], [1], [0, 0, 1, 1], [], []>} : vector<8x32xf32>, vector<32x256xf32>, vector<8x256xf32> -> vector<8x256xf32>
    %c2_102 = arith.constant 2 : index
    %c0_103 = arith.constant 0 : index
    %118 = vector.load %arg2[%c2_102, %c0_103] : memref<9x256xf32, #tpu.memory_space<vmem>>, vector<1x256xf32>
    %119 = vector.broadcast %118 : vector<1x256xf32> to vector<8x256xf32>
    %120 = arith.mulf %117, %119 : vector<8x256xf32>
    %121 = arith.addf %113, %120 : vector<8x256xf32>
    %c3_104 = arith.constant 3 : index
    %c0_105 = arith.constant 0 : index
    %c0_106 = arith.constant 0 : index
    %122 = vector.load %arg7[%c3_104, %c0_105, %c0_106] : memref<9x8x32xf32, #tpu.memory_space<vmem>>, vector<1x8x32xf32>
    %123 = vector.shape_cast %122 : vector<1x8x32xf32> to vector<8x32xf32>
    %c0_107 = arith.constant 0 : index
    %c127_108 = arith.constant 127 : index
    %124 = vector.load %arg12[%c0_107, %c127_108] : memref<32x512xf32, #tpu.memory_space<vmem>>, vector<32x256xf32>
    %cst_109 = arith.constant dense<0.000000e+00> : vector<8x256xf32>
    %125 = tpu.matmul %123, %124, %cst_109 {dimension_numbers = #tpu.dot_dimension_numbers<[1], [0], [0], [1], [0, 0, 1, 1], [], []>} : vector<8x32xf32>, vector<32x256xf32>, vector<8x256xf32> -> vector<8x256xf32>
    %c3_110 = arith.constant 3 : index
    %c0_111 = arith.constant 0 : index
    %126 = vector.load %arg2[%c3_110, %c0_111] : memref<9x256xf32, #tpu.memory_space<vmem>>, vector<1x256xf32>
    %127 = vector.broadcast %126 : vector<1x256xf32> to vector<8x256xf32>
    %128 = arith.mulf %125, %127 : vector<8x256xf32>
    %129 = arith.addf %121, %128 : vector<8x256xf32>
    %c4_112 = arith.constant 4 : index
    %c0_113 = arith.constant 0 : index
    %c0_114 = arith.constant 0 : index
    %130 = vector.load %arg7[%c4_112, %c0_113, %c0_114] : memref<9x8x32xf32, #tpu.memory_space<vmem>>, vector<1x8x32xf32>
    %131 = vector.shape_cast %130 : vector<1x8x32xf32> to vector<8x32xf32>
    %c0_115 = arith.constant 0 : index
    %c128_116 = arith.constant 128 : index
    %132 = vector.load %arg12[%c0_115, %c128_116] : memref<32x512xf32, #tpu.memory_space<vmem>>, vector<32x256xf32>
    %cst_117 = arith.constant dense<0.000000e+00> : vector<8x256xf32>
    %133 = tpu.matmul %131, %132, %cst_117 {dimension_numbers = #tpu.dot_dimension_numbers<[1], [0], [0], [1], [0, 0, 1, 1], [], []>} : vector<8x32xf32>, vector<32x256xf32>, vector<8x256xf32> -> vector<8x256xf32>
    %c4_118 = arith.constant 4 : index
    %c0_119 = arith.constant 0 : index
    %134 = vector.load %arg2[%c4_118, %c0_119] : memref<9x256xf32, #tpu.memory_space<vmem>>, vector<1x256xf32>
    %135 = vector.broadcast %134 : vector<1x256xf32> to vector<8x256xf32>
    %136 = arith.mulf %133, %135 : vector<8x256xf32>
    %137 = arith.addf %129, %136 : vector<8x256xf32>
    %c5_120 = arith.constant 5 : index
    %c0_121 = arith.constant 0 : index
    %c0_122 = arith.constant 0 : index
    %138 = vector.load %arg7[%c5_120, %c0_121, %c0_122] : memref<9x8x32xf32, #tpu.memory_space<vmem>>, vector<1x8x32xf32>
    %139 = vector.shape_cast %138 : vector<1x8x32xf32> to vector<8x32xf32>
    %c0_123 = arith.constant 0 : index
    %c129_124 = arith.constant 129 : index
    %140 = vector.load %arg12[%c0_123, %c129_124] : memref<32x512xf32, #tpu.memory_space<vmem>>, vector<32x256xf32>
    %cst_125 = arith.constant dense<0.000000e+00> : vector<8x256xf32>
    %141 = tpu.matmul %139, %140, %cst_125 {dimension_numbers = #tpu.dot_dimension_numbers<[1], [0], [0], [1], [0, 0, 1, 1], [], []>} : vector<8x32xf32>, vector<32x256xf32>, vector<8x256xf32> -> vector<8x256xf32>
    %c5_126 = arith.constant 5 : index
    %c0_127 = arith.constant 0 : index
    %142 = vector.load %arg2[%c5_126, %c0_127] : memref<9x256xf32, #tpu.memory_space<vmem>>, vector<1x256xf32>
    %143 = vector.broadcast %142 : vector<1x256xf32> to vector<8x256xf32>
    %144 = arith.mulf %141, %143 : vector<8x256xf32>
    %145 = arith.addf %137, %144 : vector<8x256xf32>
    %c6_128 = arith.constant 6 : index
    %c0_129 = arith.constant 0 : index
    %c0_130 = arith.constant 0 : index
    %146 = vector.load %arg7[%c6_128, %c0_129, %c0_130] : memref<9x8x32xf32, #tpu.memory_space<vmem>>, vector<1x8x32xf32>
    %147 = vector.shape_cast %146 : vector<1x8x32xf32> to vector<8x32xf32>
    %c0_131 = arith.constant 0 : index
    %c143_132 = arith.constant 143 : index
    %148 = vector.load %arg12[%c0_131, %c143_132] : memref<32x512xf32, #tpu.memory_space<vmem>>, vector<32x256xf32>
    %cst_133 = arith.constant dense<0.000000e+00> : vector<8x256xf32>
    %149 = tpu.matmul %147, %148, %cst_133 {dimension_numbers = #tpu.dot_dimension_numbers<[1], [0], [0], [1], [0, 0, 1, 1], [], []>} : vector<8x32xf32>, vector<32x256xf32>, vector<8x256xf32> -> vector<8x256xf32>
    %c6_134 = arith.constant 6 : index
    %c0_135 = arith.constant 0 : index
    %150 = vector.load %arg2[%c6_134, %c0_135] : memref<9x256xf32, #tpu.memory_space<vmem>>, vector<1x256xf32>
    %151 = vector.broadcast %150 : vector<1x256xf32> to vector<8x256xf32>
    %152 = arith.mulf %149, %151 : vector<8x256xf32>
    %153 = arith.addf %145, %152 : vector<8x256xf32>
    %c7_136 = arith.constant 7 : index
    %c0_137 = arith.constant 0 : index
    %c0_138 = arith.constant 0 : index
    %154 = vector.load %arg7[%c7_136, %c0_137, %c0_138] : memref<9x8x32xf32, #tpu.memory_space<vmem>>, vector<1x8x32xf32>
    %155 = vector.shape_cast %154 : vector<1x8x32xf32> to vector<8x32xf32>
    %c0_139 = arith.constant 0 : index
    %c144_140 = arith.constant 144 : index
    %156 = vector.load %arg12[%c0_139, %c144_140] : memref<32x512xf32, #tpu.memory_space<vmem>>, vector<32x256xf32>
    %cst_141 = arith.constant dense<0.000000e+00> : vector<8x256xf32>
    %157 = tpu.matmul %155, %156, %cst_141 {dimension_numbers = #tpu.dot_dimension_numbers<[1], [0], [0], [1], [0, 0, 1, 1], [], []>} : vector<8x32xf32>, vector<32x256xf32>, vector<8x256xf32> -> vector<8x256xf32>
    %c7_142 = arith.constant 7 : index
    %c0_143 = arith.constant 0 : index
    %158 = vector.load %arg2[%c7_142, %c0_143] : memref<9x256xf32, #tpu.memory_space<vmem>>, vector<1x256xf32>
    %159 = vector.broadcast %158 : vector<1x256xf32> to vector<8x256xf32>
    %160 = arith.mulf %157, %159 : vector<8x256xf32>
    %161 = arith.addf %153, %160 : vector<8x256xf32>
    %c8_144 = arith.constant 8 : index
    %c0_145 = arith.constant 0 : index
    %c0_146 = arith.constant 0 : index
    %162 = vector.load %arg7[%c8_144, %c0_145, %c0_146] : memref<9x8x32xf32, #tpu.memory_space<vmem>>, vector<1x8x32xf32>
    %163 = vector.shape_cast %162 : vector<1x8x32xf32> to vector<8x32xf32>
    %c0_147 = arith.constant 0 : index
    %c145_148 = arith.constant 145 : index
    %164 = vector.load %arg12[%c0_147, %c145_148] : memref<32x512xf32, #tpu.memory_space<vmem>>, vector<32x256xf32>
    %cst_149 = arith.constant dense<0.000000e+00> : vector<8x256xf32>
    %165 = tpu.matmul %163, %164, %cst_149 {dimension_numbers = #tpu.dot_dimension_numbers<[1], [0], [0], [1], [0, 0, 1, 1], [], []>} : vector<8x32xf32>, vector<32x256xf32>, vector<8x256xf32> -> vector<8x256xf32>
    %c8_150 = arith.constant 8 : index
    %c0_151 = arith.constant 0 : index
    %166 = vector.load %arg2[%c8_150, %c0_151] : memref<9x256xf32, #tpu.memory_space<vmem>>, vector<1x256xf32>
    %167 = vector.broadcast %166 : vector<1x256xf32> to vector<8x256xf32>
    %168 = arith.mulf %165, %167 : vector<8x256xf32>
    %169 = arith.addf %161, %168 : vector<8x256xf32>
    %c0_152 = arith.constant 0 : index
    %c0_153 = arith.constant 0 : index
    %170 = vector.load %arg8[%c0_152, %c0_153] : memref<8x1xf32, #tpu.memory_space<vmem>>, vector<8x1xf32>
    %171 = vector.broadcast %170 : vector<8x1xf32> to vector<8x256xf32>
    %172 = arith.addf %169, %171 : vector<8x256xf32>
    %173 = vector.extract_strided_slice %172 {offsets = [0, 0], sizes = [2, 256], strides = [1, 1]} : vector<8x256xf32> to vector<2x256xf32>
    %174 = vector.extract_strided_slice %172 {offsets = [2, 0], sizes = [2, 256], strides = [1, 1]} : vector<8x256xf32> to vector<2x256xf32>
    %cst_154 = arith.constant -0.00100050028 : f32
    %175 = vector.broadcast %cst_154 : f32 to vector<2x256xf32>
    %176 = arith.addf %174, %175 : vector<2x256xf32>
    %cst_155 = arith.constant 0.000000e+00 : f32
    %177 = vector.broadcast %cst_155 : f32 to vector<2x256xf32>
    %178 = arith.subf %177, %176 : vector<2x256xf32>
    %179 = math.exp %178 : vector<2x256xf32>
    %cst_156 = arith.constant 1.000000e+00 : f32
    %180 = vector.broadcast %cst_156 : f32 to vector<2x256xf32>
    %181 = arith.addf %180, %179 : vector<2x256xf32>
    %cst_157 = arith.constant 1.999000e+00 : f32
    %182 = vector.broadcast %cst_157 : f32 to vector<2x256xf32>
    %183 = arith.divf %182, %181 : vector<2x256xf32>
    %cst_158 = arith.constant 1.000000e-03 : f32
    %184 = vector.broadcast %cst_158 : f32 to vector<2x256xf32>
    %185 = arith.addf %183, %184 : vector<2x256xf32>
    %186 = arith.addf %7, %173 : vector<2x256xf32>
    %187 = arith.mulf %186, %185 : vector<2x256xf32>
    %c0_159 = arith.constant 0 : index
    %c0_160 = arith.constant 0 : index
    %c0_161 = arith.constant 0 : index
    %188 = vector.load %arg9[%c0_159, %c0_160, %c0_161] : memref<1x4x256xf32, #tpu.memory_space<vmem>>, vector<1x2x256xf32>
    %189 = vector.shape_cast %188 : vector<1x2x256xf32> to vector<2x256xf32>
    %190 = vector.shape_cast %5 : vector<2x256xf32> to vector<1x2x256xf32>
    tpu.vector_store %arg9[%c0_159, %c0_160, %c0_161], %190 {strides = array<i32>} : memref<1x4x256xf32, #tpu.memory_space<vmem>>, vector<1x2x256xf32>,
    %c0_162 = arith.constant 0 : index
    %c2_163 = arith.constant 2 : index
    %c0_164 = arith.constant 0 : index
    %191 = vector.load %arg9[%c0_162, %c2_163, %c0_164] : memref<1x4x256xf32, #tpu.memory_space<vmem>>, vector<1x2x256xf32>
    %192 = vector.shape_cast %191 : vector<1x2x256xf32> to vector<2x256xf32>
    %193 = vector.shape_cast %187 : vector<2x256xf32> to vector<1x2x256xf32>
    tpu.vector_store %arg9[%c0_162, %c2_163, %c0_164], %193 {strides = array<i32>} : memref<1x4x256xf32, #tpu.memory_space<vmem>>, vector<1x2x256xf32>,
    %194 = math.log %185 : vector<2x256xf32>
    %195 = vector.shape_cast %194 : vector<2x256xf32> to vector<1x2x256xf32>
    %cst_165 = arith.constant dense<0.000000e+00> : vector<1xf32>
    %196 = vector.multi_reduction <add>, %195, %cst_165 [1, 2] : vector<1x2x256xf32> to vector<1xf32>
    %197 = vector.shape_cast %196 : vector<1xf32> to vector<1x1x1xf32>
    %198 = vector.extract %197[0, 0, 0] : f32 from vector<1x1x1xf32>
    %cst_166 = arith.constant 0.000000e+00 : f32
    %199 = vector.broadcast %cst_166 : f32 to vector<1x1x128xf32>
    %200 = vector.broadcast %198 : f32 to vector<1x1x128xf32>
    %201 = arith.addf %199, %200 : vector<1x1x128xf32>
    %c0_167 = arith.constant 0 : index
    %c0_168 = arith.constant 0 : index
    %c0_169 = arith.constant 0 : index
    %202 = vector.load %arg10[%c0_167, %c0_168, %c0_169] : memref<1x1x128xf32, #tpu.memory_space<vmem>>, vector<1x1x128xf32>
    tpu.vector_store %arg10[%c0_167, %c0_168, %c0_169], %201 {strides = array<i32>} : memref<1x1x128xf32, #tpu.memory_space<vmem>>, vector<1x1x128xf32>,
    return
  }
  func.func @transform_0(%arg0: i32) -> (i32, i32, i32) {
    %c0_i32 = arith.constant 0 : i32
    %c0_i32_0 = arith.constant 0 : i32
    %c0_i32_1 = arith.constant 0 : i32
    return %arg0, %c0_i32, %c0_i32_0 : i32, i32, i32
  }
  func.func @transform_1(%arg0: i32) -> (i32, i32) {
    %c0_i32 = arith.constant 0 : i32
    %c0_i32_0 = arith.constant 0 : i32
    %c0_i32_1 = arith.constant 0 : i32
    return %c0_i32, %c0_i32_0 : i32, i32
  }
  func.func @transform_2(%arg0: i32) -> (i32, i32, i32) {
    %c0_i32 = arith.constant 0 : i32
    %c0_i32_0 = arith.constant 0 : i32
    %c0_i32_1 = arith.constant 0 : i32
    %c0_i32_2 = arith.constant 0 : i32
    return %c0_i32, %c0_i32_0, %c0_i32_1 : i32, i32, i32
  }
  func.func @transform_3(%arg0: i32) -> (i32, i32) {
    %c0_i32 = arith.constant 0 : i32
    %c0_i32_0 = arith.constant 0 : i32
    %c0_i32_1 = arith.constant 0 : i32
    return %c0_i32, %c0_i32_0 : i32, i32
  }
  func.func @transform_4(%arg0: i32) -> (i32, i32) {
    %c0_i32 = arith.constant 0 : i32
    %c0_i32_0 = arith.constant 0 : i32
    %c0_i32_1 = arith.constant 0 : i32
    return %c0_i32, %c0_i32_0 : i32, i32
  }
  func.func @transform_5(%arg0: i32) -> (i32, i32) {
    %c0_i32 = arith.constant 0 : i32
    %c0_i32_0 = arith.constant 0 : i32
    %c0_i32_1 = arith.constant 0 : i32
    return %c0_i32, %c0_i32_0 : i32, i32
  }
  func.func @transform_6(%arg0: i32) -> (i32, i32, i32) {
    %c0_i32 = arith.constant 0 : i32
    %c0_i32_0 = arith.constant 0 : i32
    %c0_i32_1 = arith.constant 0 : i32
    %c0_i32_2 = arith.constant 0 : i32
    return %c0_i32, %c0_i32_0, %c0_i32_1 : i32, i32, i32
  }
  func.func @transform_7(%arg0: i32) -> (i32, i32) {
    %c0_i32 = arith.constant 0 : i32
    %c0_i32_0 = arith.constant 0 : i32
    %c0_i32_1 = arith.constant 0 : i32
    return %c0_i32, %c0_i32_0 : i32, i32
  }
  func.func @transform_8(%arg0: i32) -> (i32, i32, i32) {
    %c0_i32 = arith.constant 0 : i32
    %c0_i32_0 = arith.constant 0 : i32
    %c0_i32_1 = arith.constant 0 : i32
    return %arg0, %c0_i32, %c0_i32_0 : i32, i32, i32
  }
  func.func @transform_9(%arg0: i32) -> (i32, i32, i32) {
    %c0_i32 = arith.constant 0 : i32
    %c0_i32_0 = arith.constant 0 : i32
    %c0_i32_1 = arith.constant 0 : i32
    return %arg0, %c0_i32, %c0_i32_0 : i32, i32, i32
  }
}

</mosaic_0001>

<llo_original>
// kernel: affine_flow_step.1
$region0: #{affine_flow_step.1}
  #allocation0 [shape = 'u32[]', space=smem, size = 0x4, offset = 0x4, fixed_abs, tag = 'smem constant byte address 0x4 - core index']
  #allocation1 [shape = 'u32[144,128]{1,0:T(1,128)}', space=vmem, size = 0x12000, scoped, tag = 'internal scratch']
  #allocation2 [shape = 'f32[8,512]{1,0:T(8,128)}', space=vmem, size = 0x4000, scoped, tag = 'scratch operand']
  #allocation3 [shape = 'f32[32,512]{1,0:T(8,128)}', space=vmem, size = 0x10000, scoped, tag = 'scratch operand']
  %s0 = inlined_call_operand.vmem [shape: f32[2,4,256], index: 0, kind: input, shape index: {}]
  %s1 = inlined_call_operand.vmem [shape: f32[9,256], index: 1, kind: input, shape index: {}]
  %s2 = inlined_call_operand.vmem [shape: f32[9,32,8], index: 2, kind: input, shape index: {}]
  %s3 = inlined_call_operand.vmem [shape: f32[32,1], index: 3, kind: input, shape index: {}]
  %s4 = inlined_call_operand.vmem [shape: f32[32,32], index: 4, kind: input, shape index: {}]
  %s5 = inlined_call_operand.vmem [shape: f32[32,1], index: 5, kind: input, shape index: {}]
  %s6 = inlined_call_operand.vmem [shape: f32[9,8,32], index: 6, kind: input, shape index: {}]
  %s7 = inlined_call_operand.vmem [shape: f32[8,1], index: 7, kind: input, shape index: {}]
  %s8 = inlined_call_operand.vmem [shape: f32[2,4,256], index: 8, kind: output, shape index: {0}]
  %s9 = inlined_call_operand.vmem [shape: f32[2,1,128], index: 9, kind: output, shape index: {1}]
  %10 = xla_tuple %s8, %s9
  %s11 = sld [smem:[#allocation0]]
  $region73: #{affine_flow_step.1} parent=0
    _
  %s13 = ssub.s32 1, %s11
  %s14 = scalar_select 0, %s13, %s11
  loop: start=0, step=1, limit=4
  $region2: #{affine_flow_step.1} parent=0 // loop_pre_header
    _
  $region3: #{affine_flow_step.1} parent=0 // loop_header
    %s16 = sphi 0, %s20
    %p17 = scmp.ge.s32.totalorder %s16, 4
    %s26 = sphi 0, %s28
    %s29 = sphi 0, %s26
    %s30 = sphi 0, %s29
    %s46 = sphi 0, %s30
    %s50 = sphi 0, %s50
    %s52 = sphi 0, %s50
    %s53 = sphi 0, %s52
    %s67 = sphi 0, %s53
    %s71 = sphi 0, %s71
    %s73 = sphi 0, %s71
    %s74 = sphi 0, %s73
    %s88 = sphi 0, %s74
    %s92 = sphi 0, %s92
    %s94 = sphi 0, %s92
    %s95 = sphi 0, %s94
    %s109 = sphi 0, %s95
    %s113 = sphi 0, %s113
    %s115 = sphi 0, %s113
    %s116 = sphi 0, %s115
    %s130 = sphi 0, %s116
    %s134 = sphi 0, %s134
    %s136 = sphi 0, %s134
    %s137 = sphi 0, %s136
    %s151 = sphi 0, %s137
    %s155 = sphi 0, %s155
    %s157 = sphi 0, %s155
    %s158 = sphi 0, %s157
    %s172 = sphi 0, %s158
    %s176 = sphi 0, %s176
    %s178 = sphi 0, %s176
    %s179 = sphi 0, %s178
    %s193 = sphi 0, %s179
    %s199 = sphi 0, %s201
    %s202 = sphi 0, %s199
    %s203 = sphi 0, %s202
    %s219 = sphi 0, %s203
    %s225 = sphi 0, %s227
    %s228 = sphi 0, %s225
    %s229 = sphi 0, %s228
    %s245 = sphi 0, %s229
  $region4: #{affine_flow_step.1} parent=0 // loop_header_branch
    %19 = sbr.rel (%p17) target = $region8
  $region5: #{affine_flow_step.1} parent=0 // loop_body
    %s21 = ssub.s32 %s16, 1
    %s22 = ssub.s32 %s16, 2
    %s23 = sadd.s32 %s16, 1
    %s24 = ssub.s32 %s16, %s23
    %p25 = scmp.eq.s32.totalorder %s24, 0
    %s27 = sadd.s32 %s26, 1
    %s28 = scalar_select %p25, %s26, %s27
    %p31 = pneg %p25
    %p32 = scmp.eq.s32.totalorder %s16, 1
    %p33 = por %p31, %p32
    %p34 = scmp.ne.s32.totalorder %s26, %s29
    %p35 = scmp.eq.s32.totalorder %s16, 0
    %p36 = por %p34, %p35
    %p37 = scmp.ne.s32.totalorder %s26, %s29
    %p38 = scmp.eq.s32.totalorder %s21, 1
    %p39 = por %p37, %p38
    %p40 = scmp.ne.s32.totalorder %s29, %s30
    %p41 = scmp.eq.s32.totalorder %s21, 0
    %p42 = por %p40, %p41
    %p43 = scmp.ne.s32.totalorder %s29, %s30
    %p44 = scmp.eq.s32.totalorder %s22, 1
    %p45 = por %p43, %p44
    %p47 = scmp.ne.s32.totalorder %s30, %s46
    %p48 = scmp.eq.s32.totalorder %s22, 0
    %p49 = por %p47, %p48
    %s51 = sadd.s32 %s50, 1
    %p54 = scmp.eq.s32.totalorder %s16, 1
    %p55 = scmp.ne.s32.totalorder %s50, %s52
    %p56 = scmp.eq.s32.totalorder %s16, 0
    %p57 = por %p55, %p56
    %p58 = scmp.ne.s32.totalorder %s50, %s52
    %p59 = scmp.eq.s32.totalorder %s21, 1
    %p60 = por %p58, %p59
    %p61 = scmp.ne.s32.totalorder %s52, %s53
    %p62 = scmp.eq.s32.totalorder %s21, 0
    %p63 = por %p61, %p62
    %p64 = scmp.ne.s32.totalorder %s52, %s53
    %p65 = scmp.eq.s32.totalorder %s22, 1
    %p66 = por %p64, %p65
    %p68 = scmp.ne.s32.totalorder %s53, %s67
    %p69 = scmp.eq.s32.totalorder %s22, 0
    %p70 = por %p68, %p69
    %s72 = sadd.s32 %s71, 1
    %p75 = scmp.eq.s32.totalorder %s16, 1
    %p76 = scmp.ne.s32.totalorder %s71, %s73
    %p77 = scmp.eq.s32.totalorder %s16, 0
    %p78 = por %p76, %p77
    %p79 = scmp.ne.s32.totalorder %s71, %s73
    %p80 = scmp.eq.s32.totalorder %s21, 1
    %p81 = por %p79, %p80
    %p82 = scmp.ne.s32.totalorder %s73, %s74
    %p83 = scmp.eq.s32.totalorder %s21, 0
    %p84 = por %p82, %p83
    %p85 = scmp.ne.s32.totalorder %s73, %s74
    %p86 = scmp.eq.s32.totalorder %s22, 1
    %p87 = por %p85, %p86
    %p89 = scmp.ne.s32.totalorder %s74, %s88
    %p90 = scmp.eq.s32.totalorder %s22, 0
    %p91 = por %p89, %p90
    %s93 = sadd.s32 %s92, 1
    %p96 = scmp.eq.s32.totalorder %s16, 1
    %p97 = scmp.ne.s32.totalorder %s92, %s94
    %p98 = scmp.eq.s32.totalorder %s16, 0
    %p99 = por %p97, %p98
    %p100 = scmp.ne.s32.totalorder %s92, %s94
    %p101 = scmp.eq.s32.totalorder %s21, 1
    %p102 = por %p100, %p101
    %p103 = scmp.ne.s32.totalorder %s94, %s95
    %p104 = scmp.eq.s32.totalorder %s21, 0
    %p105 = por %p103, %p104
    %p106 = scmp.ne.s32.totalorder %s94, %s95
    %p107 = scmp.eq.s32.totalorder %s22, 1
    %p108 = por %p106, %p107
    %p110 = scmp.ne.s32.totalorder %s95, %s109
    %p111 = scmp.eq.s32.totalorder %s22, 0
    %p112 = por %p110, %p111
    %s114 = sadd.s32 %s113, 1
    %p117 = scmp.eq.s32.totalorder %s16, 1
    %p118 = scmp.ne.s32.totalorder %s113, %s115
    %p119 = scmp.eq.s32.totalorder %s16, 0
    %p120 = por %p118, %p119
    %p121 = scmp.ne.s32.totalorder %s113, %s115
    %p122 = scmp.eq.s32.totalorder %s21, 1
    %p123 = por %p121, %p122
    %p124 = scmp.ne.s32.totalorder %s115, %s116
    %p125 = scmp.eq.s32.totalorder %s21, 0
    %p126 = por %p124, %p125
    %p127 = scmp.ne.s32.totalorder %s115, %s116
    %p128 = scmp.eq.s32.totalorder %s22, 1
    %p129 = por %p127, %p128
    %p131 = scmp.ne.s32.totalorder %s116, %s130
    %p132 = scmp.eq.s32.totalorder %s22, 0
    %p133 = por %p131, %p132
    %s135 = sadd.s32 %s134, 1
    %p138 = scmp.eq.s32.totalorder %s16, 1
    %p139 = scmp.ne.s32.totalorder %s134, %s136
    %p140 = scmp.eq.s32.totalorder %s16, 0
    %p141 = por %p139, %p140
    %p142 = scmp.ne.s32.totalorder %s134, %s136
    %p143 = scmp.eq.s32.totalorder %s21, 1
    %p144 = por %p142, %p143
    %p145 = scmp.ne.s32.totalorder %s136, %s137
    %p146 = scmp.eq.s32.totalorder %s21, 0
    %p147 = por %p145, %p146
    %p148 = scmp.ne.s32.totalorder %s136, %s137
    %p149 = scmp.eq.s32.totalorder %s22, 1
    %p150 = por %p148, %p149
    %p152 = scmp.ne.s32.totalorder %s137, %s151
    %p153 = scmp.eq.s32.totalorder %s22, 0
    %p154 = por %p152, %p153
    %s156 = sadd.s32 %s155, 1
    %p159 = scmp.eq.s32.totalorder %s16, 1
    %p160 = scmp.ne.s32.totalorder %s155, %s157
    %p161 = scmp.eq.s32.totalorder %s16, 0
    %p162 = por %p160, %p161
    %p163 = scmp.ne.s32.totalorder %s155, %s157
    %p164 = scmp.eq.s32.totalorder %s21, 1
    %p165 = por %p163, %p164
    %p166 = scmp.ne.s32.totalorder %s157, %s158
    %p167 = scmp.eq.s32.totalorder %s21, 0
    %p168 = por %p166, %p167
    %p169 = scmp.ne.s32.totalorder %s157, %s158
    %p170 = scmp.eq.s32.totalorder %s22, 1
    %p171 = por %p169, %p170
    %p173 = scmp.ne.s32.totalorder %s158, %s172
    %p174 = scmp.eq.s32.totalorder %s22, 0
    %p175 = por %p173, %p174
    %s177 = sadd.s32 %s176, 1
    %p180 = scmp.eq.s32.totalorder %s16, 1
    %p181 = scmp.ne.s32.totalorder %s176, %s178
    %p182 = scmp.eq.s32.totalorder %s16, 0
    %p183 = por %p181, %p182
    %p184 = scmp.ne.s32.totalorder %s176, %s178
    %p185 = scmp.eq.s32.totalorder %s21, 1
    %p186 = por %p184, %p185
    %p187 = scmp.ne.s32.totalorder %s178, %s179
    %p188 = scmp.eq.s32.totalorder %s21, 0
    %p189 = por %p187, %p188
    %p190 = scmp.ne.s32.totalorder %s178, %s179
    %p191 = scmp.eq.s32.totalorder %s22, 1
    %p192 = por %p190, %p191
    %p194 = scmp.ne.s32.totalorder %s179, %s193
    %p195 = scmp.eq.s32.totalorder %s22, 0
    %p196 = por %p194, %p195
    %s197 = ssub.s32 %s16, %s23
    %p198 = scmp.eq.s32.totalorder %s197, 0
    %s200 = sadd.s32 %s199, 1
    %s201 = scalar_select %p198, %s199, %s200
    %p204 = pneg %p198
    %p205 = scmp.eq.s32.totalorder %s16, 1
    %p206 = por %p204, %p205
    %p207 = scmp.ne.s32.totalorder %s199, %s202
    %p208 = scmp.eq.s32.totalorder %s16, 0
    %p209 = por %p207, %p208
    %p210 = scmp.ne.s32.totalorder %s199, %s202
    %p211 = scmp.eq.s32.totalorder %s21, 1
    %p212 = por %p210, %p211
    %p213 = scmp.ne.s32.totalorder %s202, %s203
    %p214 = scmp.eq.s32.totalorder %s21, 0
    %p215 = por %p213, %p214
    %p216 = scmp.ne.s32.totalorder %s202, %s203
    %p217 = scmp.eq.s32.totalorder %s22, 1
    %p218 = por %p216, %p217
    %p220 = scmp.ne.s32.totalorder %s203, %s219
    %p221 = scmp.eq.s32.totalorder %s22, 0
    %p222 = por %p220, %p221
    %s223 = ssub.s32 %s16, %s23
    %p224 = scmp.eq.s32.totalorder %s223, 0
    %s226 = sadd.s32 %s225, 1
    %s227 = scalar_select %p224, %s225, %s226
    %p230 = pneg %p224
    %p231 = scmp.eq.s32.totalorder %s16, 1
    %p232 = por %p230, %p231
    %p233 = scmp.ne.s32.totalorder %s225, %s228
    %p234 = scmp.eq.s32.totalorder %s16, 0
    %p235 = por %p233, %p234
    %p236 = scmp.ne.s32.totalorder %s225, %s228
    %p237 = scmp.eq.s32.totalorder %s21, 1
    %p238 = por %p236, %p237
    %p239 = scmp.ne.s32.totalorder %s228, %s229
    %p240 = scmp.eq.s32.totalorder %s21, 0
    %p241 = por %p239, %p240
    %p242 = scmp.ne.s32.totalorder %s228, %s229
    %p243 = scmp.eq.s32.totalorder %s22, 1
    %p244 = por %p242, %p243
    %p246 = scmp.ne.s32.totalorder %s229, %s245
    %p247 = scmp.eq.s32.totalorder %s22, 0
    %p248 = por %p246, %p247
    %p249 = scmp.le.s32.totalorder 1, %s16
    %p250 = scmp.lt.s32.totalorder %s16, 3
    %p251 = pnand %p249, %p250
    %p252 = pneg %p251
    // Predicated region
    $region9: #{affine_flow_step.1} parent=5 // pred_check
      _
    $region10: #{affine_flow_step.1} parent=5 // pred_check_branch
      %254 = sbr.rel (%p251) target = $region12
    $region11: #{affine_flow_step.1} parent=5 // pred_region
      %s255 = ssub.s32 %s16, 1
      // Predicated region
      $region13: #{affine_flow_step.1} parent=11 // pred_check
        %p256 = pneg %p63
      $region14: #{affine_flow_step.1} parent=11 // pred_check_branch
        %258 = sbr.rel (%p256) target = $region16
      $region15: #{affine_flow_step.1} parent=11 // pred_region
        _
      $region16: #{affine_flow_step.1} parent=11 // pred_fallthru
        _
      // Predicated region
      $region17: #{affine_flow_step.1} parent=11 // pred_check
        %p259 = pneg %p84
      $region18: #{affine_flow_step.1} parent=11 // pred_check_branch
        %261 = sbr.rel (%p259) target = $region20
      $region19: #{affine_flow_step.1} parent=11 // pred_region
        _
      $region20: #{affine_flow_step.1} parent=11 // pred_fallthru
        _
      // Predicated region
      $region21: #{affine_flow_step.1} parent=11 // pred_check
        %p262 = pneg %p105
      $region22: #{affine_flow_step.1} parent=11 // pred_check_branch
        %264 = sbr.rel (%p262) target = $region24
      $region23: #{affine_flow_step.1} parent=11 // pred_region
        _
      $region24: #{affine_flow_step.1} parent=11 // pred_fallthru
        _
      // Predicated region
      $region25: #{affine_flow_step.1} parent=11 // pred_check
        %p265 = pneg %p126
      $region26: #{affine_flow_step.1} parent=11 // pred_check_branch
        %267 = sbr.rel (%p265) target = $region28
      $region27: #{affine_flow_step.1} parent=11 // pred_region
        _
      $region28: #{affine_flow_step.1} parent=11 // pred_fallthru
        _
      // Predicated region
      $region29: #{affine_flow_step.1} parent=11 // pred_check
        %p268 = pneg %p147
      $region30: #{affine_flow_step.1} parent=11 // pred_check_branch
        %270 = sbr.rel (%p268) target = $region32
      $region31: #{affine_flow_step.1} parent=11 // pred_region
        _
      $region32: #{affine_flow_step.1} parent=11 // pred_fallthru
        _
      // Predicated region
      $region33: #{affine_flow_step.1} parent=11 // pred_check
        %p271 = pneg %p168
      $region34: #{affine_flow_step.1} parent=11 // pred_check_branch
        %273 = sbr.rel (%p271) target = $region36
      $region35: #{affine_flow_step.1} parent=11 // pred_region
        _
      $region36: #{affine_flow_step.1} parent=11 // pred_fallthru
        _
      // Predicated region
      $region37: #{affine_flow_step.1} parent=11 // pred_check
        %p274 = pneg %p189
      $region38: #{affine_flow_step.1} parent=11 // pred_check_branch
        %276 = sbr.rel (%p274) target = $region40
      $region39: #{affine_flow_step.1} parent=11 // pred_region
        _
      $region40: #{affine_flow_step.1} parent=11 // pred_fallthru
        _
    $region12: #{affine_flow_step.1} parent=5 // pred_fallthru
      _
    %p277 = scmp.lt.s32.totalorder %s16, 2
    // Predicated region
    $region41: #{affine_flow_step.1} parent=5 // pred_check
      %p278 = pneg %p277
    $region42: #{affine_flow_step.1} parent=5 // pred_check_branch
      %280 = sbr.rel (%p278) target = $region44
    $region43: #{affine_flow_step.1} parent=5 // pred_region
      // Predicated region
      $region45: #{affine_flow_step.1} parent=43 // pred_check
        %p281 = pneg %p36
      $region46: #{affine_flow_step.1} parent=43 // pred_check_branch
        %283 = sbr.rel (%p281) target = $region48
      $region47: #{affine_flow_step.1} parent=43 // pred_region
        %p284 = scmp.lt.s32.totalorder %s16, 1
        %s285 = scalar_select %p284, %s16, 1
        %s286 = smul.addr %s285, 2
        %s287 = smul.addr %s286, 4
        %s288 = scalar_lea.vmem %s0, %s287
      $region48: #{affine_flow_step.1} parent=43 // pred_fallthru
        _
    $region44: #{affine_flow_step.1} parent=5 // pred_fallthru
      _
    %p289 = scmp.le.s32.totalorder 1, %s16
    %p290 = scmp.lt.s32.totalorder %s16, 3
    %p291 = pnand %p289, %p290
    %p292 = pneg %p291
    // Predicated region
    $region49: #{affine_flow_step.1} parent=5 // pred_check
      _
    $region50: #{affine_flow_step.1} parent=5 // pred_check_branch
      %294 = sbr.rel (%p291) target = $region52
    $region51: #{affine_flow_step.1} parent=5 // pred_region
      %s295 = ssub.s32 %s16, 1
      %p296 = scmp.lt.s32.totalorder %s21, 1
      %s297 = scalar_select %p296, %s21, 1
      %s298 = smul.addr %s297, 2
      %s299 = smul.addr %s298, 4
      %s300 = scalar_lea.vmem %s0, %s299
      %p301 = pneg %p42
      %p302 = pneg %p39
      %p303 = pneg %p63
      %p304 = pneg %p60
      %p305 = pneg %p84
      %p306 = pneg %p81
      %p307 = pneg %p105
      %p308 = pneg %p102
      %p309 = pneg %p126
      %p310 = pneg %p123
      %p311 = pneg %p147
      %p312 = pneg %p144
      %p313 = pneg %p168
      %p314 = pneg %p165
      %p315 = pneg %p189
      %p316 = pneg %p186
      %p317 = pneg %p215
      %p318 = pneg %p212
      %p319 = scmp.lt.s32.totalorder %s21, 1
      %s320 = scalar_select %p319, %s21, 1
      %s321 = smul.addr %s320, 2
      %s322 = smul.addr %s321, 4
      %s323 = scalar_lea.vmem %s8, %s322
      %p324 = pneg %p241
      %p325 = pneg %p238
      %p326 = scmp.lt.s32.totalorder %s21, 1
      %s327 = scalar_select %p326, %s21, 1
      %s328 = scalar_lea.vmem %s9, %s327
      %p329 = scmp.lt.s32.totalorder %s21, 1
      %s330 = scalar_select %p329, %s21, 1
      %s331 = smul.addr %s330, 2
      %s332 = smul.addr %s331, 4
      %s333 = scalar_lea.vmem %s0, %s332
      %p334 = scmp.lt.s32.totalorder %s21, 1
      %s335 = scalar_select %p334, %s21, 1
      %s336 = smul.addr %s335, 2
      %s337 = smul.addr %s336, 4
      %s338 = scalar_lea.vmem %s8, %s337
      %p339 = scmp.lt.s32.totalorder %s21, 1
      %s340 = scalar_select %p339, %s21, 1
      %s341 = scalar_lea.vmem %s9, %s340
      %342 = vst [vmem:[#allocation2] sm:$0xff] 0.0
      %343 = vst [vmem:[#allocation2 + $0x8] sm:$0xff] 0.0
      %344 = vst [vmem:[#allocation2 + $0x10] sm:$0xff] 0.0
      %345 = vst [vmem:[#allocation2 + $0x18] sm:$0xff] 0.0
      %346 = vst [vmem:[#allocation3] sm:$0xff] 0.0
      %347 = vst [vmem:[#allocation3 + $0x8] sm:$0xff] 0.0
      %348 = vst [vmem:[#allocation3 + $0x10] sm:$0xff] 0.0
      %349 = vst [vmem:[#allocation3 + $0x18] sm:$0xff] 0.0
      %350 = vst [vmem:[#allocation3 + $0x20] sm:$0xff] 0.0
      %351 = vst [vmem:[#allocation3 + $0x28] sm:$0xff] 0.0
      %352 = vst [vmem:[#allocation3 + $0x30] sm:$0xff] 0.0
      %353 = vst [vmem:[#allocation3 + $0x38] sm:$0xff] 0.0
      %354 = vst [vmem:[#allocation3 + $0x40] sm:$0xff] 0.0
      %355 = vst [vmem:[#allocation3 + $0x48] sm:$0xff] 0.0
      %356 = vst [vmem:[#allocation3 + $0x50] sm:$0xff] 0.0
      %357 = vst [vmem:[#allocation3 + $0x58] sm:$0xff] 0.0
      %358 = vst [vmem:[#allocation3 + $0x60] sm:$0xff] 0.0
      %359 = vst [vmem:[#allocation3 + $0x68] sm:$0xff] 0.0
      %360 = vst [vmem:[#allocation3 + $0x70] sm:$0xff] 0.0
      %361 = vst [vmem:[#allocation3 + $0x78] sm:$0xff] 0.0
      %v362 = vld [vmem:[%s333] sm:$0x33]
      %v363 = vld [vmem:[%s333] sm:$0xcc]
      %v365 = vcombine.high %v362, %v362
      %367 = vst [vmem:[#allocation2 + $0x8] sm:$0x3] %v362
      %368 = vst [vmem:[#allocation2 + $0x10] sm:$0x3] %v365
      %v369 = vld [vmem:[#allocation2] sm:$0xff]
      %v370 = vld [vmem:[#allocation2 + $0x8] sm:$0xff]
      %v371 = vld [vmem:[#allocation2 + $0x10] sm:$0xff]
      %v372 = vld [vmem:[%s1] ss:$8 sm:$0x3]
      %v374 = vlaneseq
      %v375 = vshrl.u32 %v374, 7
      %v376 = vsub.s32 0, %v375
      %v377 = vrot.slane %v372, %v376
      %v378 = vlaneseq
      %v379 = vshrl.u32 %v378, 7
      %v380 = vsub.s32 1, %v379
      %v381 = vrot.slane %v372, %v380
      %382 = vrot.lane.b32.xlu0 %v377, 111
      %v383 = vpop.permute.xlu0 %382
      %384 = vrot.lane.b32.xlu0 %v381, 111
      %v385 = vpop.permute.xlu0 %384
      %vm386 = vcmask 908288
      %v387 = vsel %vm386, %v383, %v385
      %v391 = vmul.f32 %v369, %v383
      %v392 = vmul.f32 %v370, %v387
      %v393 = vmul.f32 %v371, %v385
      %v394 = vld [vmem:[%s2] sm:$0xff]
      %v395 = vld [vmem:[%s2 + $0x8] sm:$0xff]
      %v396 = vld [vmem:[%s2 + $0x10] sm:$0xff]
      %v397 = vld [vmem:[%s2 + $0x18] sm:$0xff]
      %s398 = scalar_lea.vmem %s1, 1
      %v399 = vld [vmem:[%s398] ss:$8 sm:$0x3]
      %v401 = vlaneseq
      %v402 = vshrl.u32 %v401, 7
      %v403 = vsub.s32 0, %v402
      %v404 = vrot.slane %v399, %v403
      %v405 = vlaneseq
      %v406 = vshrl.u32 %v405, 7
      %v407 = vsub.s32 1, %v406
      %v408 = vrot.slane %v399, %v407
      %409 = vrot.lane.b32.xlu0 %v404, 112
      %v410 = vpop.permute.xlu0 %409
      %411 = vrot.lane.b32.xlu0 %v408, 112
      %v412 = vpop.permute.xlu0 %411
      %vm413 = vcmask 916480
      %v414 = vsel %vm413, %v410, %v412
      %v418 = vmul.f32 %v369, %v410
      %v419 = vmul.f32 %v370, %v414
      %v420 = vmul.f32 %v371, %v412
      %s421 = scalar_lea.vmem %s2, 32
      %v422 = vld [vmem:[%s421] sm:$0xff]
      %v423 = vld [vmem:[%s421 + $0x8] sm:$0xff]
      %v424 = vld [vmem:[%s421 + $0x10] sm:$0xff]
      %v425 = vld [vmem:[%s421 + $0x18] sm:$0xff]
      %429 = vrot.lane.b32.xlu0 %v418, 16
      %v430 = vpop.permute.xlu0 %429
      %431 = vrot.lane.b32.xlu0 %v419, 16
      %v432 = vpop.permute.xlu0 %431
      %433 = vrot.lane.b32.xlu0 %v420, 16
      %v434 = vpop.permute.xlu0 %433
      %vm435 = vcmask 130048
      %v436 = vsel %vm435, %v430, %v432
      %v437 = vsel %vm435, %v432, %v434
      %vm440 = vcmask 64512
      %v442 = vsel %vm440, %v422, 0
      %v445 = vsel %vm440, %v423, 0
      %v448 = vsel %vm440, %v424, 0
      %v451 = vsel %vm440, %v425, 0
      %453 = vmatprep.subr.mxu0 %v437
      %454 = vmatpush1.msra.mxu0 %v436
      %455 = vmatprep.subr.mxu0 0.0
      %456 = vmatpush1.msra.mxu0 0.0
      %457 = vmatprep.subr.mxu0 0.0
      %458 = vmatpush1.msra.mxu0 0.0
      %459 = vmatprep.subr.mxu0 0.0
      %460 = vmatpush1.msra.mxu0 0.0
      %461 = vmatprep.subr.mxu0 0.0
      %462 = vmatpush1.msra.mxu0 0.0
      %463 = vmatprep.subr.mxu0 0.0
      %464 = vmatpush1.msra.mxu0 0.0
      %465 = vmatprep.subr.mxu0 0.0
      %466 = vmatpush1.msra.mxu0 0.0
      %467 = vmatprep.subr.mxu0 0.0
      %468 = vmatpush1.msra.mxu0 0.0
      %469 = vmatprep.subr.mxu0 0.0
      %470 = vmatpush1.msra.mxu0 0.0
      %471 = vmatprep.subr.mxu0 0.0
      %472 = vmatpush1.msra.mxu0 0.0
      %473 = vmatprep.subr.mxu0 0.0
      %474 = vmatpush1.msra.mxu0 0.0
      %475 = vmatprep.subr.mxu0 0.0
      %476 = vmatpush1.msra.mxu0 0.0
      %477 = vmatprep.subr.mxu0 0.0
      %478 = vmatpush1.msra.mxu0 0.0
      %479 = vmatprep.subr.mxu0 0.0
      %480 = vmatpush1.msra.mxu0 0.0
      %481 = vmatprep.subr.mxu0 0.0
      %482 = vmatpush1.msra.mxu0 0.0
      %483 = vmatprep.subr.mxu0 0.0
      %484 = vmatpush1.msra.mxu0 0.0
      %485 = vmatprep.subr.mxu0 0.0
      %486 = vmatpush1.msra.mxu0 0.0
      %487 = vmatprep.subr.mxu0 0.0
      %488 = vmatpush1.msra.mxu0 0.0
      %489 = vmatprep.subr.mxu0 0.0
      %490 = vmatpush1.msra.mxu0 0.0
      %491 = vmatprep.subr.mxu0 0.0
      %492 = vmatpush1.msra.mxu0 0.0
      %493 = vmatprep.subr.mxu0 0.0
      %494 = vmatpush1.msra.mxu0 0.0
      %495 = vmatprep.subr.mxu0 0.0
      %496 = vmatpush1.msra.mxu0 0.0
      %497 = vmatprep.subr.mxu0 0.0
      %498 = vmatpush1.msra.mxu0 0.0
      %499 = vmatprep.subr.mxu0 0.0
      %500 = vmatpush1.msra.mxu0 0.0
      %501 = vmatprep.subr.mxu0 0.0
      %502 = vmatpush1.msra.mxu0 0.0
      %503 = vmatprep.subr.mxu0 0.0
      %504 = vmatpush1.msra.mxu0 0.0
      %505 = vmatprep.subr.mxu0 0.0
      %506 = vmatpush1.msra.mxu0 0.0
      %507 = vmatprep.subr.mxu0 0.0
      %508 = vmatpush1.msra.mxu0 0.0
      %509 = vmatprep.subr.mxu0 0.0
      %510 = vmatpush1.msra.mxu0 0.0
      %511 = vmatprep.subr.mxu0 0.0
      %512 = vmatpush1.msra.mxu0 0.0
      %513 = vmatprep.subr.mxu0 0.0
      %514 = vmatpush1.msra.mxu0 0.0
      %515 = vmatprep.subr.mxu0 0.0
      %516 = vmatpush1.msra.mxu0 0.0
      %517 = vmatprep.mubr.f32.mxu0 0.0
      %518 = vmatmul.mubr.f32.gmra.mrb[0].mxu0 %v442
      %v519 = vpop.f32.mrb[0].mxu0
      %v520 = vadd.f32 0.0, %v519
      %v521 = vpop.f32.mrb[0].mxu0
      %v522 = vadd.f32 0.0, %v521
      %523 = vmatprep.mubr.f32.mxu0 0.0
      %524 = vmatmul.mubr.f32.gmra.mrb[0].mxu0 %v445
      %v525 = vpop.f32.mrb[0].mxu0
      %v526 = vadd.f32 0.0, %v525
      %v527 = vpop.f32.mrb[0].mxu0
      %v528 = vadd.f32 0.0, %v527
      %529 = vmatprep.mubr.f32.mxu0 0.0
      %530 = vmatmul.mubr.f32.gmra.mrb[0].mxu0 %v448
      %v531 = vpop.f32.mrb[0].mxu0
      %v532 = vadd.f32 0.0, %v531
      %v533 = vpop.f32.mrb[0].mxu0
      %v534 = vadd.f32 0.0, %v533
      %535 = vmatprep.mubr.f32.mxu0 0.0
      %536 = vmatmul.mubr.f32.gmra.mrb[0].mxu0 %v451
      %v537 = vpop.f32.mrb[0].mxu0
      %v538 = vadd.f32 0.0, %v537
      %v539 = vpop.f32.mrb[0].mxu0
      %v540 = vadd.f32 0.0, %v539
      %541 = vdwg.mxu0
      %545 = vrot.lane.b32.xlu0 %v391, 17
      %v546 = vpop.permute.xlu0 %545
      %547 = vrot.lane.b32.xlu0 %v392, 17
      %v548 = vpop.permute.xlu0 %547
      %549 = vrot.lane.b32.xlu0 %v393, 17
      %v550 = vpop.permute.xlu0 %549
      %vm551 = vcmask 138240
      %v552 = vsel %vm551, %v546, %v548
      %v553 = vsel %vm551, %v548, %v550
      %v557 = vsel %vm440, %v394, 0
      %v560 = vsel %vm440, %v395, 0
      %v563 = vsel %vm440, %v396, 0
      %v566 = vsel %vm440, %v397, 0
      %568 = vmatprep.subr.mxu0 %v553
      %569 = vmatpush1.msra.mxu0 %v552
      %570 = vmatprep.subr.mxu0 0.0
      %571 = vmatpush1.msra.mxu0 0.0
      %572 = vmatprep.subr.mxu0 0.0
      %573 = vmatpush1.msra.mxu0 0.0
      %574 = vmatprep.subr.mxu0 0.0
      %575 = vmatpush1.msra.mxu0 0.0
      %576 = vmatprep.subr.mxu0 0.0
      %577 = vmatpush1.msra.mxu0 0.0
      %578 = vmatprep.subr.mxu0 0.0
      %579 = vmatpush1.msra.mxu0 0.0
      %580 = vmatprep.subr.mxu0 0.0
      %581 = vmatpush1.msra.mxu0 0.0
      %582 = vmatprep.subr.mxu0 0.0
      %583 = vmatpush1.msra.mxu0 0.0
      %584 = vmatprep.subr.mxu0 0.0
      %585 = vmatpush1.msra.mxu0 0.0
      %586 = vmatprep.subr.mxu0 0.0
      %587 = vmatpush1.msra.mxu0 0.0
      %588 = vmatprep.subr.mxu0 0.0
      %589 = vmatpush1.msra.mxu0 0.0
      %590 = vmatprep.subr.mxu0 0.0
      %591 = vmatpush1.msra.mxu0 0.0
      %592 = vmatprep.subr.mxu0 0.0
      %593 = vmatpush1.msra.mxu0 0.0
      %594 = vmatprep.subr.mxu0 0.0
      %595 = vmatpush1.msra.mxu0 0.0
      %596 = vmatprep.subr.mxu0 0.0
      %597 = vmatpush1.msra.mxu0 0.0
      %598 = vmatprep.subr.mxu0 0.0
      %599 = vmatpush1.msra.mxu0 0.0
      %600 = vmatprep.subr.mxu0 0.0
      %601 = vmatpush1.msra.mxu0 0.0
      %602 = vmatprep.subr.mxu0 0.0
      %603 = vmatpush1.msra.mxu0 0.0
      %604 = vmatprep.subr.mxu0 0.0
      %605 = vmatpush1.msra.mxu0 0.0
      %606 = vmatprep.subr.mxu0 0.0
      %607 = vmatpush1.msra.mxu0 0.0
      %608 = vmatprep.subr.mxu0 0.0
      %609 = vmatpush1.msra.mxu0 0.0
      %610 = vmatprep.subr.mxu0 0.0
      %611 = vmatpush1.msra.mxu0 0.0
      %612 = vmatprep.subr.mxu0 0.0
      %613 = vmatpush1.msra.mxu0 0.0
      %614 = vmatprep.subr.mxu0 0.0
      %615 = vmatpush1.msra.mxu0 0.0
      %616 = vmatprep.subr.mxu0 0.0
      %617 = vmatpush1.msra.mxu0 0.0
      %618 = vmatprep.subr.mxu0 0.0
      %619 = vmatpush1.msra.mxu0 0.0
      %620 = vmatprep.subr.mxu0 0.0
      %621 = vmatpush1.msra.mxu0 0.0
      %622 = vmatprep.subr.mxu0 0.0
      %623 = vmatpush1.msra.mxu0 0.0
      %624 = vmatprep.subr.mxu0 0.0
      %625 = vmatpush1.msra.mxu0 0.0
      %626 = vmatprep.subr.mxu0 0.0
      %627 = vmatpush1.msra.mxu0 0.0
      %628 = vmatprep.subr.mxu0 0.0
      %629 = vmatpush1.msra.mxu0 0.0
      %630 = vmatprep.subr.mxu0 0.0
      %631 = vmatpush1.msra.mxu0 0.0
      %632 = vmatprep.mubr.f32.mxu0 0.0
      %633 = vmatmul.mubr.f32.gmra.mrb[0].mxu0 %v557
      %v634 = vpop.f32.mrb[0].mxu0
      %v635 = vadd.f32 %v520, %v634
      %v636 = vpop.f32.mrb[0].mxu0
      %v637 = vadd.f32 %v522, %v636
      %638 = vmatprep.mubr.f32.mxu0 0.0
      %639 = vmatmul.mubr.f32.gmra.mrb[0].mxu0 %v560
      %v640 = vpop.f32.mrb[0].mxu0
      %v641 = vadd.f32 %v526, %v640
      %v642 = vpop.f32.mrb[0].mxu0
      %v643 = vadd.f32 %v528, %v642
      %644 = vmatprep.mubr.f32.mxu0 0.0
      %645 = vmatmul.mubr.f32.gmra.mrb[0].mxu0 %v563
      %v646 = vpop.f32.mrb[0].mxu0
      %v647 = vadd.f32 %v532, %v646
      %v648 = vpop.f32.mrb[0].mxu0
      %v649 = vadd.f32 %v534, %v648
      %650 = vmatprep.mubr.f32.mxu0 0.0
      %651 = vmatmul.mubr.f32.gmra.mrb[0].mxu0 %v566
      %v652 = vpop.f32.mrb[0].mxu0
      %v653 = vadd.f32 %v538, %v652
      %v654 = vpop.f32.mrb[0].mxu0
      %v655 = vadd.f32 %v540, %v654
      %656 = vdwg.mxu0
      %s657 = scalar_lea.vmem %s1, 2
      %v658 = vld [vmem:[%s657] ss:$8 sm:$0x3]
      %v660 = vlaneseq
      %v661 = vshrl.u32 %v660, 7
      %v662 = vsub.s32 0, %v661
      %v663 = vrot.slane %v658, %v662
      %v664 = vlaneseq
      %v665 = vshrl.u32 %v664, 7
      %v666 = vsub.s32 1, %v665
      %v667 = vrot.slane %v658, %v666
      %668 = vrot.lane.b32.xlu0 %v663, 113
      %v669 = vpop.permute.xlu0 %668
      %670 = vrot.lane.b32.xlu0 %v667, 113
      %v671 = vpop.permute.xlu0 %670
      %vm672 = vcmask 924672
      %v673 = vsel %vm672, %v669, %v671
      %v677 = vmul.f32 %v369, %v669
      %v678 = vmul.f32 %v370, %v673
      %v679 = vmul.f32 %v371, %v671
      %s680 = scalar_lea.vmem %s2, 64
      %v681 = vld [vmem:[%s680] sm:$0xff]
      %v682 = vld [vmem:[%s680 + $0x8] sm:$0xff]
      %v683 = vld [vmem:[%s680 + $0x10] sm:$0xff]
      %v684 = vld [vmem:[%s680 + $0x18] sm:$0xff]
      %688 = vrot.lane.b32.xlu0 %v677, 15
      %v689 = vpop.permute.xlu0 %688
      %690 = vrot.lane.b32.xlu0 %v678, 15
      %v691 = vpop.permute.xlu0 %690
      %692 = vrot.lane.b32.xlu0 %v679, 15
      %v693 = vpop.permute.xlu0 %692
      %vm694 = vcmask 121856
      %v695 = vsel %vm694, %v689, %v691
      %v696 = vsel %vm694, %v691, %v693
      %v700 = vsel %vm440, %v681, 0
      %v703 = vsel %vm440, %v682, 0
      %v706 = vsel %vm440, %v683, 0
      %v709 = vsel %vm440, %v684, 0
      %711 = vmatprep.subr.mxu0 %v696
      %712 = vmatpush1.msra.mxu0 %v695
      %713 = vmatprep.subr.mxu0 0.0
      %714 = vmatpush1.msra.mxu0 0.0
      %715 = vmatprep.subr.mxu0 0.0
      %716 = vmatpush1.msra.mxu0 0.0
      %717 = vmatprep.subr.mxu0 0.0
      %718 = vmatpush1.msra.mxu0 0.0
      %719 = vmatprep.subr.mxu0 0.0
      %720 = vmatpush1.msra.mxu0 0.0
      %721 = vmatprep.subr.mxu0 0.0
      %722 = vmatpush1.msra.mxu0 0.0
      %723 = vmatprep.subr.mxu0 0.0
      %724 = vmatpush1.msra.mxu0 0.0
      %725 = vmatprep.subr.mxu0 0.0
      %726 = vmatpush1.msra.mxu0 0.0
      %727 = vmatprep.subr.mxu0 0.0
      %728 = vmatpush1.msra.mxu0 0.0
      %729 = vmatprep.subr.mxu0 0.0
      %730 = vmatpush1.msra.mxu0 0.0
      %731 = vmatprep.subr.mxu0 0.0
      %732 = vmatpush1.msra.mxu0 0.0
      %733 = vmatprep.subr.mxu0 0.0
      %734 = vmatpush1.msra.mxu0 0.0
      %735 = vmatprep.subr.mxu0 0.0
      %736 = vmatpush1.msra.mxu0 0.0
      %737 = vmatprep.subr.mxu0 0.0
      %738 = vmatpush1.msra.mxu0 0.0
      %739 = vmatprep.subr.mxu0 0.0
      %740 = vmatpush1.msra.mxu0 0.0
      %741 = vmatprep.subr.mxu0 0.0
      %742 = vmatpush1.msra.mxu0 0.0
      %743 = vmatprep.subr.mxu0 0.0
      %744 = vmatpush1.msra.mxu0 0.0
      %745 = vmatprep.subr.mxu0 0.0
      %746 = vmatpush1.msra.mxu0 0.0
      %747 = vmatprep.subr.mxu0 0.0
      %748 = vmatpush1.msra.mxu0 0.0
      %749 = vmatprep.subr.mxu0 0.0
      %750 = vmatpush1.msra.mxu0 0.0
      %751 = vmatprep.subr.mxu0 0.0
      %752 = vmatpush1.msra.mxu0 0.0
      %753 = vmatprep.subr.mxu0 0.0
      %754 = vmatpush1.msra.mxu0 0.0
      %755 = vmatprep.subr.mxu0 0.0
      %756 = vmatpush1.msra.mxu0 0.0
      %757 = vmatprep.subr.mxu0 0.0
      %758 = vmatpush1.msra.mxu0 0.0
      %759 = vmatprep.subr.mxu0 0.0
      %760 = vmatpush1.msra.mxu0 0.0
      %761 = vmatprep.subr.mxu0 0.0
      %762 = vmatpush1.msra.mxu0 0.0
      %763 = vmatprep.subr.mxu0 0.0
      %764 = vmatpush1.msra.mxu0 0.0
      %765 = vmatprep.subr.mxu0 0.0
      %766 = vmatpush1.msra.mxu0 0.0
      %767 = vmatprep.subr.mxu0 0.0
      %768 = vmatpush1.msra.mxu0 0.0
      %769 = vmatprep.subr.mxu0 0.0
      %770 = vmatpush1.msra.mxu0 0.0
      %771 = vmatprep.subr.mxu0 0.0
      %772 = vmatpush1.msra.mxu0 0.0
      %773 = vmatprep.subr.mxu0 0.0
      %774 = vmatpush1.msra.mxu0 0.0
      %775 = vmatprep.mubr.f32.mxu0 0.0
      %776 = vmatmul.mubr.f32.gmra.mrb[0].mxu0 %v700
      %v777 = vpop.f32.mrb[0].mxu0
      %v778 = vadd.f32 0.0, %v777
      %v779 = vpop.f32.mrb[0].mxu0
      %v780 = vadd.f32 0.0, %v779
      %781 = vmatprep.mubr.f32.mxu0 0.0
      %782 = vmatmul.mubr.f32.gmra.mrb[0].mxu0 %v703
      %v783 = vpop.f32.mrb[0].mxu0
      %v784 = vadd.f32 0.0, %v783
      %v785 = vpop.f32.mrb[0].mxu0
      %v786 = vadd.f32 0.0, %v785
      %787 = vmatprep.mubr.f32.mxu0 0.0
      %788 = vmatmul.mubr.f32.gmra.mrb[0].mxu0 %v706
      %v789 = vpop.f32.mrb[0].mxu0
      %v790 = vadd.f32 0.0, %v789
      %v791 = vpop.f32.mrb[0].mxu0
      %v792 = vadd.f32 0.0, %v791
      %793 = vmatprep.mubr.f32.mxu0 0.0
      %794 = vmatmul.mubr.f32.gmra.mrb[0].mxu0 %v709
      %v795 = vpop.f32.mrb[0].mxu0
      %v796 = vadd.f32 0.0, %v795
      %v797 = vpop.f32.mrb[0].mxu0
      %v798 = vadd.f32 0.0, %v797
      %799 = vdwg.mxu0
      %v800 = vadd.f32 %v635, %v778
      %v801 = vadd.f32 %v637, %v780
      %v802 = vadd.f32 %v641, %v784
      %v803 = vadd.f32 %v643, %v786
      %v804 = vadd.f32 %v647, %v790
      %v805 = vadd.f32 %v649, %v792
      %v806 = vadd.f32 %v653, %v796
      %v807 = vadd.f32 %v655, %v798
      %s808 = scalar_lea.vmem %s1, 3
      %v809 = vld [vmem:[%s808] ss:$8 sm:$0x3]
      %v811 = vlaneseq
      %v812 = vshrl.u32 %v811, 7
      %v813 = vsub.s32 0, %v812
      %v814 = vrot.slane %v809, %v813
      %v815 = vlaneseq
      %v816 = vshrl.u32 %v815, 7
      %v817 = vsub.s32 1, %v816
      %v818 = vrot.slane %v809, %v817
      %819 = vrot.lane.b32.xlu0 %v814, 127
      %v820 = vpop.permute.xlu0 %819
      %821 = vrot.lane.b32.xlu0 %v818, 127
      %v822 = vpop.permute.xlu0 %821
      %vm823 = vcmask 1039360
      %v824 = vsel %vm823, %v820, %v822
      %v828 = vmul.f32 %v369, %v820
      %v829 = vmul.f32 %v370, %v824
      %v830 = vmul.f32 %v371, %v822
      %s831 = scalar_lea.vmem %s2, 96
      %v832 = vld [vmem:[%s831] sm:$0xff]
      %v833 = vld [vmem:[%s831 + $0x8] sm:$0xff]
      %v834 = vld [vmem:[%s831 + $0x10] sm:$0xff]
      %v835 = vld [vmem:[%s831 + $0x18] sm:$0xff]
      %839 = vrot.lane.b32.xlu0 %v828, 1
      %v840 = vpop.permute.xlu0 %839
      %841 = vrot.lane.b32.xlu0 %v829, 1
      %v842 = vpop.permute.xlu0 %841
      %843 = vrot.lane.b32.xlu0 %v830, 1
      %v844 = vpop.permute.xlu0 %843
      %vm845 = vcmask 7168
      %v846 = vsel %vm845, %v840, %v842
      %v847 = vsel %vm845, %v842, %v844
      %v851 = vsel %vm440, %v832, 0
      %v854 = vsel %vm440, %v833, 0
      %v857 = vsel %vm440, %v834, 0
      %v860 = vsel %vm440, %v835, 0
      %862 = vmatprep.subr.mxu0 %v847
      %863 = vmatpush1.msra.mxu0 %v846
      %864 = vmatprep.subr.mxu0 0.0
      %865 = vmatpush1.msra.mxu0 0.0
      %866 = vmatprep.subr.mxu0 0.0
      %867 = vmatpush1.msra.mxu0 0.0
      %868 = vmatprep.subr.mxu0 0.0
      %869 = vmatpush1.msra.mxu0 0.0
      %870 = vmatprep.subr.mxu0 0.0
      %871 = vmatpush1.msra.mxu0 0.0
      %872 = vmatprep.subr.mxu0 0.0
      %873 = vmatpush1.msra.mxu0 0.0
      %874 = vmatprep.subr.mxu0 0.0
      %875 = vmatpush1.msra.mxu0 0.0
      %876 = vmatprep.subr.mxu0 0.0
      %877 = vmatpush1.msra.mxu0 0.0
      %878 = vmatprep.subr.mxu0 0.0
      %879 = vmatpush1.msra.mxu0 0.0
      %880 = vmatprep.subr.mxu0 0.0
      %881 = vmatpush1.msra.mxu0 0.0
      %882 = vmatprep.subr.mxu0 0.0
      %883 = vmatpush1.msra.mxu0 0.0
      %884 = vmatprep.subr.mxu0 0.0
      %885 = vmatpush1.msra.mxu0 0.0
      %886 = vmatprep.subr.mxu0 0.0
      %887 = vmatpush1.msra.mxu0 0.0
      %888 = vmatprep.subr.mxu0 0.0
      %889 = vmatpush1.msra.mxu0 0.0
      %890 = vmatprep.subr.mxu0 0.0
      %891 = vmatpush1.msra.mxu0 0.0
      %892 = vmatprep.subr.mxu0 0.0
      %893 = vmatpush1.msra.mxu0 0.0
      %894 = vmatprep.subr.mxu0 0.0
      %895 = vmatpush1.msra.mxu0 0.0
      %896 = vmatprep.subr.mxu0 0.0
      %897 = vmatpush1.msra.mxu0 0.0
      %898 = vmatprep.subr.mxu0 0.0
      %899 = vmatpush1.msra.mxu0 0.0
      %900 = vmatprep.subr.mxu0 0.0
      %901 = vmatpush1.msra.mxu0 0.0
      %902 = vmatprep.subr.mxu0 0.0
      %903 = vmatpush1.msra.mxu0 0.0
      %904 = vmatprep.subr.mxu0 0.0
      %905 = vmatpush1.msra.mxu0 0.0
      %906 = vmatprep.subr.mxu0 0.0
      %907 = vmatpush1.msra.mxu0 0.0
      %908 = vmatprep.subr.mxu0 0.0
      %909 = vmatpush1.msra.mxu0 0.0
      %910 = vmatprep.subr.mxu0 0.0
      %911 = vmatpush1.msra.mxu0 0.0
      %912 = vmatprep.subr.mxu0 0.0
      %913 = vmatpush1.msra.mxu0 0.0
      %914 = vmatprep.subr.mxu0 0.0
      %915 = vmatpush1.msra.mxu0 0.0
      %916 = vmatprep.subr.mxu0 0.0
      %917 = vmatpush1.msra.mxu0 0.0
      %918 = vmatprep.subr.mxu0 0.0
      %919 = vmatpush1.msra.mxu0 0.0
      %920 = vmatprep.subr.mxu0 0.0
      %921 = vmatpush1.msra.mxu0 0.0
      %922 = vmatprep.subr.mxu0 0.0
      %923 = vmatpush1.msra.mxu0 0.0
      %924 = vmatprep.subr.mxu0 0.0
      %925 = vmatpush1.msra.mxu0 0.0
      %926 = vmatprep.mubr.f32.mxu0 0.0
      %927 = vmatmul.mubr.f32.gmra.mrb[0].mxu0 %v851
      %v928 = vpop.f32.mrb[0].mxu0
      %v929 = vadd.f32 0.0, %v928
      %v930 = vpop.f32.mrb[0].mxu0
      %v931 = vadd.f32 0.0, %v930
      %932 = vmatprep.mubr.f32.mxu0 0.0
      %933 = vmatmul.mubr.f32.gmra.mrb[0].mxu0 %v854
      %v934 = vpop.f32.mrb[0].mxu0
      %v935 = vadd.f32 0.0, %v934
      %v936 = vpop.f32.mrb[0].mxu0
      %v937 = vadd.f32 0.0, %v936
      %938 = vmatprep.mubr.f32.mxu0 0.0
      %939 = vmatmul.mubr.f32.gmra.mrb[0].mxu0 %v857
      %v940 = vpop.f32.mrb[0].mxu0
      %v941 = vadd.f32 0.0, %v940
      %v942 = vpop.f32.mrb[0].mxu0
      %v943 = vadd.f32 0.0, %v942
      %944 = vmatprep.mubr.f32.mxu0 0.0
      %945 = vmatmul.mubr.f32.gmra.mrb[0].mxu0 %v860
      %v946 = vpop.f32.mrb[0].mxu0
      %v947 = vadd.f32 0.0, %v946
      %v948 = vpop.f32.mrb[0].mxu0
      %v949 = vadd.f32 0.0, %v948
      %950 = vdwg.mxu0
      %v951 = vadd.f32 %v800, %v929
      %v952 = vadd.f32 %v801, %v931
      %v953 = vadd.f32 %v802, %v935
      %v954 = vadd.f32 %v803, %v937
      %v955 = vadd.f32 %v804, %v941
      %v956 = vadd.f32 %v805, %v943
      %v957 = vadd.f32 %v806, %v947
      %v958 = vadd.f32 %v807, %v949
      %s959 = scalar_lea.vmem %s1, 4
      %v960 = vld [vmem:[%s959] ss:$8 sm:$0x3]
      %v962 = vlaneseq
      %v963 = vshrl.u32 %v962, 7
      %v964 = vsub.s32 0, %v963
      %v965 = vrot.slane %v960, %v964
      %v966 = vlaneseq
      %v967 = vshrl.u32 %v966, 7
      %v968 = vsub.s32 1, %v967
      %v969 = vrot.slane %v960, %v968
      %v972 = vmul.f32 %v370, %v965
      %v973 = vmul.f32 %v371, %v969
      %s974 = scalar_lea.vmem %s2, 128
      %v975 = vld [vmem:[%s974] sm:$0xff]
      %v976 = vld [vmem:[%s974 + $0x8] sm:$0xff]
      %v977 = vld [vmem:[%s974 + $0x10] sm:$0xff]
      %v978 = vld [vmem:[%s974 + $0x18] sm:$0xff]
      %v980 = vsel %vm440, %v975, 0
      %v983 = vsel %vm440, %v976, 0
      %v986 = vsel %vm440, %v977, 0
      %v989 = vsel %vm440, %v978, 0
      %991 = vmatprep.subr.mxu0 %v973
      %992 = vmatpush1.msra.mxu0 %v972
      %993 = vmatprep.subr.mxu0 0.0
      %994 = vmatpush1.msra.mxu0 0.0
      %995 = vmatprep.subr.mxu0 0.0
      %996 = vmatpush1.msra.mxu0 0.0
      %997 = vmatprep.subr.mxu0 0.0
      %998 = vmatpush1.msra.mxu0 0.0
      %999 = vmatprep.subr.mxu0 0.0
      %1000 = vmatpush1.msra.mxu0 0.0
      %1001 = vmatprep.subr.mxu0 0.0
      %1002 = vmatpush1.msra.mxu0 0.0
      %1003 = vmatprep.subr.mxu0 0.0
      %1004 = vmatpush1.msra.mxu0 0.0
      %1005 = vmatprep.subr.mxu0 0.0
      %1006 = vmatpush1.msra.mxu0 0.0
      %1007 = vmatprep.subr.mxu0 0.0
      %1008 = vmatpush1.msra.mxu0 0.0
      %1009 = vmatprep.subr.mxu0 0.0
      %1010 = vmatpush1.msra.mxu0 0.0
      %1011 = vmatprep.subr.mxu0 0.0
      %1012 = vmatpush1.msra.mxu0 0.0
      %1013 = vmatprep.subr.mxu0 0.0
      %1014 = vmatpush1.msra.mxu0 0.0
      %1015 = vmatprep.subr.mxu0 0.0
      %1016 = vmatpush1.msra.mxu0 0.0
      %1017 = vmatprep.subr.mxu0 0.0
      %1018 = vmatpush1.msra.mxu0 0.0
      %1019 = vmatprep.subr.mxu0 0.0
      %1020 = vmatpush1.msra.mxu0 0.0
      %1021 = vmatprep.subr.mxu0 0.0
      %1022 = vmatpush1.msra.mxu0 0.0
      %1023 = vmatprep.subr.mxu0 0.0
      %1024 = vmatpush1.msra.mxu0 0.0
      %1025 = vmatprep.subr.mxu0 0.0
      %1026 = vmatpush1.msra.mxu0 0.0
      %1027 = vmatprep.subr.mxu0 0.0
      %1028 = vmatpush1.msra.mxu0 0.0
      %1029 = vmatprep.subr.mxu0 0.0
      %1030 = vmatpush1.msra.mxu0 0.0
      %1031 = vmatprep.subr.mxu0 0.0
      %1032 = vmatpush1.msra.mxu0 0.0
      %1033 = vmatprep.subr.mxu0 0.0
      %1034 = vmatpush1.msra.mxu0 0.0
      %1035 = vmatprep.subr.mxu0 0.0
      %1036 = vmatpush1.msra.mxu0 0.0
      %1037 = vmatprep.subr.mxu0 0.0
      %1038 = vmatpush1.msra.mxu0 0.0
      %1039 = vmatprep.subr.mxu0 0.0
      %1040 = vmatpush1.msra.mxu0 0.0
      %1041 = vmatprep.subr.mxu0 0.0
      %1042 = vmatpush1.msra.mxu0 0.0
      %1043 = vmatprep.subr.mxu0 0.0
      %1044 = vmatpush1.msra.mxu0 0.0
      %1045 = vmatprep.subr.mxu0 0.0
      %1046 = vmatpush1.msra.mxu0 0.0
      %1047 = vmatprep.subr.mxu0 0.0
      %1048 = vmatpush1.msra.mxu0 0.0
      %1049 = vmatprep.subr.mxu0 0.0
      %1050 = vmatpush1.msra.mxu0 0.0
      %1051 = vmatprep.subr.mxu0 0.0
      %1052 = vmatpush1.msra.mxu0 0.0
      %1053 = vmatprep.subr.mxu0 0.0
      %1054 = vmatpush1.msra.mxu0 0.0
      %1055 = vmatprep.mubr.f32.mxu0 0.0
      %1056 = vmatmul.mubr.f32.gmra.mrb[0].mxu0 %v980
      %v1057 = vpop.f32.mrb[0].mxu0
      %v1058 = vadd.f32 0.0, %v1057
      %v1059 = vpop.f32.mrb[0].mxu0
      %v1060 = vadd.f32 0.0, %v1059
      %1061 = vmatprep.mubr.f32.mxu0 0.0
      %1062 = vmatmul.mubr.f32.gmra.mrb[0].mxu0 %v983
      %v1063 = vpop.f32.mrb[0].mxu0
      %v1064 = vadd.f32 0.0, %v1063
      %v1065 = vpop.f32.mrb[0].mxu0
      %v1066 = vadd.f32 0.0, %v1065
      %1067 = vmatprep.mubr.f32.mxu0 0.0
      %1068 = vmatmul.mubr.f32.gmra.mrb[0].mxu0 %v986
      %v1069 = vpop.f32.mrb[0].mxu0
      %v1070 = vadd.f32 0.0, %v1069
      %v1071 = vpop.f32.mrb[0].mxu0
      %v1072 = vadd.f32 0.0, %v1071
      %1073 = vmatprep.mubr.f32.mxu0 0.0
      %1074 = vmatmul.mubr.f32.gmra.mrb[0].mxu0 %v989
      %v1075 = vpop.f32.mrb[0].mxu0
      %v1076 = vadd.f32 0.0, %v1075
      %v1077 = vpop.f32.mrb[0].mxu0
      %v1078 = vadd.f32 0.0, %v1077
      %1079 = vdwg.mxu0
      %v1080 = vadd.f32 %v951, %v1058
      %v1081 = vadd.f32 %v952, %v1060
      %v1082 = vadd.f32 %v953, %v1064
      %v1083 = vadd.f32 %v954, %v1066
      %v1084 = vadd.f32 %v955, %v1070
      %v1085 = vadd.f32 %v956, %v1072
      %v1086 = vadd.f32 %v957, %v1076
      %v1087 = vadd.f32 %v958, %v1078
      %v1088 = vld [vmem:[#allocation2 + $0x8] sm:$0xff]
      %v1089 = vld [vmem:[#allocation2 + $0x10] sm:$0xff]
      %v1090 = vld [vmem:[#allocation2 + $0x18] sm:$0xff]
      %s1091 = scalar_lea.vmem %s1, 5
      %v1092 = vld [vmem:[%s1091] ss:$8 sm:$0x3]
      %v1094 = vlaneseq
      %v1095 = vshrl.u32 %v1094, 7
      %v1096 = vsub.s32 0, %v1095
      %v1097 = vrot.slane %v1092, %v1096
      %v1098 = vlaneseq
      %v1099 = vshrl.u32 %v1098, 7
      %v1100 = vsub.s32 1, %v1099
      %v1101 = vrot.slane %v1092, %v1100
      %1102 = vrot.lane.b32.xlu0 %v1097, 1
      %v1103 = vpop.permute.xlu0 %1102
      %1104 = vrot.lane.b32.xlu0 %v1101, 1
      %v1105 = vpop.permute.xlu0 %1104
      %v1106 = vsel %vm845, %v1103, %v1105
      %v1110 = vmul.f32 %v1088, %v1103
      %v1111 = vmul.f32 %v1089, %v1106
      %v1112 = vmul.f32 %v1090, %v1105
      %s1113 = scalar_lea.vmem %s2, 160
      %v1114 = vld [vmem:[%s1113] sm:$0xff]
      %v1115 = vld [vmem:[%s1113 + $0x8] sm:$0xff]
      %v1116 = vld [vmem:[%s1113 + $0x10] sm:$0xff]
      %v1117 = vld [vmem:[%s1113 + $0x18] sm:$0xff]
      %1121 = vrot.lane.b32.xlu0 %v1110, 127
      %v1122 = vpop.permute.xlu0 %1121
      %1123 = vrot.lane.b32.xlu0 %v1111, 127
      %v1124 = vpop.permute.xlu0 %1123
      %1125 = vrot.lane.b32.xlu0 %v1112, 127
      %v1126 = vpop.permute.xlu0 %1125
      %v1127 = vsel %vm823, %v1122, %v1124
      %v1128 = vsel %vm823, %v1124, %v1126
      %v1132 = vsel %vm440, %v1114, 0
      %v1135 = vsel %vm440, %v1115, 0
      %v1138 = vsel %vm440, %v1116, 0
      %v1141 = vsel %vm440, %v1117, 0
      %1143 = vmatprep.subr.mxu0 %v1128
      %1144 = vmatpush1.msra.mxu0 %v1127
      %1145 = vmatprep.subr.mxu0 0.0
      %1146 = vmatpush1.msra.mxu0 0.0
      %1147 = vmatprep.subr.mxu0 0.0
      %1148 = vmatpush1.msra.mxu0 0.0
      %1149 = vmatprep.subr.mxu0 0.0
      %1150 = vmatpush1.msra.mxu0 0.0
      %1151 = vmatprep.subr.mxu0 0.0
      %1152 = vmatpush1.msra.mxu0 0.0
      %1153 = vmatprep.subr.mxu0 0.0
      %1154 = vmatpush1.msra.mxu0 0.0
      %1155 = vmatprep.subr.mxu0 0.0
      %1156 = vmatpush1.msra.mxu0 0.0
      %1157 = vmatprep.subr.mxu0 0.0
      %1158 = vmatpush1.msra.mxu0 0.0
      %1159 = vmatprep.subr.mxu0 0.0
      %1160 = vmatpush1.msra.mxu0 0.0
      %1161 = vmatprep.subr.mxu0 0.0
      %1162 = vmatpush1.msra.mxu0 0.0
      %1163 = vmatprep.subr.mxu0 0.0
      %1164 = vmatpush1.msra.mxu0 0.0
      %1165 = vmatprep.subr.mxu0 0.0
      %1166 = vmatpush1.msra.mxu0 0.0
      %1167 = vmatprep.subr.mxu0 0.0
      %1168 = vmatpush1.msra.mxu0 0.0
      %1169 = vmatprep.subr.mxu0 0.0
      %1170 = vmatpush1.msra.mxu0 0.0
      %1171 = vmatprep.subr.mxu0 0.0
      %1172 = vmatpush1.msra.mxu0 0.0
      %1173 = vmatprep.subr.mxu0 0.0
      %1174 = vmatpush1.msra.mxu0 0.0
      %1175 = vmatprep.subr.mxu0 0.0
      %1176 = vmatpush1.msra.mxu0 0.0
      %1177 = vmatprep.subr.mxu0 0.0
      %1178 = vmatpush1.msra.mxu0 0.0
      %1179 = vmatprep.subr.mxu0 0.0
      %1180 = vmatpush1.msra.mxu0 0.0
      %1181 = vmatprep.subr.mxu0 0.0
      %1182 = vmatpush1.msra.mxu0 0.0
      %1183 = vmatprep.subr.mxu0 0.0
      %1184 = vmatpush1.msra.mxu0 0.0
      %1185 = vmatprep.subr.mxu0 0.0
      %1186 = vmatpush1.msra.mxu0 0.0
      %1187 = vmatprep.subr.mxu0 0.0
      %1188 = vmatpush1.msra.mxu0 0.0
      %1189 = vmatprep.subr.mxu0 0.0
      %1190 = vmatpush1.msra.mxu0 0.0
      %1191 = vmatprep.subr.mxu0 0.0
      %1192 = vmatpush1.msra.mxu0 0.0
      %1193 = vmatprep.subr.mxu0 0.0
      %1194 = vmatpush1.msra.mxu0 0.0
      %1195 = vmatprep.subr.mxu0 0.0
      %1196 = vmatpush1.msra.mxu0 0.0
      %1197 = vmatprep.subr.mxu0 0.0
      %1198 = vmatpush1.msra.mxu0 0.0
      %1199 = vmatprep.subr.mxu0 0.0
      %1200 = vmatpush1.msra.mxu0 0.0
      %1201 = vmatprep.subr.mxu0 0.0
      %1202 = vmatpush1.msra.mxu0 0.0
      %1203 = vmatprep.subr.mxu0 0.0
      %1204 = vmatpush1.msra.mxu0 0.0
      %1205 = vmatprep.subr.mxu0 0.0
      %1206 = vmatpush1.msra.mxu0 0.0
      %1207 = vmatprep.mubr.f32.mxu0 0.0
      %1208 = vmatmul.mubr.f32.gmra.mrb[0].mxu0 %v1132
      %v1209 = vpop.f32.mrb[0].mxu0
      %v1210 = vadd.f32 0.0, %v1209
      %v1211 = vpop.f32.mrb[0].mxu0
      %v1212 = vadd.f32 0.0, %v1211
      %1213 = vmatprep.mubr.f32.mxu0 0.0
      %1214 = vmatmul.mubr.f32.gmra.mrb[0].mxu0 %v1135
      %v1215 = vpop.f32.mrb[0].mxu0
      %v1216 = vadd.f32 0.0, %v1215
      %v1217 = vpop.f32.mrb[0].mxu0
      %v1218 = vadd.f32 0.0, %v1217
      %1219 = vmatprep.mubr.f32.mxu0 0.0
      %1220 = vmatmul.mubr.f32.gmra.mrb[0].mxu0 %v1138
      %v1221 = vpop.f32.mrb[0].mxu0
      %v1222 = vadd.f32 0.0, %v1221
      %v1223 = vpop.f32.mrb[0].mxu0
      %v1224 = vadd.f32 0.0, %v1223
      %1225 = vmatprep.mubr.f32.mxu0 0.0
      %1226 = vmatmul.mubr.f32.gmra.mrb[0].mxu0 %v1141
      %v1227 = vpop.f32.mrb[0].mxu0
      %v1228 = vadd.f32 0.0, %v1227
      %v1229 = vpop.f32.mrb[0].mxu0
      %v1230 = vadd.f32 0.0, %v1229
      %1231 = vdwg.mxu0
      %v1232 = vadd.f32 %v1080, %v1210
      %v1233 = vadd.f32 %v1081, %v1212
      %v1234 = vadd.f32 %v1082, %v1216
      %v1235 = vadd.f32 %v1083, %v1218
      %v1236 = vadd.f32 %v1084, %v1222
      %v1237 = vadd.f32 %v1085, %v1224
      %v1238 = vadd.f32 %v1086, %v1228
      %v1239 = vadd.f32 %v1087, %v1230
      %s1240 = scalar_lea.vmem %s1, 6
      %v1241 = vld [vmem:[%s1240] ss:$8 sm:$0x3]
      %v1243 = vlaneseq
      %v1244 = vshrl.u32 %v1243, 7
      %v1245 = vsub.s32 0, %v1244
      %v1246 = vrot.slane %v1241, %v1245
      %v1247 = vlaneseq
      %v1248 = vshrl.u32 %v1247, 7
      %v1249 = vsub.s32 1, %v1248
      %v1250 = vrot.slane %v1241, %v1249
      %1251 = vrot.lane.b32.xlu0 %v1246, 15
      %v1252 = vpop.permute.xlu0 %1251
      %1253 = vrot.lane.b32.xlu0 %v1250, 15
      %v1254 = vpop.permute.xlu0 %1253
      %v1255 = vsel %vm694, %v1252, %v1254
      %v1259 = vmul.f32 %v1088, %v1252
      %v1260 = vmul.f32 %v1089, %v1255
      %v1261 = vmul.f32 %v1090, %v1254
      %s1262 = scalar_lea.vmem %s2, 192
      %v1263 = vld [vmem:[%s1262] sm:$0xff]
      %v1264 = vld [vmem:[%s1262 + $0x8] sm:$0xff]
      %v1265 = vld [vmem:[%s1262 + $0x10] sm:$0xff]
      %v1266 = vld [vmem:[%s1262 + $0x18] sm:$0xff]
      %1270 = vrot.lane.b32.xlu0 %v1259, 113
      %v1271 = vpop.permute.xlu0 %1270
      %1272 = vrot.lane.b32.xlu0 %v1260, 113
      %v1273 = vpop.permute.xlu0 %1272
      %1274 = vrot.lane.b32.xlu0 %v1261, 113
      %v1275 = vpop.permute.xlu0 %1274
      %v1276 = vsel %vm672, %v1271, %v1273
      %v1277 = vsel %vm672, %v1273, %v1275
      %v1281 = vsel %vm440, %v1263, 0
      %v1284 = vsel %vm440, %v1264, 0
      %v1287 = vsel %vm440, %v1265, 0
      %v1290 = vsel %vm440, %v1266, 0
      %1292 = vmatprep.subr.mxu0 %v1277
      %1293 = vmatpush1.msra.mxu0 %v1276
      %1294 = vmatprep.subr.mxu0 0.0
      %1295 = vmatpush1.msra.mxu0 0.0
      %1296 = vmatprep.subr.mxu0 0.0
      %1297 = vmatpush1.msra.mxu0 0.0
      %1298 = vmatprep.subr.mxu0 0.0
      %1299 = vmatpush1.msra.mxu0 0.0
      %1300 = vmatprep.subr.mxu0 0.0
      %1301 = vmatpush1.msra.mxu0 0.0
      %1302 = vmatprep.subr.mxu0 0.0
      %1303 = vmatpush1.msra.mxu0 0.0
      %1304 = vmatprep.subr.mxu0 0.0
      %1305 = vmatpush1.msra.mxu0 0.0
      %1306 = vmatprep.subr.mxu0 0.0
      %1307 = vmatpush1.msra.mxu0 0.0
      %1308 = vmatprep.subr.mxu0 0.0
      %1309 = vmatpush1.msra.mxu0 0.0
      %1310 = vmatprep.subr.mxu0 0.0
      %1311 = vmatpush1.msra.mxu0 0.0
      %1312 = vmatprep.subr.mxu0 0.0
      %1313 = vmatpush1.msra.mxu0 0.0
      %1314 = vmatprep.subr.mxu0 0.0
      %1315 = vmatpush1.msra.mxu0 0.0
      %1316 = vmatprep.subr.mxu0 0.0
      %1317 = vmatpush1.msra.mxu0 0.0
      %1318 = vmatprep.subr.mxu0 0.0
      %1319 = vmatpush1.msra.mxu0 0.0
      %1320 = vmatprep.subr.mxu0 0.0
      %1321 = vmatpush1.msra.mxu0 0.0
      %1322 = vmatprep.subr.mxu0 0.0
      %1323 = vmatpush1.msra.mxu0 0.0
      %1324 = vmatprep.subr.mxu0 0.0
      %1325 = vmatpush1.msra.mxu0 0.0
      %1326 = vmatprep.subr.mxu0 0.0
      %1327 = vmatpush1.msra.mxu0 0.0
      %1328 = vmatprep.subr.mxu0 0.0
      %1329 = vmatpush1.msra.mxu0 0.0
      %1330 = vmatprep.subr.mxu0 0.0
      %1331 = vmatpush1.msra.mxu0 0.0
      %1332 = vmatprep.subr.mxu0 0.0
      %1333 = vmatpush1.msra.mxu0 0.0
      %1334 = vmatprep.subr.mxu0 0.0
      %1335 = vmatpush1.msra.mxu0 0.0
      %1336 = vmatprep.subr.mxu0 0.0
      %1337 = vmatpush1.msra.mxu0 0.0
      %1338 = vmatprep.subr.mxu0 0.0
      %1339 = vmatpush1.msra.mxu0 0.0
      %1340 = vmatprep.subr.mxu0 0.0
      %1341 = vmatpush1.msra.mxu0 0.0
      %1342 = vmatprep.subr.mxu0 0.0
      %1343 = vmatpush1.msra.mxu0 0.0
      %1344 = vmatprep.subr.mxu0 0.0
      %1345 = vmatpush1.msra.mxu0 0.0
      %1346 = vmatprep.subr.mxu0 0.0
      %1347 = vmatpush1.msra.mxu0 0.0
      %1348 = vmatprep.subr.mxu0 0.0
      %1349 = vmatpush1.msra.mxu0 0.0
      %1350 = vmatprep.subr.mxu0 0.0
      %1351 = vmatpush1.msra.mxu0 0.0
      %1352 = vmatprep.subr.mxu0 0.0
      %1353 = vmatpush1.msra.mxu0 0.0
      %1354 = vmatprep.subr.mxu0 0.0
      %1355 = vmatpush1.msra.mxu0 0.0
      %1356 = vmatprep.mubr.f32.mxu0 0.0
      %1357 = vmatmul.mubr.f32.gmra.mrb[0].mxu0 %v1281
      %v1358 = vpop.f32.mrb[0].mxu0
      %v1359 = vadd.f32 0.0, %v1358
      %v1360 = vpop.f32.mrb[0].mxu0
      %v1361 = vadd.f32 0.0, %v1360
      %1362 = vmatprep.mubr.f32.mxu0 0.0
      %1363 = vmatmul.mubr.f32.gmra.mrb[0].mxu0 %v1284
      %v1364 = vpop.f32.mrb[0].mxu0
      %v1365 = vadd.f32 0.0, %v1364
      %v1366 = vpop.f32.mrb[0].mxu0
      %v1367 = vadd.f32 0.0, %v1366
      %1368 = vmatprep.mubr.f32.mxu0 0.0
      %1369 = vmatmul.mubr.f32.gmra.mrb[0].mxu0 %v1287
      %v1370 = vpop.f32.mrb[0].mxu0
      %v1371 = vadd.f32 0.0, %v1370
      %v1372 = vpop.f32.mrb[0].mxu0
      %v1373 = vadd.f32 0.0, %v1372
      %1374 = vmatprep.mubr.f32.mxu0 0.0
      %1375 = vmatmul.mubr.f32.gmra.mrb[0].mxu0 %v1290
      %v1376 = vpop.f32.mrb[0].mxu0
      %v1377 = vadd.f32 0.0, %v1376
      %v1378 = vpop.f32.mrb[0].mxu0
      %v1379 = vadd.f32 0.0, %v1378
      %1380 = vdwg.mxu0
      %v1381 = vadd.f32 %v1232, %v1359
      %v1382 = vadd.f32 %v1233, %v1361
      %v1383 = vadd.f32 %v1234, %v1365
      %v1384 = vadd.f32 %v1235, %v1367
      %v1385 = vadd.f32 %v1236, %v1371
      %v1386 = vadd.f32 %v1237, %v1373
      %v1387 = vadd.f32 %v1238, %v1377
      %v1388 = vadd.f32 %v1239, %v1379
      %s1389 = scalar_lea.vmem %s1, 7
      %v1390 = vld [vmem:[%s1389] ss:$8 sm:$0x3]
      %v1392 = vlaneseq
      %v1393 = vshrl.u32 %v1392, 7
      %v1394 = vsub.s32 0, %v1393
      %v1395 = vrot.slane %v1390, %v1394
      %v1396 = vlaneseq
      %v1397 = vshrl.u32 %v1396, 7
      %v1398 = vsub.s32 1, %v1397
      %v1399 = vrot.slane %v1390, %v1398
      %1400 = vrot.lane.b32.xlu0 %v1395, 16
      %v1401 = vpop.permute.xlu0 %1400
      %1402 = vrot.lane.b32.xlu0 %v1399, 16
      %v1403 = vpop.permute.xlu0 %1402
      %v1404 = vsel %vm435, %v1401, %v1403
      %v1408 = vmul.f32 %v1088, %v1401
      %v1409 = vmul.f32 %v1089, %v1404
      %v1410 = vmul.f32 %v1090, %v1403
      %s1411 = scalar_lea.vmem %s2, 224
      %v1412 = vld [vmem:[%s1411] sm:$0xff]
      %v1413 = vld [vmem:[%s1411 + $0x8] sm:$0xff]
      %v1414 = vld [vmem:[%s1411 + $0x10] sm:$0xff]
      %v1415 = vld [vmem:[%s1411 + $0x18] sm:$0xff]
      %1419 = vrot.lane.b32.xlu0 %v1408, 112
      %v1420 = vpop.permute.xlu0 %1419
      %1421 = vrot.lane.b32.xlu0 %v1409, 112
      %v1422 = vpop.permute.xlu0 %1421
      %1423 = vrot.lane.b32.xlu0 %v1410, 112
      %v1424 = vpop.permute.xlu0 %1423
      %v1425 = vsel %vm413, %v1420, %v1422
      %v1426 = vsel %vm413, %v1422, %v1424
      %v1430 = vsel %vm440, %v1412, 0
      %v1433 = vsel %vm440, %v1413, 0
      %v1436 = vsel %vm440, %v1414, 0
      %v1439 = vsel %vm440, %v1415, 0
      %1441 = vmatprep.subr.mxu0 %v1426
      %1442 = vmatpush1.msra.mxu0 %v1425
      %1443 = vmatprep.subr.mxu0 0.0
      %1444 = vmatpush1.msra.mxu0 0.0
      %1445 = vmatprep.subr.mxu0 0.0
      %1446 = vmatpush1.msra.mxu0 0.0
      %1447 = vmatprep.subr.mxu0 0.0
      %1448 = vmatpush1.msra.mxu0 0.0
      %1449 = vmatprep.subr.mxu0 0.0
      %1450 = vmatpush1.msra.mxu0 0.0
      %1451 = vmatprep.subr.mxu0 0.0
      %1452 = vmatpush1.msra.mxu0 0.0
      %1453 = vmatprep.subr.mxu0 0.0
      %1454 = vmatpush1.msra.mxu0 0.0
      %1455 = vmatprep.subr.mxu0 0.0
      %1456 = vmatpush1.msra.mxu0 0.0
      %1457 = vmatprep.subr.mxu0 0.0
      %1458 = vmatpush1.msra.mxu0 0.0
      %1459 = vmatprep.subr.mxu0 0.0
      %1460 = vmatpush1.msra.mxu0 0.0
      %1461 = vmatprep.subr.mxu0 0.0
      %1462 = vmatpush1.msra.mxu0 0.0
      %1463 = vmatprep.subr.mxu0 0.0
      %1464 = vmatpush1.msra.mxu0 0.0
      %1465 = vmatprep.subr.mxu0 0.0
      %1466 = vmatpush1.msra.mxu0 0.0
      %1467 = vmatprep.subr.mxu0 0.0
      %1468 = vmatpush1.msra.mxu0 0.0
      %1469 = vmatprep.subr.mxu0 0.0
      %1470 = vmatpush1.msra.mxu0 0.0
      %1471 = vmatprep.subr.mxu0 0.0
      %1472 = vmatpush1.msra.mxu0 0.0
      %1473 = vmatprep.subr.mxu0 0.0
      %1474 = vmatpush1.msra.mxu0 0.0
      %1475 = vmatprep.subr.mxu0 0.0
      %1476 = vmatpush1.msra.mxu0 0.0
      %1477 = vmatprep.subr.mxu0 0.0
      %1478 = vmatpush1.msra.mxu0 0.0
      %1479 = vmatprep.subr.mxu0 0.0
      %1480 = vmatpush1.msra.mxu0 0.0
      %1481 = vmatprep.subr.mxu0 0.0
      %1482 = vmatpush1.msra.mxu0 0.0
      %1483 = vmatprep.subr.mxu0 0.0
      %1484 = vmatpush1.msra.mxu0 0.0
      %1485 = vmatprep.subr.mxu0 0.0
      %1486 = vmatpush1.msra.mxu0 0.0
      %1487 = vmatprep.subr.mxu0 0.0
      %1488 = vmatpush1.msra.mxu0 0.0
      %1489 = vmatprep.subr.mxu0 0.0
      %1490 = vmatpush1.msra.mxu0 0.0
      %1491 = vmatprep.subr.mxu0 0.0
      %1492 = vmatpush1.msra.mxu0 0.0
      %1493 = vmatprep.subr.mxu0 0.0
      %1494 = vmatpush1.msra.mxu0 0.0
      %1495 = vmatprep.subr.mxu0 0.0
      %1496 = vmatpush1.msra.mxu0 0.0
      %1497 = vmatprep.subr.mxu0 0.0
      %1498 = vmatpush1.msra.mxu0 0.0
      %1499 = vmatprep.subr.mxu0 0.0
      %1500 = vmatpush1.msra.mxu0 0.0
      %1501 = vmatprep.subr.mxu0 0.0
      %1502 = vmatpush1.msra.mxu0 0.0
      %1503 = vmatprep.subr.mxu0 0.0
      %1504 = vmatpush1.msra.mxu0 0.0
      %1505 = vmatprep.mubr.f32.mxu0 0.0
      %1506 = vmatmul.mubr.f32.gmra.mrb[0].mxu0 %v1430
      %v1507 = vpop.f32.mrb[0].mxu0
      %v1508 = vadd.f32 0.0, %v1507
      %v1509 = vpop.f32.mrb[0].mxu0
      %v1510 = vadd.f32 0.0, %v1509
      %1511 = vmatprep.mubr.f32.mxu0 0.0
      %1512 = vmatmul.mubr.f32.gmra.mrb[0].mxu0 %v1433
      %v1513 = vpop.f32.mrb[0].mxu0
      %v1514 = vadd.f32 0.0, %v1513
      %v1515 = vpop.f32.mrb[0].mxu0
      %v1516 = vadd.f32 0.0, %v1515
      %1517 = vmatprep.mubr.f32.mxu0 0.0
      %1518 = vmatmul.mubr.f32.gmra.mrb[0].mxu0 %v1436
      %v1519 = vpop.f32.mrb[0].mxu0
      %v1520 = vadd.f32 0.0, %v1519
      %v1521 = vpop.f32.mrb[0].mxu0
      %v1522 = vadd.f32 0.0, %v1521
      %1523 = vmatprep.mubr.f32.mxu0 0.0
      %1524 = vmatmul.mubr.f32.gmra.mrb[0].mxu0 %v1439
      %v1525 = vpop.f32.mrb[0].mxu0
      %v1526 = vadd.f32 0.0, %v1525
      %v1527 = vpop.f32.mrb[0].mxu0
      %v1528 = vadd.f32 0.0, %v1527
      %1529 = vdwg.mxu0
      %v1530 = vadd.f32 %v1381, %v1508
      %v1531 = vadd.f32 %v1382, %v1510
      %v1532 = vadd.f32 %v1383, %v1514
      %v1533 = vadd.f32 %v1384, %v1516
      %v1534 = vadd.f32 %v1385, %v1520
      %v1535 = vadd.f32 %v1386, %v1522
      %v1536 = vadd.f32 %v1387, %v1526
      %v1537 = vadd.f32 %v1388, %v1528
      %s1538 = scalar_lea.vmem %s1, 16
      %v1539 = vld [vmem:[%s1538] ss:$8 sm:$0x3]
      %v1541 = vlaneseq
      %v1542 = vshrl.u32 %v1541, 7
      %v1543 = vsub.s32 0, %v1542
      %v1544 = vrot.slane %v1539, %v1543
      %v1545 = vlaneseq
      %v1546 = vshrl.u32 %v1545, 7
      %v1547 = vsub.s32 1, %v1546
      %v1548 = vrot.slane %v1539, %v1547
      %1549 = vrot.lane.b32.xlu0 %v1544, 17
      %v1550 = vpop.permute.xlu0 %1549
      %1551 = vrot.lane.b32.xlu0 %v1548, 17
      %v1552 = vpop.permute.xlu0 %1551
      %v1553 = vsel %vm551, %v1550, %v1552
      %v1557 = vmul.f32 %v1088, %v1550
      %v1558 = vmul.f32 %v1089, %v1553
      %v1559 = vmul.f32 %v1090, %v1552
      %s1560 = scalar_lea.vmem %s2, 256
      %v1561 = vld [vmem:[%s1560] sm:$0xff]
      %v1562 = vld [vmem:[%s1560 + $0x8] sm:$0xff]
      %v1563 = vld [vmem:[%s1560 + $0x10] sm:$0xff]
      %v1564 = vld [vmem:[%s1560 + $0x18] sm:$0xff]
      %1568 = vrot.lane.b32.xlu0 %v1557, 111
      %v1569 = vpop.permute.xlu0 %1568
      %1570 = vrot.lane.b32.xlu0 %v1558, 111
      %v1571 = vpop.permute.xlu0 %1570
      %1572 = vrot.lane.b32.xlu0 %v1559, 111
      %v1573 = vpop.permute.xlu0 %1572
      %v1574 = vsel %vm386, %v1569, %v1571
      %v1575 = vsel %vm386, %v1571, %v1573
      %v1579 = vsel %vm440, %v1561, 0
      %v1582 = vsel %vm440, %v1562, 0
      %v1585 = vsel %vm440, %v1563, 0
      %v1588 = vsel %vm440, %v1564, 0
      %1590 = vmatprep.subr.mxu0 %v1575
      %1591 = vmatpush1.msra.mxu0 %v1574
      %1592 = vmatprep.subr.mxu0 0.0
      %1593 = vmatpush1.msra.mxu0 0.0
      %1594 = vmatprep.subr.mxu0 0.0
      %1595 = vmatpush1.msra.mxu0 0.0
      %1596 = vmatprep.subr.mxu0 0.0
      %1597 = vmatpush1.msra.mxu0 0.0
      %1598 = vmatprep.subr.mxu0 0.0
      %1599 = vmatpush1.msra.mxu0 0.0
      %1600 = vmatprep.subr.mxu0 0.0
      %1601 = vmatpush1.msra.mxu0 0.0
      %1602 = vmatprep.subr.mxu0 0.0
      %1603 = vmatpush1.msra.mxu0 0.0
      %1604 = vmatprep.subr.mxu0 0.0
      %1605 = vmatpush1.msra.mxu0 0.0
      %1606 = vmatprep.subr.mxu0 0.0
      %1607 = vmatpush1.msra.mxu0 0.0
      %1608 = vmatprep.subr.mxu0 0.0
      %1609 = vmatpush1.msra.mxu0 0.0
      %1610 = vmatprep.subr.mxu0 0.0
      %1611 = vmatpush1.msra.mxu0 0.0
      %1612 = vmatprep.subr.mxu0 0.0
      %1613 = vmatpush1.msra.mxu0 0.0
      %1614 = vmatprep.subr.mxu0 0.0
      %1615 = vmatpush1.msra.mxu0 0.0
      %1616 = vmatprep.subr.mxu0 0.0
      %1617 = vmatpush1.msra.mxu0 0.0
      %1618 = vmatprep.subr.mxu0 0.0
      %1619 = vmatpush1.msra.mxu0 0.0
      %1620 = vmatprep.subr.mxu0 0.0
      %1621 = vmatpush1.msra.mxu0 0.0
      %1622 = vmatprep.subr.mxu0 0.0
      %1623 = vmatpush1.msra.mxu0 0.0
      %1624 = vmatprep.subr.mxu0 0.0
      %1625 = vmatpush1.msra.mxu0 0.0
      %1626 = vmatprep.subr.mxu0 0.0
      %1627 = vmatpush1.msra.mxu0 0.0
      %1628 = vmatprep.subr.mxu0 0.0
      %1629 = vmatpush1.msra.mxu0 0.0
      %1630 = vmatprep.subr.mxu0 0.0
      %1631 = vmatpush1.msra.mxu0 0.0
      %1632 = vmatprep.subr.mxu0 0.0
      %1633 = vmatpush1.msra.mxu0 0.0
      %1634 = vmatprep.subr.mxu0 0.0
      %1635 = vmatpush1.msra.mxu0 0.0
      %1636 = vmatprep.subr.mxu0 0.0
      %1637 = vmatpush1.msra.mxu0 0.0
      %1638 = vmatprep.subr.mxu0 0.0
      %1639 = vmatpush1.msra.mxu0 0.0
      %1640 = vmatprep.subr.mxu0 0.0
      %1641 = vmatpush1.msra.mxu0 0.0
      %1642 = vmatprep.subr.mxu0 0.0
      %1643 = vmatpush1.msra.mxu0 0.0
      %1644 = vmatprep.subr.mxu0 0.0
      %1645 = vmatpush1.msra.mxu0 0.0
      %1646 = vmatprep.subr.mxu0 0.0
      %1647 = vmatpush1.msra.mxu0 0.0
      %1648 = vmatprep.subr.mxu0 0.0
      %1649 = vmatpush1.msra.mxu0 0.0
      %1650 = vmatprep.subr.mxu0 0.0
      %1651 = vmatpush1.msra.mxu0 0.0
      %1652 = vmatprep.subr.mxu0 0.0
      %1653 = vmatpush1.msra.mxu0 0.0
      %1654 = vmatprep.mubr.f32.mxu0 0.0
      %1655 = vmatmul.mubr.f32.gmra.mrb[0].mxu0 %v1579
      %v1656 = vpop.f32.mrb[0].mxu0
      %v1657 = vadd.f32 0.0, %v1656
      %v1658 = vpop.f32.mrb[0].mxu0
      %v1659 = vadd.f32 0.0, %v1658
      %1660 = vmatprep.mubr.f32.mxu0 0.0
      %1661 = vmatmul.mubr.f32.gmra.mrb[0].mxu0 %v1582
      %v1662 = vpop.f32.mrb[0].mxu0
      %v1663 = vadd.f32 0.0, %v1662
      %v1664 = vpop.f32.mrb[0].mxu0
      %v1665 = vadd.f32 0.0, %v1664
      %1666 = vmatprep.mubr.f32.mxu0 0.0
      %1667 = vmatmul.mubr.f32.gmra.mrb[0].mxu0 %v1585
      %v1668 = vpop.f32.mrb[0].mxu0
      %v1669 = vadd.f32 0.0, %v1668
      %v1670 = vpop.f32.mrb[0].mxu0
      %v1671 = vadd.f32 0.0, %v1670
      %1672 = vmatprep.mubr.f32.mxu0 0.0
      %1673 = vmatmul.mubr.f32.gmra.mrb[0].mxu0 %v1588
      %v1674 = vpop.f32.mrb[0].mxu0
      %v1675 = vadd.f32 0.0, %v1674
      %v1676 = vpop.f32.mrb[0].mxu0
      %v1677 = vadd.f32 0.0, %v1676
      %1678 = vdwg.mxu0
      %v1679 = vadd.f32 %v1530, %v1657
      %v1680 = vadd.f32 %v1531, %v1659
      %v1681 = vadd.f32 %v1532, %v1663
      %v1682 = vadd.f32 %v1533, %v1665
      %v1683 = vadd.f32 %v1534, %v1669
      %v1684 = vadd.f32 %v1535, %v1671
      %v1685 = vadd.f32 %v1536, %v1675
      %v1686 = vadd.f32 %v1537, %v1677
      %v1687 = vld [vmem:[%s3] sm:$0xff]
      %v1688 = vld [vmem:[%s3 + $0x8] sm:$0xff]
      %v1689 = vld [vmem:[%s3 + $0x10] sm:$0xff]
      %v1690 = vld [vmem:[%s3 + $0x18] sm:$0xff]
      %1692 = vset.pattern.permute.xlu0 0
      %1693 = vperm.xlu0 %1692, %v1687
      %v1694 = vpop.permute.xlu0 %1693
      %1697 = vset.pattern.permute.xlu0 0
      %1698 = vperm.xlu0 %1697, %v1688
      %v1699 = vpop.permute.xlu0 %1698
      %1702 = vset.pattern.permute.xlu0 0
      %1703 = vperm.xlu0 %1702, %v1689
      %v1704 = vpop.permute.xlu0 %1703
      %1707 = vset.pattern.permute.xlu0 0
      %1708 = vperm.xlu0 %1707, %v1690
      %v1709 = vpop.permute.xlu0 %1708
      %v1711 = vadd.f32 %v1679, %v1694
      %v1712 = vadd.f32 %v1680, %v1694
      %v1713 = vadd.f32 %v1681, %v1699
      %v1714 = vadd.f32 %v1682, %v1699
      %v1715 = vadd.f32 %v1683, %v1704
      %v1716 = vadd.f32 %v1684, %v1704
      %v1717 = vadd.f32 %v1685, %v1709
      %v1718 = vadd.f32 %v1686, %v1709
      %v1719 = vmul.f32 %v1711, 0.01
      %v1720 = vmul.f32 %v1712, 0.01
      %v1721 = vmul.f32 %v1713, 0.01
      %v1722 = vmul.f32 %v1714, 0.01
      %v1723 = vmul.f32 %v1715, 0.01
      %v1724 = vmul.f32 %v1716, 0.01
      %v1725 = vmul.f32 %v1717, 0.01
      %v1726 = vmul.f32 %v1718, 0.01
      %v1727 = vmax.f32 %v1711, %v1719
      %v1728 = vmax.f32 %v1712, %v1720
      %v1729 = vmax.f32 %v1713, %v1721
      %v1730 = vmax.f32 %v1714, %v1722
      %v1731 = vmax.f32 %v1715, %v1723
      %v1732 = vmax.f32 %v1716, %v1724
      %v1733 = vmax.f32 %v1717, %v1725
      %v1734 = vmax.f32 %v1718, %v1726
      %v1735 = vld [vmem:[%s4] sm:$0xff]
      %v1736 = vld [vmem:[%s4 + $0x8] sm:$0xff]
      %v1737 = vld [vmem:[%s4 + $0x10] sm:$0xff]
      %v1738 = vld [vmem:[%s4 + $0x18] sm:$0xff]
      %v1739 = vld [vmem:[%s5] sm:$0xff]
      %v1740 = vld [vmem:[%s5 + $0x8] sm:$0xff]
      %v1741 = vld [vmem:[%s5 + $0x10] sm:$0xff]
      %v1742 = vld [vmem:[%s5 + $0x18] sm:$0xff]
      %1744 = vset.pattern.permute.xlu0 0
      %1745 = vperm.xlu0 %1744, %v1739
      %v1746 = vpop.permute.xlu0 %1745
      %1749 = vset.pattern.permute.xlu0 0
      %1750 = vperm.xlu0 %1749, %v1740
      %v1751 = vpop.permute.xlu0 %1750
      %1754 = vset.pattern.permute.xlu0 0
      %1755 = vperm.xlu0 %1754, %v1741
      %v1756 = vpop.permute.xlu0 %1755
      %1759 = vset.pattern.permute.xlu0 0
      %1760 = vperm.xlu0 %1759, %v1742
      %v1761 = vpop.permute.xlu0 %1760
      %vm1763 = vcmask 261120
      %v1765 = vsel %vm1763, %v1735, 0
      %v1768 = vsel %vm1763, %v1736, 0
      %v1771 = vsel %vm1763, %v1737, 0
      %v1774 = vsel %vm1763, %v1738, 0
      %1776 = vmatprep.subr.mxu0 %v1728
      %1777 = vmatpush1.msra.mxu0 %v1727
      %1778 = vmatprep.subr.mxu0 %v1730
      %1779 = vmatpush1.msra.mxu0 %v1729
      %1780 = vmatprep.subr.mxu0 %v1732
      %1781 = vmatpush1.msra.mxu0 %v1731
      %1782 = vmatprep.subr.mxu0 %v1734
      %1783 = vmatpush1.msra.mxu0 %v1733
      %1784 = vmatprep.subr.mxu0 0.0
      %1785 = vmatpush1.msra.mxu0 0.0
      %1786 = vmatprep.subr.mxu0 0.0
      %1787 = vmatpush1.msra.mxu0 0.0
      %1788 = vmatprep.subr.mxu0 0.0
      %1789 = vmatpush1.msra.mxu0 0.0
      %1790 = vmatprep.subr.mxu0 0.0
      %1791 = vmatpush1.msra.mxu0 0.0
      %1792 = vmatprep.subr.mxu0 0.0
      %1793 = vmatpush1.msra.mxu0 0.0
      %1794 = vmatprep.subr.mxu0 0.0
      %1795 = vmatpush1.msra.mxu0 0.0
      %1796 = vmatprep.subr.mxu0 0.0
      %1797 = vmatpush1.msra.mxu0 0.0
      %1798 = vmatprep.subr.mxu0 0.0
      %1799 = vmatpush1.msra.mxu0 0.0
      %1800 = vmatprep.subr.mxu0 0.0
      %1801 = vmatpush1.msra.mxu0 0.0
      %1802 = vmatprep.subr.mxu0 0.0
      %1803 = vmatpush1.msra.mxu0 0.0
      %1804 = vmatprep.subr.mxu0 0.0
      %1805 = vmatpush1.msra.mxu0 0.0
      %1806 = vmatprep.subr.mxu0 0.0
      %1807 = vmatpush1.msra.mxu0 0.0
      %1808 = vmatprep.subr.mxu0 0.0
      %1809 = vmatpush1.msra.mxu0 0.0
      %1810 = vmatprep.subr.mxu0 0.0
      %1811 = vmatpush1.msra.mxu0 0.0
      %1812 = vmatprep.subr.mxu0 0.0
      %1813 = vmatpush1.msra.mxu0 0.0
      %1814 = vmatprep.subr.mxu0 0.0
      %1815 = vmatpush1.msra.mxu0 0.0
      %1816 = vmatprep.subr.mxu0 0.0
      %1817 = vmatpush1.msra.mxu0 0.0
      %1818 = vmatprep.subr.mxu0 0.0
      %1819 = vmatpush1.msra.mxu0 0.0
      %1820 = vmatprep.subr.mxu0 0.0
      %1821 = vmatpush1.msra.mxu0 0.0
      %1822 = vmatprep.subr.mxu0 0.0
      %1823 = vmatpush1.msra.mxu0 0.0
      %1824 = vmatprep.subr.mxu0 0.0
      %1825 = vmatpush1.msra.mxu0 0.0
      %1826 = vmatprep.subr.mxu0 0.0
      %1827 = vmatpush1.msra.mxu0 0.0
      %1828 = vmatprep.subr.mxu0 0.0
      %1829 = vmatpush1.msra.mxu0 0.0
      %1830 = vmatprep.subr.mxu0 0.0
      %1831 = vmatpush1.msra.mxu0 0.0
      %1832 = vmatprep.subr.mxu0 0.0
      %1833 = vmatpush1.msra.mxu0 0.0
      %1834 = vmatprep.subr.mxu0 0.0
      %1835 = vmatpush1.msra.mxu0 0.0
      %1836 = vmatprep.subr.mxu0 0.0
      %1837 = vmatpush1.msra.mxu0 0.0
      %1838 = vmatprep.subr.mxu0 0.0
      %1839 = vmatpush1.msra.mxu0 0.0
      %1840 = vmatprep.mubr.f32.mxu0 0.0
      %1841 = vmatmul.mubr.f32.gmra.mrb[0].mxu0 %v1765
      %v1842 = vpop.f32.mrb[0].mxu0
      %v1843 = vadd.f32 %v1746, %v1842
      %v1844 = vpop.f32.mrb[0].mxu0
      %v1845 = vadd.f32 %v1746, %v1844
      %1846 = vmatprep.mubr.f32.mxu0 0.0
      %1847 = vmatmul.mubr.f32.gmra.mrb[0].mxu0 %v1768
      %v1848 = vpop.f32.mrb[0].mxu0
      %v1849 = vadd.f32 %v1751, %v1848
      %v1850 = vpop.f32.mrb[0].mxu0
      %v1851 = vadd.f32 %v1751, %v1850
      %1852 = vmatprep.mubr.f32.mxu0 0.0
      %1853 = vmatmul.mubr.f32.gmra.mrb[0].mxu0 %v1771
      %v1854 = vpop.f32.mrb[0].mxu0
      %v1855 = vadd.f32 %v1756, %v1854
      %v1856 = vpop.f32.mrb[0].mxu0
      %v1857 = vadd.f32 %v1756, %v1856
      %1858 = vmatprep.mubr.f32.mxu0 0.0
      %1859 = vmatmul.mubr.f32.gmra.mrb[0].mxu0 %v1774
      %v1860 = vpop.f32.mrb[0].mxu0
      %v1861 = vadd.f32 %v1761, %v1860
      %v1862 = vpop.f32.mrb[0].mxu0
      %v1863 = vadd.f32 %v1761, %v1862
      %1864 = vdwg.mxu0
      %v1865 = vmul.f32 %v1843, 0.01
      %v1866 = vmul.f32 %v1845, 0.01
      %v1867 = vmul.f32 %v1849, 0.01
      %v1868 = vmul.f32 %v1851, 0.01
      %v1869 = vmul.f32 %v1855, 0.01
      %v1870 = vmul.f32 %v1857, 0.01
      %v1871 = vmul.f32 %v1861, 0.01
      %v1872 = vmul.f32 %v1863, 0.01
      %v1873 = vmax.f32 %v1843, %v1865
      %v1874 = vmax.f32 %v1845, %v1866
      %v1875 = vmax.f32 %v1849, %v1867
      %v1876 = vmax.f32 %v1851, %v1868
      %v1877 = vmax.f32 %v1855, %v1869
      %v1878 = vmax.f32 %v1857, %v1870
      %v1879 = vmax.f32 %v1861, %v1871
      %v1880 = vmax.f32 %v1863, %v1872
      %1881 = vst [vmem:[#allocation3 + $0x8] sm:$0xff] %v1873
      %1882 = vst [vmem:[#allocation3 + $0x10] sm:$0xff] %v1874
      %1883 = vst [vmem:[#allocation3 + $0x28] sm:$0xff] %v1875
      %1884 = vst [vmem:[#allocation3 + $0x30] sm:$0xff] %v1876
      %1885 = vst [vmem:[#allocation3 + $0x48] sm:$0xff] %v1877
      %1886 = vst [vmem:[#allocation3 + $0x50] sm:$0xff] %v1878
      %1887 = vst [vmem:[#allocation3 + $0x68] sm:$0xff] %v1879
      %1888 = vst [vmem:[#allocation3 + $0x70] sm:$0xff] %v1880
      %v1889 = vld [vmem:[%s6] sm:$0xff]
      %v1890 = vld [vmem:[#allocation3] sm:$0xff]
      %v1891 = vld [vmem:[#allocation3 + $0x8] sm:$0xff]
      %v1892 = vld [vmem:[#allocation3 + $0x10] sm:$0xff]
      %v1893 = vld [vmem:[#allocation3 + $0x20] sm:$0xff]
      %v1894 = vld [vmem:[#allocation3 + $0x28] sm:$0xff]
      %v1895 = vld [vmem:[#allocation3 + $0x30] sm:$0xff]
      %v1896 = vld [vmem:[#allocation3 + $0x40] sm:$0xff]
      %v1897 = vld [vmem:[#allocation3 + $0x48] sm:$0xff]
      %v1898 = vld [vmem:[#allocation3 + $0x50] sm:$0xff]
      %v1899 = vld [vmem:[#allocation3 + $0x60] sm:$0xff]
      %v1900 = vld [vmem:[#allocation3 + $0x68] sm:$0xff]
      %v1901 = vld [vmem:[#allocation3 + $0x70] sm:$0xff]
      %1914 = vrot.lane.b32.xlu0 %v1890, 17
      %v1915 = vpop.permute.xlu0 %1914
      %1916 = vrot.lane.b32.xlu0 %v1891, 17
      %v1917 = vpop.permute.xlu0 %1916
      %1918 = vrot.lane.b32.xlu0 %v1892, 17
      %v1919 = vpop.permute.xlu0 %1918
      %1920 = vrot.lane.b32.xlu0 %v1893, 17
      %v1921 = vpop.permute.xlu0 %1920
      %1922 = vrot.lane.b32.xlu0 %v1894, 17
      %v1923 = vpop.permute.xlu0 %1922
      %1924 = vrot.lane.b32.xlu0 %v1895, 17
      %v1925 = vpop.permute.xlu0 %1924
      %1926 = vrot.lane.b32.xlu0 %v1896, 17
      %v1927 = vpop.permute.xlu0 %1926
      %1928 = vrot.lane.b32.xlu0 %v1897, 17
      %v1929 = vpop.permute.xlu0 %1928
      %1930 = vrot.lane.b32.xlu0 %v1898, 17
      %v1931 = vpop.permute.xlu0 %1930
      %1932 = vrot.lane.b32.xlu0 %v1899, 17
      %v1933 = vpop.permute.xlu0 %1932
      %1934 = vrot.lane.b32.xlu0 %v1900, 17
      %v1935 = vpop.permute.xlu0 %1934
      %1936 = vrot.lane.b32.xlu0 %v1901, 17
      %v1937 = vpop.permute.xlu0 %1936
      %v1938 = vsel %vm551, %v1915, %v1917
      %v1939 = vsel %vm551, %v1917, %v1919
      %v1940 = vsel %vm551, %v1921, %v1923
      %v1941 = vsel %vm551, %v1923, %v1925
      %v1942 = vsel %vm551, %v1927, %v1929
      %v1943 = vsel %vm551, %v1929, %v1931
      %v1944 = vsel %vm551, %v1933, %v1935
      %v1945 = vsel %vm551, %v1935, %v1937
      %v1955 = vsel %vm1763, %v1889, 0
      %1957 = vmatprep.subr.mxu0 %v1939
      %1958 = vmatpush1.msra.mxu0 %v1938
      %1959 = vmatprep.subr.mxu0 %v1941
      %1960 = vmatpush1.msra.mxu0 %v1940
      %1961 = vmatprep.subr.mxu0 %v1943
      %1962 = vmatpush1.msra.mxu0 %v1942
      %1963 = vmatprep.subr.mxu0 %v1945
      %1964 = vmatpush1.msra.mxu0 %v1944
      %1965 = vmatprep.subr.mxu0 0.0
      %1966 = vmatpush1.msra.mxu0 0.0
      %1967 = vmatprep.subr.mxu0 0.0
      %1968 = vmatpush1.msra.mxu0 0.0
      %1969 = vmatprep.subr.mxu0 0.0
      %1970 = vmatpush1.msra.mxu0 0.0
      %1971 = vmatprep.subr.mxu0 0.0
      %1972 = vmatpush1.msra.mxu0 0.0
      %1973 = vmatprep.subr.mxu0 0.0
      %1974 = vmatpush1.msra.mxu0 0.0
      %1975 = vmatprep.subr.mxu0 0.0
      %1976 = vmatpush1.msra.mxu0 0.0
      %1977 = vmatprep.subr.mxu0 0.0
      %1978 = vmatpush1.msra.mxu0 0.0
      %1979 = vmatprep.subr.mxu0 0.0
      %1980 = vmatpush1.msra.mxu0 0.0
      %1981 = vmatprep.subr.mxu0 0.0
      %1982 = vmatpush1.msra.mxu0 0.0
      %1983 = vmatprep.subr.mxu0 0.0
      %1984 = vmatpush1.msra.mxu0 0.0
      %1985 = vmatprep.subr.mxu0 0.0
      %1986 = vmatpush1.msra.mxu0 0.0
      %1987 = vmatprep.subr.mxu0 0.0
      %1988 = vmatpush1.msra.mxu0 0.0
      %1989 = vmatprep.subr.mxu0 0.0
      %1990 = vmatpush1.msra.mxu0 0.0
      %1991 = vmatprep.subr.mxu0 0.0
      %1992 = vmatpush1.msra.mxu0 0.0
      %1993 = vmatprep.subr.mxu0 0.0
      %1994 = vmatpush1.msra.mxu0 0.0
      %1995 = vmatprep.subr.mxu0 0.0
      %1996 = vmatpush1.msra.mxu0 0.0
      %1997 = vmatprep.subr.mxu0 0.0
      %1998 = vmatpush1.msra.mxu0 0.0
      %1999 = vmatprep.subr.mxu0 0.0
      %2000 = vmatpush1.msra.mxu0 0.0
      %2001 = vmatprep.subr.mxu0 0.0
      %2002 = vmatpush1.msra.mxu0 0.0
      %2003 = vmatprep.subr.mxu0 0.0
      %2004 = vmatpush1.msra.mxu0 0.0
      %2005 = vmatprep.subr.mxu0 0.0
      %2006 = vmatpush1.msra.mxu0 0.0
      %2007 = vmatprep.subr.mxu0 0.0
      %2008 = vmatpush1.msra.mxu0 0.0
      %2009 = vmatprep.subr.mxu0 0.0
      %2010 = vmatpush1.msra.mxu0 0.0
      %2011 = vmatprep.subr.mxu0 0.0
      %2012 = vmatpush1.msra.mxu0 0.0
      %2013 = vmatprep.subr.mxu0 0.0
      %2014 = vmatpush1.msra.mxu0 0.0
      %2015 = vmatprep.subr.mxu0 0.0
      %2016 = vmatpush1.msra.mxu0 0.0
      %2017 = vmatprep.subr.mxu0 0.0
      %2018 = vmatpush1.msra.mxu0 0.0
      %2019 = vmatprep.subr.mxu0 0.0
      %2020 = vmatpush1.msra.mxu0 0.0
      %2021 = vmatprep.mubr.f32.mxu0 0.0
      %2022 = vmatmul.mubr.f32.gmra.mrb[0].mxu0 %v1955
      %v2023 = vpop.f32.mrb[0].mxu0
      %v2024 = vadd.f32 0.0, %v2023
      %v2025 = vpop.f32.mrb[0].mxu0
      %v2026 = vadd.f32 0.0, %v2025
      %2027 = vdwg.mxu0
      %v2028 = vld [vmem:[%s1] ss:$8 sm:$0x3]
      %v2030 = vlaneseq
      %v2031 = vshrl.u32 %v2030, 7
      %v2032 = vsub.s32 0, %v2031
      %v2033 = vrot.slane %v2028, %v2032
      %v2034 = vlaneseq
      %v2035 = vshrl.u32 %v2034, 7
      %v2036 = vsub.s32 1, %v2035
      %v2037 = vrot.slane %v2028, %v2036
      %v2040 = vmul.f32 %v2024, %v2033
      %v2041 = vmul.f32 %v2026, %v2037
      %v2042 = vadd.f32 %v2040, 0.0
      %v2043 = vadd.f32 %v2041, 0.0
      %s2044 = scalar_lea.vmem %s6, 8
      %v2045 = vld [vmem:[%s2044] sm:$0xff]
      %2046 = vrot.lane.b32.xlu0 %v1890, 16
      %v2047 = vpop.permute.xlu0 %2046
      %2048 = vrot.lane.b32.xlu0 %v1891, 16
      %v2049 = vpop.permute.xlu0 %2048
      %2050 = vrot.lane.b32.xlu0 %v1892, 16
      %v2051 = vpop.permute.xlu0 %2050
      %2052 = vrot.lane.b32.xlu0 %v1893, 16
      %v2053 = vpop.permute.xlu0 %2052
      %2054 = vrot.lane.b32.xlu0 %v1894, 16
      %v2055 = vpop.permute.xlu0 %2054
      %2056 = vrot.lane.b32.xlu0 %v1895, 16
      %v2057 = vpop.permute.xlu0 %2056
      %2058 = vrot.lane.b32.xlu0 %v1896, 16
      %v2059 = vpop.permute.xlu0 %2058
      %2060 = vrot.lane.b32.xlu0 %v1897, 16
      %v2061 = vpop.permute.xlu0 %2060
      %2062 = vrot.lane.b32.xlu0 %v1898, 16
      %v2063 = vpop.permute.xlu0 %2062
      %2064 = vrot.lane.b32.xlu0 %v1899, 16
      %v2065 = vpop.permute.xlu0 %2064
      %2066 = vrot.lane.b32.xlu0 %v1900, 16
      %v2067 = vpop.permute.xlu0 %2066
      %2068 = vrot.lane.b32.xlu0 %v1901, 16
      %v2069 = vpop.permute.xlu0 %2068
      %v2070 = vsel %vm435, %v2047, %v2049
      %v2071 = vsel %vm435, %v2049, %v2051
      %v2072 = vsel %vm435, %v2053, %v2055
      %v2073 = vsel %vm435, %v2055, %v2057
      %v2074 = vsel %vm435, %v2059, %v2061
      %v2075 = vsel %vm435, %v2061, %v2063
      %v2076 = vsel %vm435, %v2065, %v2067
      %v2077 = vsel %vm435, %v2067, %v2069
      %v2087 = vsel %vm1763, %v2045, 0
      %2089 = vmatprep.subr.mxu0 %v2071
      %2090 = vmatpush1.msra.mxu0 %v2070
      %2091 = vmatprep.subr.mxu0 %v2073
      %2092 = vmatpush1.msra.mxu0 %v2072
      %2093 = vmatprep.subr.mxu0 %v2075
      %2094 = vmatpush1.msra.mxu0 %v2074
      %2095 = vmatprep.subr.mxu0 %v2077
      %2096 = vmatpush1.msra.mxu0 %v2076
      %2097 = vmatprep.subr.mxu0 0.0
      %2098 = vmatpush1.msra.mxu0 0.0
      %2099 = vmatprep.subr.mxu0 0.0
      %2100 = vmatpush1.msra.mxu0 0.0
      %2101 = vmatprep.subr.mxu0 0.0
      %2102 = vmatpush1.msra.mxu0 0.0
      %2103 = vmatprep.subr.mxu0 0.0
      %2104 = vmatpush1.msra.mxu0 0.0
      %2105 = vmatprep.subr.mxu0 0.0
      %2106 = vmatpush1.msra.mxu0 0.0
      %2107 = vmatprep.subr.mxu0 0.0
      %2108 = vmatpush1.msra.mxu0 0.0
      %2109 = vmatprep.subr.mxu0 0.0
      %2110 = vmatpush1.msra.mxu0 0.0
      %2111 = vmatprep.subr.mxu0 0.0
      %2112 = vmatpush1.msra.mxu0 0.0
      %2113 = vmatprep.subr.mxu0 0.0
      %2114 = vmatpush1.msra.mxu0 0.0
      %2115 = vmatprep.subr.mxu0 0.0
      %2116 = vmatpush1.msra.mxu0 0.0
      %2117 = vmatprep.subr.mxu0 0.0
      %2118 = vmatpush1.msra.mxu0 0.0
      %2119 = vmatprep.subr.mxu0 0.0
      %2120 = vmatpush1.msra.mxu0 0.0
      %2121 = vmatprep.subr.mxu0 0.0
      %2122 = vmatpush1.msra.mxu0 0.0
      %2123 = vmatprep.subr.mxu0 0.0
      %2124 = vmatpush1.msra.mxu0 0.0
      %2125 = vmatprep.subr.mxu0 0.0
      %2126 = vmatpush1.msra.mxu0 0.0
      %2127 = vmatprep.subr.mxu0 0.0
      %2128 = vmatpush1.msra.mxu0 0.0
      %2129 = vmatprep.subr.mxu0 0.0
      %2130 = vmatpush1.msra.mxu0 0.0
      %2131 = vmatprep.subr.mxu0 0.0
      %2132 = vmatpush1.msra.mxu0 0.0
      %2133 = vmatprep.subr.mxu0 0.0
      %2134 = vmatpush1.msra.mxu0 0.0
      %2135 = vmatprep.subr.mxu0 0.0
      %2136 = vmatpush1.msra.mxu0 0.0
      %2137 = vmatprep.subr.mxu0 0.0
      %2138 = vmatpush1.msra.mxu0 0.0
      %2139 = vmatprep.subr.mxu0 0.0
      %2140 = vmatpush1.msra.mxu0 0.0
      %2141 = vmatprep.subr.mxu0 0.0
      %2142 = vmatpush1.msra.mxu0 0.0
      %2143 = vmatprep.subr.mxu0 0.0
      %2144 = vmatpush1.msra.mxu0 0.0
      %2145 = vmatprep.subr.mxu0 0.0
      %2146 = vmatpush1.msra.mxu0 0.0
      %2147 = vmatprep.subr.mxu0 0.0
      %2148 = vmatpush1.msra.mxu0 0.0
      %2149 = vmatprep.subr.mxu0 0.0
      %2150 = vmatpush1.msra.mxu0 0.0
      %2151 = vmatprep.subr.mxu0 0.0
      %2152 = vmatpush1.msra.mxu0 0.0
      %2153 = vmatprep.mubr.f32.mxu0 0.0
      %2154 = vmatmul.mubr.f32.gmra.mrb[0].mxu0 %v2087
      %v2155 = vpop.f32.mrb[0].mxu0
      %v2156 = vadd.f32 0.0, %v2155
      %v2157 = vpop.f32.mrb[0].mxu0
      %v2158 = vadd.f32 0.0, %v2157
      %2159 = vdwg.mxu0
      %v2160 = vld [vmem:[%s398] ss:$8 sm:$0x3]
      %v2162 = vlaneseq
      %v2163 = vshrl.u32 %v2162, 7
      %v2164 = vsub.s32 0, %v2163
      %v2165 = vrot.slane %v2160, %v2164
      %v2166 = vlaneseq
      %v2167 = vshrl.u32 %v2166, 7
      %v2168 = vsub.s32 1, %v2167
      %v2169 = vrot.slane %v2160, %v2168
      %v2172 = vmul.f32 %v2156, %v2165
      %v2173 = vmul.f32 %v2158, %v2169
      %v2174 = vadd.f32 %v2042, %v2172
      %v2175 = vadd.f32 %v2043, %v2173
      %s2176 = scalar_lea.vmem %s6, 16
      %v2177 = vld [vmem:[%s2176] sm:$0xff]
      %2178 = vrot.lane.b32.xlu0 %v1890, 15
      %v2179 = vpop.permute.xlu0 %2178
      %2180 = vrot.lane.b32.xlu0 %v1891, 15
      %v2181 = vpop.permute.xlu0 %2180
      %2182 = vrot.lane.b32.xlu0 %v1892, 15
      %v2183 = vpop.permute.xlu0 %2182
      %2184 = vrot.lane.b32.xlu0 %v1893, 15
      %v2185 = vpop.permute.xlu0 %2184
      %2186 = vrot.lane.b32.xlu0 %v1894, 15
      %v2187 = vpop.permute.xlu0 %2186
      %2188 = vrot.lane.b32.xlu0 %v1895, 15
      %v2189 = vpop.permute.xlu0 %2188
      %2190 = vrot.lane.b32.xlu0 %v1896, 15
      %v2191 = vpop.permute.xlu0 %2190
      %2192 = vrot.lane.b32.xlu0 %v1897, 15
      %v2193 = vpop.permute.xlu0 %2192
      %2194 = vrot.lane.b32.xlu0 %v1898, 15
      %v2195 = vpop.permute.xlu0 %2194
      %2196 = vrot.lane.b32.xlu0 %v1899, 15
      %v2197 = vpop.permute.xlu0 %2196
      %2198 = vrot.lane.b32.xlu0 %v1900, 15
      %v2199 = vpop.permute.xlu0 %2198
      %2200 = vrot.lane.b32.xlu0 %v1901, 15
      %v2201 = vpop.permute.xlu0 %2200
      %v2202 = vsel %vm694, %v2179, %v2181
      %v2203 = vsel %vm694, %v2181, %v2183
      %v2204 = vsel %vm694, %v2185, %v2187
      %v2205 = vsel %vm694, %v2187, %v2189
      %v2206 = vsel %vm694, %v2191, %v2193
      %v2207 = vsel %vm694, %v2193, %v2195
      %v2208 = vsel %vm694, %v2197, %v2199
      %v2209 = vsel %vm694, %v2199, %v2201
      %v2219 = vsel %vm1763, %v2177, 0
      %2221 = vmatprep.subr.mxu0 %v2203
      %2222 = vmatpush1.msra.mxu0 %v2202
      %2223 = vmatprep.subr.mxu0 %v2205
      %2224 = vmatpush1.msra.mxu0 %v2204
      %2225 = vmatprep.subr.mxu0 %v2207
      %2226 = vmatpush1.msra.mxu0 %v2206
      %2227 = vmatprep.subr.mxu0 %v2209
      %2228 = vmatpush1.msra.mxu0 %v2208
      %2229 = vmatprep.subr.mxu0 0.0
      %2230 = vmatpush1.msra.mxu0 0.0
      %2231 = vmatprep.subr.mxu0 0.0
      %2232 = vmatpush1.msra.mxu0 0.0
      %2233 = vmatprep.subr.mxu0 0.0
      %2234 = vmatpush1.msra.mxu0 0.0
      %2235 = vmatprep.subr.mxu0 0.0
      %2236 = vmatpush1.msra.mxu0 0.0
      %2237 = vmatprep.subr.mxu0 0.0
      %2238 = vmatpush1.msra.mxu0 0.0
      %2239 = vmatprep.subr.mxu0 0.0
      %2240 = vmatpush1.msra.mxu0 0.0
      %2241 = vmatprep.subr.mxu0 0.0
      %2242 = vmatpush1.msra.mxu0 0.0
      %2243 = vmatprep.subr.mxu0 0.0
      %2244 = vmatpush1.msra.mxu0 0.0
      %2245 = vmatprep.subr.mxu0 0.0
      %2246 = vmatpush1.msra.mxu0 0.0
      %2247 = vmatprep.subr.mxu0 0.0
      %2248 = vmatpush1.msra.mxu0 0.0
      %2249 = vmatprep.subr.mxu0 0.0
      %2250 = vmatpush1.msra.mxu0 0.0
      %2251 = vmatprep.subr.mxu0 0.0
      %2252 = vmatpush1.msra.mxu0 0.0
      %2253 = vmatprep.subr.mxu0 0.0
      %2254 = vmatpush1.msra.mxu0 0.0
      %2255 = vmatprep.subr.mxu0 0.0
      %2256 = vmatpush1.msra.mxu0 0.0
      %2257 = vmatprep.subr.mxu0 0.0
      %2258 = vmatpush1.msra.mxu0 0.0
      %2259 = vmatprep.subr.mxu0 0.0
      %2260 = vmatpush1.msra.mxu0 0.0
      %2261 = vmatprep.subr.mxu0 0.0
      %2262 = vmatpush1.msra.mxu0 0.0
      %2263 = vmatprep.subr.mxu0 0.0
      %2264 = vmatpush1.msra.mxu0 0.0
      %2265 = vmatprep.subr.mxu0 0.0
      %2266 = vmatpush1.msra.mxu0 0.0
      %2267 = vmatprep.subr.mxu0 0.0
      %2268 = vmatpush1.msra.mxu0 0.0
      %2269 = vmatprep.subr.mxu0 0.0
      %2270 = vmatpush1.msra.mxu0 0.0
      %2271 = vmatprep.subr.mxu0 0.0
      %2272 = vmatpush1.msra.mxu0 0.0
      %2273 = vmatprep.subr.mxu0 0.0
      %2274 = vmatpush1.msra.mxu0 0.0
      %2275 = vmatprep.subr.mxu0 0.0
      %2276 = vmatpush1.msra.mxu0 0.0
      %2277 = vmatprep.subr.mxu0 0.0
      %2278 = vmatpush1.msra.mxu0 0.0
      %2279 = vmatprep.subr.mxu0 0.0
      %2280 = vmatpush1.msra.mxu0 0.0
      %2281 = vmatprep.subr.mxu0 0.0
      %2282 = vmatpush1.msra.mxu0 0.0
      %2283 = vmatprep.subr.mxu0 0.0
      %2284 = vmatpush1.msra.mxu0 0.0
      %2285 = vmatprep.mubr.f32.mxu0 0.0
      %2286 = vmatmul.mubr.f32.gmra.mrb[0].mxu0 %v2219
      %v2287 = vpop.f32.mrb[0].mxu0
      %v2288 = vadd.f32 0.0, %v2287
      %v2289 = vpop.f32.mrb[0].mxu0
      %v2290 = vadd.f32 0.0, %v2289
      %2291 = vdwg.mxu0
      %v2292 = vld [vmem:[%s657] ss:$8 sm:$0x3]
      %v2294 = vlaneseq
      %v2295 = vshrl.u32 %v2294, 7
      %v2296 = vsub.s32 0, %v2295
      %v2297 = vrot.slane %v2292, %v2296
      %v2298 = vlaneseq
      %v2299 = vshrl.u32 %v2298, 7
      %v2300 = vsub.s32 1, %v2299
      %v2301 = vrot.slane %v2292, %v2300
      %v2304 = vmul.f32 %v2288, %v2297
      %v2305 = vmul.f32 %v2290, %v2301
      %v2306 = vadd.f32 %v2174, %v2304
      %v2307 = vadd.f32 %v2175, %v2305
      %s2308 = scalar_lea.vmem %s6, 24
      %v2309 = vld [vmem:[%s2308] sm:$0xff]
      %2310 = vrot.lane.b32.xlu0 %v1890, 1
      %v2311 = vpop.permute.xlu0 %2310
      %2312 = vrot.lane.b32.xlu0 %v1891, 1
      %v2313 = vpop.permute.xlu0 %2312
      %2314 = vrot.lane.b32.xlu0 %v1892, 1
      %v2315 = vpop.permute.xlu0 %2314
      %2316 = vrot.lane.b32.xlu0 %v1893, 1
      %v2317 = vpop.permute.xlu0 %2316
      %2318 = vrot.lane.b32.xlu0 %v1894, 1
      %v2319 = vpop.permute.xlu0 %2318
      %2320 = vrot.lane.b32.xlu0 %v1895, 1
      %v2321 = vpop.permute.xlu0 %2320
      %2322 = vrot.lane.b32.xlu0 %v1896, 1
      %v2323 = vpop.permute.xlu0 %2322
      %2324 = vrot.lane.b32.xlu0 %v1897, 1
      %v2325 = vpop.permute.xlu0 %2324
      %2326 = vrot.lane.b32.xlu0 %v1898, 1
      %v2327 = vpop.permute.xlu0 %2326
      %2328 = vrot.lane.b32.xlu0 %v1899, 1
      %v2329 = vpop.permute.xlu0 %2328
      %2330 = vrot.lane.b32.xlu0 %v1900, 1
      %v2331 = vpop.permute.xlu0 %2330
      %2332 = vrot.lane.b32.xlu0 %v1901, 1
      %v2333 = vpop.permute.xlu0 %2332
      %v2334 = vsel %vm845, %v2311, %v2313
      %v2335 = vsel %vm845, %v2313, %v2315
      %v2336 = vsel %vm845, %v2317, %v2319
      %v2337 = vsel %vm845, %v2319, %v2321
      %v2338 = vsel %vm845, %v2323, %v2325
      %v2339 = vsel %vm845, %v2325, %v2327
      %v2340 = vsel %vm845, %v2329, %v2331
      %v2341 = vsel %vm845, %v2331, %v2333
      %v2351 = vsel %vm1763, %v2309, 0
      %2353 = vmatprep.subr.mxu0 %v2335
      %2354 = vmatpush1.msra.mxu0 %v2334
      %2355 = vmatprep.subr.mxu0 %v2337
      %2356 = vmatpush1.msra.mxu0 %v2336
      %2357 = vmatprep.subr.mxu0 %v2339
      %2358 = vmatpush1.msra.mxu0 %v2338
      %2359 = vmatprep.subr.mxu0 %v2341
      %2360 = vmatpush1.msra.mxu0 %v2340
      %2361 = vmatprep.subr.mxu0 0.0
      %2362 = vmatpush1.msra.mxu0 0.0
      %2363 = vmatprep.subr.mxu0 0.0
      %2364 = vmatpush1.msra.mxu0 0.0
      %2365 = vmatprep.subr.mxu0 0.0
      %2366 = vmatpush1.msra.mxu0 0.0
      %2367 = vmatprep.subr.mxu0 0.0
      %2368 = vmatpush1.msra.mxu0 0.0
      %2369 = vmatprep.subr.mxu0 0.0
      %2370 = vmatpush1.msra.mxu0 0.0
      %2371 = vmatprep.subr.mxu0 0.0
      %2372 = vmatpush1.msra.mxu0 0.0
      %2373 = vmatprep.subr.mxu0 0.0
      %2374 = vmatpush1.msra.mxu0 0.0
      %2375 = vmatprep.subr.mxu0 0.0
      %2376 = vmatpush1.msra.mxu0 0.0
      %2377 = vmatprep.subr.mxu0 0.0
      %2378 = vmatpush1.msra.mxu0 0.0
      %2379 = vmatprep.subr.mxu0 0.0
      %2380 = vmatpush1.msra.mxu0 0.0
      %2381 = vmatprep.subr.mxu0 0.0
      %2382 = vmatpush1.msra.mxu0 0.0
      %2383 = vmatprep.subr.mxu0 0.0
      %2384 = vmatpush1.msra.mxu0 0.0
      %2385 = vmatprep.subr.mxu0 0.0
      %2386 = vmatpush1.msra.mxu0 0.0
      %2387 = vmatprep.subr.mxu0 0.0
      %2388 = vmatpush1.msra.mxu0 0.0
      %2389 = vmatprep.subr.mxu0 0.0
      %2390 = vmatpush1.msra.mxu0 0.0
      %2391 = vmatprep.subr.mxu0 0.0
      %2392 = vmatpush1.msra.mxu0 0.0
      %2393 = vmatprep.subr.mxu0 0.0
      %2394 = vmatpush1.msra.mxu0 0.0
      %2395 = vmatprep.subr.mxu0 0.0
      %2396 = vmatpush1.msra.mxu0 0.0
      %2397 = vmatprep.subr.mxu0 0.0
      %2398 = vmatpush1.msra.mxu0 0.0
      %2399 = vmatprep.subr.mxu0 0.0
      %2400 = vmatpush1.msra.mxu0 0.0
      %2401 = vmatprep.subr.mxu0 0.0
      %2402 = vmatpush1.msra.mxu0 0.0
      %2403 = vmatprep.subr.mxu0 0.0
      %2404 = vmatpush1.msra.mxu0 0.0
      %2405 = vmatprep.subr.mxu0 0.0
      %2406 = vmatpush1.msra.mxu0 0.0
      %2407 = vmatprep.subr.mxu0 0.0
      %2408 = vmatpush1.msra.mxu0 0.0
      %2409 = vmatprep.subr.mxu0 0.0
      %2410 = vmatpush1.msra.mxu0 0.0
      %2411 = vmatprep.subr.mxu0 0.0
      %2412 = vmatpush1.msra.mxu0 0.0
      %2413 = vmatprep.subr.mxu0 0.0
      %2414 = vmatpush1.msra.mxu0 0.0
      %2415 = vmatprep.subr.mxu0 0.0
      %2416 = vmatpush1.msra.mxu0 0.0
      %2417 = vmatprep.mubr.f32.mxu0 0.0
      %2418 = vmatmul.mubr.f32.gmra.mrb[0].mxu0 %v2351
      %v2419 = vpop.f32.mrb[0].mxu0
      %v2420 = vadd.f32 0.0, %v2419
      %v2421 = vpop.f32.mrb[0].mxu0
      %v2422 = vadd.f32 0.0, %v2421
      %2423 = vdwg.mxu0
      %v2424 = vld [vmem:[%s808] ss:$8 sm:$0x3]
      %v2426 = vlaneseq
      %v2427 = vshrl.u32 %v2426, 7
      %v2428 = vsub.s32 0, %v2427
      %v2429 = vrot.slane %v2424, %v2428
      %v2430 = vlaneseq
      %v2431 = vshrl.u32 %v2430, 7
      %v2432 = vsub.s32 1, %v2431
      %v2433 = vrot.slane %v2424, %v2432
      %v2436 = vmul.f32 %v2420, %v2429
      %v2437 = vmul.f32 %v2422, %v2433
      %v2438 = vadd.f32 %v2306, %v2436
      %v2439 = vadd.f32 %v2307, %v2437
      %s2440 = scalar_lea.vmem %s6, 32
      %v2441 = vld [vmem:[%s2440] sm:$0xff]
      %v2443 = vsel %vm1763, %v2441, 0
      %2445 = vmatprep.subr.mxu0 %v1892
      %2446 = vmatpush1.msra.mxu0 %v1891
      %2447 = vmatprep.subr.mxu0 %v1895
      %2448 = vmatpush1.msra.mxu0 %v1894
      %2449 = vmatprep.subr.mxu0 %v1898
      %2450 = vmatpush1.msra.mxu0 %v1897
      %2451 = vmatprep.subr.mxu0 %v1901
      %2452 = vmatpush1.msra.mxu0 %v1900
      %2453 = vmatprep.subr.mxu0 0.0
      %2454 = vmatpush1.msra.mxu0 0.0
      %2455 = vmatprep.subr.mxu0 0.0
      %2456 = vmatpush1.msra.mxu0 0.0
      %2457 = vmatprep.subr.mxu0 0.0
      %2458 = vmatpush1.msra.mxu0 0.0
      %2459 = vmatprep.subr.mxu0 0.0
      %2460 = vmatpush1.msra.mxu0 0.0
      %2461 = vmatprep.subr.mxu0 0.0
      %2462 = vmatpush1.msra.mxu0 0.0
      %2463 = vmatprep.subr.mxu0 0.0
      %2464 = vmatpush1.msra.mxu0 0.0
      %2465 = vmatprep.subr.mxu0 0.0
      %2466 = vmatpush1.msra.mxu0 0.0
      %2467 = vmatprep.subr.mxu0 0.0
      %2468 = vmatpush1.msra.mxu0 0.0
      %2469 = vmatprep.subr.mxu0 0.0
      %2470 = vmatpush1.msra.mxu0 0.0
      %2471 = vmatprep.subr.mxu0 0.0
      %2472 = vmatpush1.msra.mxu0 0.0
      %2473 = vmatprep.subr.mxu0 0.0
      %2474 = vmatpush1.msra.mxu0 0.0
      %2475 = vmatprep.subr.mxu0 0.0
      %2476 = vmatpush1.msra.mxu0 0.0
      %2477 = vmatprep.subr.mxu0 0.0
      %2478 = vmatpush1.msra.mxu0 0.0
      %2479 = vmatprep.subr.mxu0 0.0
      %2480 = vmatpush1.msra.mxu0 0.0
      %2481 = vmatprep.subr.mxu0 0.0
      %2482 = vmatpush1.msra.mxu0 0.0
      %2483 = vmatprep.subr.mxu0 0.0
      %2484 = vmatpush1.msra.mxu0 0.0
      %2485 = vmatprep.subr.mxu0 0.0
      %2486 = vmatpush1.msra.mxu0 0.0
      %2487 = vmatprep.subr.mxu0 0.0
      %2488 = vmatpush1.msra.mxu0 0.0
      %2489 = vmatprep.subr.mxu0 0.0
      %2490 = vmatpush1.msra.mxu0 0.0
      %2491 = vmatprep.subr.mxu0 0.0
      %2492 = vmatpush1.msra.mxu0 0.0
      %2493 = vmatprep.subr.mxu0 0.0
      %2494 = vmatpush1.msra.mxu0 0.0
      %2495 = vmatprep.subr.mxu0 0.0
      %2496 = vmatpush1.msra.mxu0 0.0
      %2497 = vmatprep.subr.mxu0 0.0
      %2498 = vmatpush1.msra.mxu0 0.0
      %2499 = vmatprep.subr.mxu0 0.0
      %2500 = vmatpush1.msra.mxu0 0.0
      %2501 = vmatprep.subr.mxu0 0.0
      %2502 = vmatpush1.msra.mxu0 0.0
      %2503 = vmatprep.subr.mxu0 0.0
      %2504 = vmatpush1.msra.mxu0 0.0
      %2505 = vmatprep.subr.mxu0 0.0
      %2506 = vmatpush1.msra.mxu0 0.0
      %2507 = vmatprep.subr.mxu0 0.0
      %2508 = vmatpush1.msra.mxu0 0.0
      %2509 = vmatprep.mubr.f32.mxu0 0.0
      %2510 = vmatmul.mubr.f32.gmra.mrb[0].mxu0 %v2443
      %v2511 = vpop.f32.mrb[0].mxu0
      %v2512 = vadd.f32 0.0, %v2511
      %v2513 = vpop.f32.mrb[0].mxu0
      %v2514 = vadd.f32 0.0, %v2513
      %2515 = vdwg.mxu0
      %v2516 = vld [vmem:[%s959] ss:$8 sm:$0x3]
      %v2518 = vlaneseq
      %v2519 = vshrl.u32 %v2518, 7
      %v2520 = vsub.s32 0, %v2519
      %v2521 = vrot.slane %v2516, %v2520
      %v2522 = vlaneseq
      %v2523 = vshrl.u32 %v2522, 7
      %v2524 = vsub.s32 1, %v2523
      %v2525 = vrot.slane %v2516, %v2524
      %v2528 = vmul.f32 %v2512, %v2521
      %v2529 = vmul.f32 %v2514, %v2525
      %v2530 = vadd.f32 %v2438, %v2528
      %v2531 = vadd.f32 %v2439, %v2529
      %s2532 = scalar_lea.vmem %s6, 40
      %v2533 = vld [vmem:[%s2532] sm:$0xff]
      %v2534 = vld [vmem:[#allocation3 + $0x8] sm:$0xff]
      %v2535 = vld [vmem:[#allocation3 + $0x10] sm:$0xff]
      %v2536 = vld [vmem:[#allocation3 + $0x18] sm:$0xff]
      %v2537 = vld [vmem:[#allocation3 + $0x28] sm:$0xff]
      %v2538 = vld [vmem:[#allocation3 + $0x30] sm:$0xff]
      %v2539 = vld [vmem:[#allocation3 + $0x38] sm:$0xff]
      %v2540 = vld [vmem:[#allocation3 + $0x48] sm:$0xff]
      %v2541 = vld [vmem:[#allocation3 + $0x50] sm:$0xff]
      %v2542 = vld [vmem:[#allocation3 + $0x58] sm:$0xff]
      %v2543 = vld [vmem:[#allocation3 + $0x68] sm:$0xff]
      %v2544 = vld [vmem:[#allocation3 + $0x70] sm:$0xff]
      %v2545 = vld [vmem:[#allocation3 + $0x78] sm:$0xff]
      %2558 = vrot.lane.b32.xlu0 %v2534, 127
      %v2559 = vpop.permute.xlu0 %2558
      %2560 = vrot.lane.b32.xlu0 %v2535, 127
      %v2561 = vpop.permute.xlu0 %2560
      %2562 = vrot.lane.b32.xlu0 %v2536, 127
      %v2563 = vpop.permute.xlu0 %2562
      %2564 = vrot.lane.b32.xlu0 %v2537, 127
      %v2565 = vpop.permute.xlu0 %2564
      %2566 = vrot.lane.b32.xlu0 %v2538, 127
      %v2567 = vpop.permute.xlu0 %2566
      %2568 = vrot.lane.b32.xlu0 %v2539, 127
      %v2569 = vpop.permute.xlu0 %2568
      %2570 = vrot.lane.b32.xlu0 %v2540, 127
      %v2571 = vpop.permute.xlu0 %2570
      %2572 = vrot.lane.b32.xlu0 %v2541, 127
      %v2573 = vpop.permute.xlu0 %2572
      %2574 = vrot.lane.b32.xlu0 %v2542, 127
      %v2575 = vpop.permute.xlu0 %2574
      %2576 = vrot.lane.b32.xlu0 %v2543, 127
      %v2577 = vpop.permute.xlu0 %2576
      %2578 = vrot.lane.b32.xlu0 %v2544, 127
      %v2579 = vpop.permute.xlu0 %2578
      %2580 = vrot.lane.b32.xlu0 %v2545, 127
      %v2581 = vpop.permute.xlu0 %2580
      %v2582 = vsel %vm823, %v2559, %v2561
      %v2583 = vsel %vm823, %v2561, %v2563
      %v2584 = vsel %vm823, %v2565, %v2567
      %v2585 = vsel %vm823, %v2567, %v2569
      %v2586 = vsel %vm823, %v2571, %v2573
      %v2587 = vsel %vm823, %v2573, %v2575
      %v2588 = vsel %vm823, %v2577, %v2579
      %v2589 = vsel %vm823, %v2579, %v2581
      %v2599 = vsel %vm1763, %v2533, 0
      %2601 = vmatprep.subr.mxu0 %v2583
      %2602 = vmatpush1.msra.mxu0 %v2582
      %2603 = vmatprep.subr.mxu0 %v2585
      %2604 = vmatpush1.msra.mxu0 %v2584
      %2605 = vmatprep.subr.mxu0 %v2587
      %2606 = vmatpush1.msra.mxu0 %v2586
      %2607 = vmatprep.subr.mxu0 %v2589
      %2608 = vmatpush1.msra.mxu0 %v2588
      %2609 = vmatprep.subr.mxu0 0.0
      %2610 = vmatpush1.msra.mxu0 0.0
      %2611 = vmatprep.subr.mxu0 0.0
      %2612 = vmatpush1.msra.mxu0 0.0
      %2613 = vmatprep.subr.mxu0 0.0
      %2614 = vmatpush1.msra.mxu0 0.0
      %2615 = vmatprep.subr.mxu0 0.0
      %2616 = vmatpush1.msra.mxu0 0.0
      %2617 = vmatprep.subr.mxu0 0.0
      %2618 = vmatpush1.msra.mxu0 0.0
      %2619 = vmatprep.subr.mxu0 0.0
      %2620 = vmatpush1.msra.mxu0 0.0
      %2621 = vmatprep.subr.mxu0 0.0
      %2622 = vmatpush1.msra.mxu0 0.0
      %2623 = vmatprep.subr.mxu0 0.0
      %2624 = vmatpush1.msra.mxu0 0.0
      %2625 = vmatprep.subr.mxu0 0.0
      %2626 = vmatpush1.msra.mxu0 0.0
      %2627 = vmatprep.subr.mxu0 0.0
      %2628 = vmatpush1.msra.mxu0 0.0
      %2629 = vmatprep.subr.mxu0 0.0
      %2630 = vmatpush1.msra.mxu0 0.0
      %2631 = vmatprep.subr.mxu0 0.0
      %2632 = vmatpush1.msra.mxu0 0.0
      %2633 = vmatprep.subr.mxu0 0.0
      %2634 = vmatpush1.msra.mxu0 0.0
      %2635 = vmatprep.subr.mxu0 0.0
      %2636 = vmatpush1.msra.mxu0 0.0
      %2637 = vmatprep.subr.mxu0 0.0
      %2638 = vmatpush1.msra.mxu0 0.0
      %2639 = vmatprep.subr.mxu0 0.0
      %2640 = vmatpush1.msra.mxu0 0.0
      %2641 = vmatprep.subr.mxu0 0.0
      %2642 = vmatpush1.msra.mxu0 0.0
      %2643 = vmatprep.subr.mxu0 0.0
      %2644 = vmatpush1.msra.mxu0 0.0
      %2645 = vmatprep.subr.mxu0 0.0
      %2646 = vmatpush1.msra.mxu0 0.0
      %2647 = vmatprep.subr.mxu0 0.0
      %2648 = vmatpush1.msra.mxu0 0.0
      %2649 = vmatprep.subr.mxu0 0.0
      %2650 = vmatpush1.msra.mxu0 0.0
      %2651 = vmatprep.subr.mxu0 0.0
      %2652 = vmatpush1.msra.mxu0 0.0
      %2653 = vmatprep.subr.mxu0 0.0
      %2654 = vmatpush1.msra.mxu0 0.0
      %2655 = vmatprep.subr.mxu0 0.0
      %2656 = vmatpush1.msra.mxu0 0.0
      %2657 = vmatprep.subr.mxu0 0.0
      %2658 = vmatpush1.msra.mxu0 0.0
      %2659 = vmatprep.subr.mxu0 0.0
      %2660 = vmatpush1.msra.mxu0 0.0
      %2661 = vmatprep.subr.mxu0 0.0
      %2662 = vmatpush1.msra.mxu0 0.0
      %2663 = vmatprep.subr.mxu0 0.0
      %2664 = vmatpush1.msra.mxu0 0.0
      %2665 = vmatprep.mubr.f32.mxu0 0.0
      %2666 = vmatmul.mubr.f32.gmra.mrb[0].mxu0 %v2599
      %v2667 = vpop.f32.mrb[0].mxu0
      %v2668 = vadd.f32 0.0, %v2667
      %v2669 = vpop.f32.mrb[0].mxu0
      %v2670 = vadd.f32 0.0, %v2669
      %2671 = vdwg.mxu0
      %v2672 = vld [vmem:[%s1091] ss:$8 sm:$0x3]
      %v2674 = vlaneseq
      %v2675 = vshrl.u32 %v2674, 7
      %v2676 = vsub.s32 0, %v2675
      %v2677 = vrot.slane %v2672, %v2676
      %v2678 = vlaneseq
      %v2679 = vshrl.u32 %v2678, 7
      %v2680 = vsub.s32 1, %v2679
      %v2681 = vrot.slane %v2672, %v2680
      %v2684 = vmul.f32 %v2668, %v2677
      %v2685 = vmul.f32 %v2670, %v2681
      %v2686 = vadd.f32 %v2530, %v2684
      %v2687 = vadd.f32 %v2531, %v2685
      %s2688 = scalar_lea.vmem %s6, 48
      %v2689 = vld [vmem:[%s2688] sm:$0xff]
      %2690 = vrot.lane.b32.xlu0 %v2534, 113
      %v2691 = vpop.permute.xlu0 %2690
      %2692 = vrot.lane.b32.xlu0 %v2535, 113
      %v2693 = vpop.permute.xlu0 %2692
      %2694 = vrot.lane.b32.xlu0 %v2536, 113
      %v2695 = vpop.permute.xlu0 %2694
      %2696 = vrot.lane.b32.xlu0 %v2537, 113
      %v2697 = vpop.permute.xlu0 %2696
      %2698 = vrot.lane.b32.xlu0 %v2538, 113
      %v2699 = vpop.permute.xlu0 %2698
      %2700 = vrot.lane.b32.xlu0 %v2539, 113
      %v2701 = vpop.permute.xlu0 %2700
      %2702 = vrot.lane.b32.xlu0 %v2540, 113
      %v2703 = vpop.permute.xlu0 %2702
      %2704 = vrot.lane.b32.xlu0 %v2541, 113
      %v2705 = vpop.permute.xlu0 %2704
      %2706 = vrot.lane.b32.xlu0 %v2542, 113
      %v2707 = vpop.permute.xlu0 %2706
      %2708 = vrot.lane.b32.xlu0 %v2543, 113
      %v2709 = vpop.permute.xlu0 %2708
      %2710 = vrot.lane.b32.xlu0 %v2544, 113
      %v2711 = vpop.permute.xlu0 %2710
      %2712 = vrot.lane.b32.xlu0 %v2545, 113
      %v2713 = vpop.permute.xlu0 %2712
      %v2714 = vsel %vm672, %v2691, %v2693
      %v2715 = vsel %vm672, %v2693, %v2695
      %v2716 = vsel %vm672, %v2697, %v2699
      %v2717 = vsel %vm672, %v2699, %v2701
      %v2718 = vsel %vm672, %v2703, %v2705
      %v2719 = vsel %vm672, %v2705, %v2707
      %v2720 = vsel %vm672, %v2709, %v2711
      %v2721 = vsel %vm672, %v2711, %v2713
      %v2731 = vsel %vm1763, %v2689, 0
      %2733 = vmatprep.subr.mxu0 %v2715
      %2734 = vmatpush1.msra.mxu0 %v2714
      %2735 = vmatprep.subr.mxu0 %v2717
      %2736 = vmatpush1.msra.mxu0 %v2716
      %2737 = vmatprep.subr.mxu0 %v2719
      %2738 = vmatpush1.msra.mxu0 %v2718
      %2739 = vmatprep.subr.mxu0 %v2721
      %2740 = vmatpush1.msra.mxu0 %v2720
      %2741 = vmatprep.subr.mxu0 0.0
      %2742 = vmatpush1.msra.mxu0 0.0
      %2743 = vmatprep.subr.mxu0 0.0
      %2744 = vmatpush1.msra.mxu0 0.0
      %2745 = vmatprep.subr.mxu0 0.0
      %2746 = vmatpush1.msra.mxu0 0.0
      %2747 = vmatprep.subr.mxu0 0.0
      %2748 = vmatpush1.msra.mxu0 0.0
      %2749 = vmatprep.subr.mxu0 0.0
      %2750 = vmatpush1.msra.mxu0 0.0
      %2751 = vmatprep.subr.mxu0 0.0
      %2752 = vmatpush1.msra.mxu0 0.0
      %2753 = vmatprep.subr.mxu0 0.0
      %2754 = vmatpush1.msra.mxu0 0.0
      %2755 = vmatprep.subr.mxu0 0.0
      %2756 = vmatpush1.msra.mxu0 0.0
      %2757 = vmatprep.subr.mxu0 0.0
      %2758 = vmatpush1.msra.mxu0 0.0
      %2759 = vmatprep.subr.mxu0 0.0
      %2760 = vmatpush1.msra.mxu0 0.0
      %2761 = vmatprep.subr.mxu0 0.0
      %2762 = vmatpush1.msra.mxu0 0.0
      %2763 = vmatprep.subr.mxu0 0.0
      %2764 = vmatpush1.msra.mxu0 0.0
      %2765 = vmatprep.subr.mxu0 0.0
      %2766 = vmatpush1.msra.mxu0 0.0
      %2767 = vmatprep.subr.mxu0 0.0
      %2768 = vmatpush1.msra.mxu0 0.0
      %2769 = vmatprep.subr.mxu0 0.0
      %2770 = vmatpush1.msra.mxu0 0.0
      %2771 = vmatprep.subr.mxu0 0.0
      %2772 = vmatpush1.msra.mxu0 0.0
      %2773 = vmatprep.subr.mxu0 0.0
      %2774 = vmatpush1.msra.mxu0 0.0
      %2775 = vmatprep.subr.mxu0 0.0
      %2776 = vmatpush1.msra.mxu0 0.0
      %2777 = vmatprep.subr.mxu0 0.0
      %2778 = vmatpush1.msra.mxu0 0.0
      %2779 = vmatprep.subr.mxu0 0.0
      %2780 = vmatpush1.msra.mxu0 0.0
      %2781 = vmatprep.subr.mxu0 0.0
      %2782 = vmatpush1.msra.mxu0 0.0
      %2783 = vmatprep.subr.mxu0 0.0
      %2784 = vmatpush1.msra.mxu0 0.0
      %2785 = vmatprep.subr.mxu0 0.0
      %2786 = vmatpush1.msra.mxu0 0.0
      %2787 = vmatprep.subr.mxu0 0.0
      %2788 = vmatpush1.msra.mxu0 0.0
      %2789 = vmatprep.subr.mxu0 0.0
      %2790 = vmatpush1.msra.mxu0 0.0
      %2791 = vmatprep.subr.mxu0 0.0
      %2792 = vmatpush1.msra.mxu0 0.0
      %2793 = vmatprep.subr.mxu0 0.0
      %2794 = vmatpush1.msra.mxu0 0.0
      %2795 = vmatprep.subr.mxu0 0.0
      %2796 = vmatpush1.msra.mxu0 0.0
      %2797 = vmatprep.mubr.f32.mxu0 0.0
      %2798 = vmatmul.mubr.f32.gmra.mrb[0].mxu0 %v2731
      %v2799 = vpop.f32.mrb[0].mxu0
      %v2800 = vadd.f32 0.0, %v2799
      %v2801 = vpop.f32.mrb[0].mxu0
      %v2802 = vadd.f32 0.0, %v2801
      %2803 = vdwg.mxu0
      %v2804 = vld [vmem:[%s1240] ss:$8 sm:$0x3]
      %v2806 = vlaneseq
      %v2807 = vshrl.u32 %v2806, 7
      %v2808 = vsub.s32 0, %v2807
      %v2809 = vrot.slane %v2804, %v2808
      %v2810 = vlaneseq
      %v2811 = vshrl.u32 %v2810, 7
      %v2812 = vsub.s32 1, %v2811
      %v2813 = vrot.slane %v2804, %v2812
      %v2816 = vmul.f32 %v2800, %v2809
      %v2817 = vmul.f32 %v2802, %v2813
      %v2818 = vadd.f32 %v2686, %v2816
      %v2819 = vadd.f32 %v2687, %v2817
      %s2820 = scalar_lea.vmem %s6, 56
      %v2821 = vld [vmem:[%s2820] sm:$0xff]
      %2822 = vrot.lane.b32.xlu0 %v2534, 112
      %v2823 = vpop.permute.xlu0 %2822
      %2824 = vrot.lane.b32.xlu0 %v2535, 112
      %v2825 = vpop.permute.xlu0 %2824
      %2826 = vrot.lane.b32.xlu0 %v2536, 112
      %v2827 = vpop.permute.xlu0 %2826
      %2828 = vrot.lane.b32.xlu0 %v2537, 112
      %v2829 = vpop.permute.xlu0 %2828
      %2830 = vrot.lane.b32.xlu0 %v2538, 112
      %v2831 = vpop.permute.xlu0 %2830
      %2832 = vrot.lane.b32.xlu0 %v2539, 112
      %v2833 = vpop.permute.xlu0 %2832
      %2834 = vrot.lane.b32.xlu0 %v2540, 112
      %v2835 = vpop.permute.xlu0 %2834
      %2836 = vrot.lane.b32.xlu0 %v2541, 112
      %v2837 = vpop.permute.xlu0 %2836
      %2838 = vrot.lane.b32.xlu0 %v2542, 112
      %v2839 = vpop.permute.xlu0 %2838
      %2840 = vrot.lane.b32.xlu0 %v2543, 112
      %v2841 = vpop.permute.xlu0 %2840
      %2842 = vrot.lane.b32.xlu0 %v2544, 112
      %v2843 = vpop.permute.xlu0 %2842
      %2844 = vrot.lane.b32.xlu0 %v2545, 112
      %v2845 = vpop.permute.xlu0 %2844
      %v2846 = vsel %vm413, %v2823, %v2825
      %v2847 = vsel %vm413, %v2825, %v2827
      %v2848 = vsel %vm413, %v2829, %v2831
      %v2849 = vsel %vm413, %v2831, %v2833
      %v2850 = vsel %vm413, %v2835, %v2837
      %v2851 = vsel %vm413, %v2837, %v2839
      %v2852 = vsel %vm413, %v2841, %v2843
      %v2853 = vsel %vm413, %v2843, %v2845
      %v2863 = vsel %vm1763, %v2821, 0
      %2865 = vmatprep.subr.mxu0 %v2847
      %2866 = vmatpush1.msra.mxu0 %v2846
      %2867 = vmatprep.subr.mxu0 %v2849
      %2868 = vmatpush1.msra.mxu0 %v2848
      %2869 = vmatprep.subr.mxu0 %v2851
      %2870 = vmatpush1.msra.mxu0 %v2850
      %2871 = vmatprep.subr.mxu0 %v2853
      %2872 = vmatpush1.msra.mxu0 %v2852
      %2873 = vmatprep.subr.mxu0 0.0
      %2874 = vmatpush1.msra.mxu0 0.0
      %2875 = vmatprep.subr.mxu0 0.0
      %2876 = vmatpush1.msra.mxu0 0.0
      %2877 = vmatprep.subr.mxu0 0.0
      %2878 = vmatpush1.msra.mxu0 0.0
      %2879 = vmatprep.subr.mxu0 0.0
      %2880 = vmatpush1.msra.mxu0 0.0
      %2881 = vmatprep.subr.mxu0 0.0
      %2882 = vmatpush1.msra.mxu0 0.0
      %2883 = vmatprep.subr.mxu0 0.0
      %2884 = vmatpush1.msra.mxu0 0.0
      %2885 = vmatprep.subr.mxu0 0.0
      %2886 = vmatpush1.msra.mxu0 0.0
      %2887 = vmatprep.subr.mxu0 0.0
      %2888 = vmatpush1.msra.mxu0 0.0
      %2889 = vmatprep.subr.mxu0 0.0
      %2890 = vmatpush1.msra.mxu0 0.0
      %2891 = vmatprep.subr.mxu0 0.0
      %2892 = vmatpush1.msra.mxu0 0.0
      %2893 = vmatprep.subr.mxu0 0.0
      %2894 = vmatpush1.msra.mxu0 0.0
      %2895 = vmatprep.subr.mxu0 0.0
      %2896 = vmatpush1.msra.mxu0 0.0
      %2897 = vmatprep.subr.mxu0 0.0
      %2898 = vmatpush1.msra.mxu0 0.0
      %2899 = vmatprep.subr.mxu0 0.0
      %2900 = vmatpush1.msra.mxu0 0.0
      %2901 = vmatprep.subr.mxu0 0.0
      %2902 = vmatpush1.msra.mxu0 0.0
      %2903 = vmatprep.subr.mxu0 0.0
      %2904 = vmatpush1.msra.mxu0 0.0
      %2905 = vmatprep.subr.mxu0 0.0
      %2906 = vmatpush1.msra.mxu0 0.0
      %2907 = vmatprep.subr.mxu0 0.0
      %2908 = vmatpush1.msra.mxu0 0.0
      %2909 = vmatprep.subr.mxu0 0.0
      %2910 = vmatpush1.msra.mxu0 0.0
      %2911 = vmatprep.subr.mxu0 0.0
      %2912 = vmatpush1.msra.mxu0 0.0
      %2913 = vmatprep.subr.mxu0 0.0
      %2914 = vmatpush1.msra.mxu0 0.0
      %2915 = vmatprep.subr.mxu0 0.0
      %2916 = vmatpush1.msra.mxu0 0.0
      %2917 = vmatprep.subr.mxu0 0.0
      %2918 = vmatpush1.msra.mxu0 0.0
      %2919 = vmatprep.subr.mxu0 0.0
      %2920 = vmatpush1.msra.mxu0 0.0
      %2921 = vmatprep.subr.mxu0 0.0
      %2922 = vmatpush1.msra.mxu0 0.0
      %2923 = vmatprep.subr.mxu0 0.0
      %2924 = vmatpush1.msra.mxu0 0.0
      %2925 = vmatprep.subr.mxu0 0.0
      %2926 = vmatpush1.msra.mxu0 0.0
      %2927 = vmatprep.subr.mxu0 0.0
      %2928 = vmatpush1.msra.mxu0 0.0
      %2929 = vmatprep.mubr.f32.mxu0 0.0
      %2930 = vmatmul.mubr.f32.gmra.mrb[0].mxu0 %v2863
      %v2931 = vpop.f32.mrb[0].mxu0
      %v2932 = vadd.f32 0.0, %v2931
      %v2933 = vpop.f32.mrb[0].mxu0
      %v2934 = vadd.f32 0.0, %v2933
      %2935 = vdwg.mxu0
      %v2936 = vld [vmem:[%s1389] ss:$8 sm:$0x3]
      %v2938 = vlaneseq
      %v2939 = vshrl.u32 %v2938, 7
      %v2940 = vsub.s32 0, %v2939
      %v2941 = vrot.slane %v2936, %v2940
      %v2942 = vlaneseq
      %v2943 = vshrl.u32 %v2942, 7
      %v2944 = vsub.s32 1, %v2943
      %v2945 = vrot.slane %v2936, %v2944
      %v2948 = vmul.f32 %v2932, %v2941
      %v2949 = vmul.f32 %v2934, %v2945
      %v2950 = vadd.f32 %v2818, %v2948
      %v2951 = vadd.f32 %v2819, %v2949
      %s2952 = scalar_lea.vmem %s6, 64
      %v2953 = vld [vmem:[%s2952] sm:$0xff]
      %2954 = vrot.lane.b32.xlu0 %v2534, 111
      %v2955 = vpop.permute.xlu0 %2954
      %2956 = vrot.lane.b32.xlu0 %v2535, 111
      %v2957 = vpop.permute.xlu0 %2956
      %2958 = vrot.lane.b32.xlu0 %v2536, 111
      %v2959 = vpop.permute.xlu0 %2958
      %2960 = vrot.lane.b32.xlu0 %v2537, 111
      %v2961 = vpop.permute.xlu0 %2960
      %2962 = vrot.lane.b32.xlu0 %v2538, 111
      %v2963 = vpop.permute.xlu0 %2962
      %2964 = vrot.lane.b32.xlu0 %v2539, 111
      %v2965 = vpop.permute.xlu0 %2964
      %2966 = vrot.lane.b32.xlu0 %v2540, 111
      %v2967 = vpop.permute.xlu0 %2966
      %2968 = vrot.lane.b32.xlu0 %v2541, 111
      %v2969 = vpop.permute.xlu0 %2968
      %2970 = vrot.lane.b32.xlu0 %v2542, 111
      %v2971 = vpop.permute.xlu0 %2970
      %2972 = vrot.lane.b32.xlu0 %v2543, 111
      %v2973 = vpop.permute.xlu0 %2972
      %2974 = vrot.lane.b32.xlu0 %v2544, 111
      %v2975 = vpop.permute.xlu0 %2974
      %2976 = vrot.lane.b32.xlu0 %v2545, 111
      %v2977 = vpop.permute.xlu0 %2976
      %v2978 = vsel %vm386, %v2955, %v2957
      %v2979 = vsel %vm386, %v2957, %v2959
      %v2980 = vsel %vm386, %v2961, %v2963
      %v2981 = vsel %vm386, %v2963, %v2965
      %v2982 = vsel %vm386, %v2967, %v2969
      %v2983 = vsel %vm386, %v2969, %v2971
      %v2984 = vsel %vm386, %v2973, %v2975
      %v2985 = vsel %vm386, %v2975, %v2977
      %v2995 = vsel %vm1763, %v2953, 0
      %2997 = vmatprep.subr.mxu0 %v2979
      %2998 = vmatpush1.msra.mxu0 %v2978
      %2999 = vmatprep.subr.mxu0 %v2981
      %3000 = vmatpush1.msra.mxu0 %v2980
      %3001 = vmatprep.subr.mxu0 %v2983
      %3002 = vmatpush1.msra.mxu0 %v2982
      %3003 = vmatprep.subr.mxu0 %v2985
      %3004 = vmatpush1.msra.mxu0 %v2984
      %3005 = vmatprep.subr.mxu0 0.0
      %3006 = vmatpush1.msra.mxu0 0.0
      %3007 = vmatprep.subr.mxu0 0.0
      %3008 = vmatpush1.msra.mxu0 0.0
      %3009 = vmatprep.subr.mxu0 0.0
      %3010 = vmatpush1.msra.mxu0 0.0
      %3011 = vmatprep.subr.mxu0 0.0
      %3012 = vmatpush1.msra.mxu0 0.0
      %3013 = vmatprep.subr.mxu0 0.0
      %3014 = vmatpush1.msra.mxu0 0.0
      %3015 = vmatprep.subr.mxu0 0.0
      %3016 = vmatpush1.msra.mxu0 0.0
      %3017 = vmatprep.subr.mxu0 0.0
      %3018 = vmatpush1.msra.mxu0 0.0
      %3019 = vmatprep.subr.mxu0 0.0
      %3020 = vmatpush1.msra.mxu0 0.0
      %3021 = vmatprep.subr.mxu0 0.0
      %3022 = vmatpush1.msra.mxu0 0.0
      %3023 = vmatprep.subr.mxu0 0.0
      %3024 = vmatpush1.msra.mxu0 0.0
      %3025 = vmatprep.subr.mxu0 0.0
      %3026 = vmatpush1.msra.mxu0 0.0
      %3027 = vmatprep.subr.mxu0 0.0
      %3028 = vmatpush1.msra.mxu0 0.0
      %3029 = vmatprep.subr.mxu0 0.0
      %3030 = vmatpush1.msra.mxu0 0.0
      %3031 = vmatprep.subr.mxu0 0.0
      %3032 = vmatpush1.msra.mxu0 0.0
      %3033 = vmatprep.subr.mxu0 0.0
      %3034 = vmatpush1.msra.mxu0 0.0
      %3035 = vmatprep.subr.mxu0 0.0
      %3036 = vmatpush1.msra.mxu0 0.0
      %3037 = vmatprep.subr.mxu0 0.0
      %3038 = vmatpush1.msra.mxu0 0.0
      %3039 = vmatprep.subr.mxu0 0.0
      %3040 = vmatpush1.msra.mxu0 0.0
      %3041 = vmatprep.subr.mxu0 0.0
      %3042 = vmatpush1.msra.mxu0 0.0
      %3043 = vmatprep.subr.mxu0 0.0
      %3044 = vmatpush1.msra.mxu0 0.0
      %3045 = vmatprep.subr.mxu0 0.0
      %3046 = vmatpush1.msra.mxu0 0.0
      %3047 = vmatprep.subr.mxu0 0.0
      %3048 = vmatpush1.msra.mxu0 0.0
      %3049 = vmatprep.subr.mxu0 0.0
      %3050 = vmatpush1.msra.mxu0 0.0
      %3051 = vmatprep.subr.mxu0 0.0
      %3052 = vmatpush1.msra.mxu0 0.0
      %3053 = vmatprep.subr.mxu0 0.0
      %3054 = vmatpush1.msra.mxu0 0.0
      %3055 = vmatprep.subr.mxu0 0.0
      %3056 = vmatpush1.msra.mxu0 0.0
      %3057 = vmatprep.subr.mxu0 0.0
      %3058 = vmatpush1.msra.mxu0 0.0
      %3059 = vmatprep.subr.mxu0 0.0
      %3060 = vmatpush1.msra.mxu0 0.0
      %3061 = vmatprep.mubr.f32.mxu0 0.0
      %3062 = vmatmul.mubr.f32.gmra.mrb[0].mxu0 %v2995
      %v3063 = vpop.f32.mrb[0].mxu0
      %v3064 = vadd.f32 0.0, %v3063
      %v3065 = vpop.f32.mrb[0].mxu0
      %v3066 = vadd.f32 0.0, %v3065
      %3067 = vdwg.mxu0
      %v3068 = vld [vmem:[%s1538] ss:$8 sm:$0x3]
      %v3070 = vlaneseq
      %v3071 = vshrl.u32 %v3070, 7
      %v3072 = vsub.s32 0, %v3071
      %v3073 = vrot.slane %v3068, %v3072
      %v3074 = vlaneseq
      %v3075 = vshrl.u32 %v3074, 7
      %v3076 = vsub.s32 1, %v3075
      %v3077 = vrot.slane %v3068, %v3076
      %v3080 = vmul.f32 %v3064, %v3073
      %v3081 = vmul.f32 %v3066, %v3077
      %v3082 = vadd.f32 %v2950, %v3080
      %v3083 = vadd.f32 %v2951, %v3081
      %v3084 = vld [vmem:[%s7] sm:$0xff]
      %3086 = vset.pattern.permute.xlu0 0
      %3087 = vperm.xlu0 %3086, %v3084
      %v3088 = vpop.permute.xlu0 %3087
      %v3090 = vadd.f32 %v3082, %v3088
      %v3091 = vadd.f32 %v3083, %v3088
      %v3092 = vadd.f32 %v3090, -0.0010005003
      %v3093 = vadd.f32 %v3091, -0.0010005003
      %v3094 = vsub.f32 0.0, %v3092
      %v3095 = vsub.f32 0.0, %v3093
      %v3096 = vmul.f32 %v3094, 1.442695
      %v3097 = vpow.pop %v3096
      %v3098 = vmul.f32 %v3095, 1.442695
      %v3099 = vpow.pop %v3098
      %v3100 = vadd.f32 %v3097, 1.0
      %v3101 = vadd.f32 %v3099, 1.0
      %v3102 = vrcp.pop %v3100
      %v3103 = vmul.f32 1.999, %v3102
      %v3104 = vrcp.pop %v3101
      %v3105 = vmul.f32 1.999, %v3104
      %v3106 = vadd.f32 %v3103, 0.001
      %v3107 = vadd.f32 %v3105, 0.001
      %v3110 = vcombine.low %v3090, %v3091
      %v3111 = vrot.slane %v3110, 6
      %v3113 = vadd.f32 %v363, %v3111
      %v3116 = vcombine.low %v3106, %v3107
      %v3118 = vmul.f32 %v3113, %v3116
      %3119 = vst [vmem:[%s338] sm:$0x33] %v362
      %3120 = vst [vmem:[%s338] sm:$0xcc] %v3118
      %v3121 = vlog2.pop %v3106
      %v3122 = vmul.f32 %v3121, 0.6931472
      %v3123 = vlog2.pop %v3107
      %v3124 = vmul.f32 %v3123, 0.6931472
      %v3127 = vrot.slane %v3122, 2
      %v3128 = vrot.slane %v3124, 2
      %vm3131 = vcmask 1041408
      %v3132 = vsel %vm3131, %v3127, 0.0
      %v3133 = vsel %vm3131, %v3128, 0.0
      %v3134 = vadd.f32 %v3132, %v3133
      %3135 = vadd.xlane.f32.xlu0 %v3134
      %v3136 = vpop.xlane.xlu0 %3135
      %v3137 = vrot.slane %v3136, 4
      %v3138 = vadd.f32 %v3136, %v3137
      %v3139 = vrot.slane %v3138, 2
      %v3140 = vadd.f32 %v3138, %v3139
      %v3141 = vrot.slane %v3140, 1
      %v3142 = vadd.f32 %v3140, %v3141
      %s3143 = vtos %v3142
      %v3144 = vstv %s3143
      %v3145 = vadd.f32 %v3144, 0.0
      %3146 = vst [vmem:[%s341] sm:$0x1] %v3145
      %p3147 = scmp.lt.s32.totalorder %s21, 1
      %s3148 = scalar_select %p3147, %s21, 1
      %s3149 = smul.addr %s3148, 2
      %s3150 = smul.addr %s3149, 4
      %s3151 = scalar_lea.vmem %s8, %s3150
      %p3152 = scmp.lt.s32.totalorder %s21, 1
      %s3153 = scalar_select %p3152, %s21, 1
      %s3154 = scalar_lea.vmem %s9, %s3153
      // Predicated region
      $region53: #{affine_flow_step.1} parent=51 // pred_check
        %p3155 = pneg %p212
      $region54: #{affine_flow_step.1} parent=51 // pred_check_branch
        %3157 = sbr.rel (%p3155) target = $region56
      $region55: #{affine_flow_step.1} parent=51 // pred_region
        _
      $region56: #{affine_flow_step.1} parent=51 // pred_fallthru
        _
      // Predicated region
      $region57: #{affine_flow_step.1} parent=51 // pred_check
        %p3158 = pneg %p238
      $region58: #{affine_flow_step.1} parent=51 // pred_check_branch
        %3160 = sbr.rel (%p3158) target = $region60
      $region59: #{affine_flow_step.1} parent=51 // pred_region
        _
      $region60: #{affine_flow_step.1} parent=51 // pred_fallthru
        _
    $region52: #{affine_flow_step.1} parent=5 // pred_fallthru
      _
    %p3161 = scmp.le.s32.totalorder 2, %s16
    // Predicated region
    $region61: #{affine_flow_step.1} parent=5 // pred_check
      %p3162 = pneg %p3161
    $region62: #{affine_flow_step.1} parent=5 // pred_check_branch
      %3164 = sbr.rel (%p3162) target = $region64
    $region63: #{affine_flow_step.1} parent=5 // pred_region
      %s3165 = ssub.s32 %s16, 2
      // Predicated region
      $region65: #{affine_flow_step.1} parent=63 // pred_check
        %p3166 = pneg %p218
      $region66: #{affine_flow_step.1} parent=63 // pred_check_branch
        %3168 = sbr.rel (%p3166) target = $region68
      $region67: #{affine_flow_step.1} parent=63 // pred_region
        %p3169 = scmp.lt.s32.totalorder %s22, 1
        %s3170 = scalar_select %p3169, %s22, 1
        %s3171 = smul.addr %s3170, 2
        %s3172 = smul.addr %s3171, 4
        %s3173 = scalar_lea.vmem %s8, %s3172
      $region68: #{affine_flow_step.1} parent=63 // pred_fallthru
        _
      // Predicated region
      $region69: #{affine_flow_step.1} parent=63 // pred_check
        %p3174 = pneg %p244
      $region70: #{affine_flow_step.1} parent=63 // pred_check_branch
        %3176 = sbr.rel (%p3174) target = $region72
      $region71: #{affine_flow_step.1} parent=63 // pred_region
        %p3177 = scmp.lt.s32.totalorder %s22, 1
        %s3178 = scalar_select %p3177, %s22, 1
        %s3179 = scalar_lea.vmem %s9, %s3178
      $region72: #{affine_flow_step.1} parent=63 // pred_fallthru
        _
    $region64: #{affine_flow_step.1} parent=5 // pred_fallthru
      _
  $region6: #{affine_flow_step.1} parent=0 // loop_footer
    %s20 = sadd.s32 1, %s16
  $region7: #{affine_flow_step.1} parent=0 // loop_footer_branch
    %15 = sbr.rel target = $region3
  $region8: #{affine_flow_step.1} parent=0 // loop_exit
    _

</llo_original>
